<compile_context>
chip_gen: v7x
topology: tpu7x:2x2x1
jax: 0.10.0
libtpu: 0.0.40
codegen_flags: <defaults>
</compile_context>

<pallas_src>
import math

import jax
import jax.numpy as jnp
from jax.experimental import pallas as pl
from jax.experimental.pallas import tpu as pltpu


def _leaky_relu(x, slope=0.01):
    return jnp.where(x > 0, x, slope * x)


def _bf16_dot_bias(a, w_ref, b_ref):
    """bf16 MXU matmul with f32 accumulation + f32 bias add."""
    return jnp.dot(a.astype(jnp.bfloat16), w_ref[...],
                   preferred_element_type=jnp.float32) + b_ref[...]


def conv_max_kernel(x_ref,
                    w1_ref, b1_ref, w2_ref, b2_ref, w3_ref, b3_ref,
                    pooled_ref):
    # x_ref block: (BB, K, N) f32;  pooled_ref block: (BB, 1, 1024) f32
    BB, K, N = x_ref.shape
    C3 = w3_ref.shape[1]

    # In-kernel transpose of the small per-cloud tiles: (K, N) -> (N, K),
    # stacked along sublanes into one (BB*N, K) LHS so the conv stack runs as
    # full-height MXU matmuls (BB*N >= 128/256 rows).
    x2 = jnp.concatenate([x_ref[b].T for b in range(BB)], axis=0)   # (BB*N, K)

    h = _leaky_relu(_bf16_dot_bias(x2, w1_ref, b1_ref))             # (BB*N, 64)
    h = _leaky_relu(_bf16_dot_bias(h, w2_ref, b2_ref))              # (BB*N, 128)
    h = _leaky_relu(_bf16_dot_bias(h, w3_ref, b3_ref))              # (BB*N, 1024)

    # Per-cloud global max over the point axis (plain 2D sublane reductions).
    for b in range(BB):
        pooled_ref[b] = jnp.max(h[b * N:(b + 1) * N, :], axis=0, keepdims=True)


def fc_head_kernel(g_ref,
                   wf1_ref, bf1_ref, wf2_ref, bf2_ref, wf3_ref, bf3_ref,
                   iden_ref, out_ref):
    # g_ref: (B, 1024) f32;  iden_ref: (1, K*K) f32;  out_ref: (B, K*K) f32
    g = _leaky_relu(_bf16_dot_bias(g_ref[...], wf1_ref, bf1_ref))   # (B, 512)
    g = _leaky_relu(_bf16_dot_bias(g, wf2_ref, bf2_ref))            # (B, 256)
    g = _bf16_dot_bias(g, wf3_ref, bf3_ref)                         # (B, K*K)
    out_ref[...] = (g + iden_ref[...]).astype(out_ref.dtype)


def _const_spec(arr):
    """Full-array block with a grid-invariant index map (weights / biases)."""
    zeros = (0,) * arr.ndim
    return pl.BlockSpec(arr.shape, lambda b, _z=zeros: _z)


def stnkd_forward(x, params, *, block_batch=None):
    """x: (B, K, N) float32 (PyTorch Conv1d layout).  Returns (B, K, K) float32."""
    B, K, N = x.shape
    KK = K * K
    (w1, b1, w2, b2, w3, b3, wf1, bf1, wf2, bf2, wf3, bf3) = params
    C3 = w3.shape[1]

    # Choose BB so the conv-stack matmuls see ~>=256 LHS rows (>=128 already
    # saturates v5e) while dividing B evenly.
    if block_batch is None:
        bb = max(1, min(B, -(-256 // N)))
        while B % bb:
            bb -= 1
    else:
        bb = block_batch
    assert B % bb == 0, (B, bb)

    def nbytes(a):
        return a.size * a.dtype.itemsize

    conv_params = (w1, b1, w2, b2, w3, b3)
    cost_a = pl.CostEstimate(
        flops=2 * B * N * (K * 64 + 64 * 128 + 128 * C3),
        transcendentals=0,
        bytes_accessed=nbytes(x) + sum(nbytes(p) for p in conv_params)
        + B * C3 * 4,
    )

    pooled = pl.pallas_call(
        conv_max_kernel,
        out_shape=jax.ShapeDtypeStruct((B, 1, C3), jnp.float32),
        grid=(B // bb,),
        in_specs=[pl.BlockSpec((bb, K, N), lambda b: (b, 0, 0))]
        + [_const_spec(p) for p in conv_params],
        out_specs=pl.BlockSpec((bb, 1, C3), lambda b: (b, 0, 0)),
        compiler_params=pltpu.CompilerParams(
            dimension_semantics=("parallel",),
        ),
        cost_estimate=cost_a,
    )(x, *conv_params)

    pooled = pooled.reshape(B, C3)                       # squeeze, ~free
    iden = jnp.eye(K, dtype=jnp.float32).reshape(1, KK)  # precomputed identity

    head_params = (wf1, bf1, wf2, bf2, wf3, bf3)
    cost_b = pl.CostEstimate(
        flops=2 * B * (C3 * 512 + 512 * 256 + 256 * KK),
        transcendentals=0,
        bytes_accessed=B * C3 * 4 + sum(nbytes(p) for p in head_params)
        + B * KK * 4,
    )

    out = pl.pallas_call(
        fc_head_kernel,
        out_shape=jax.ShapeDtypeStruct((B, KK), jnp.float32),
        cost_estimate=cost_b,
    )(pooled, *head_params, iden)

    return out.reshape(B, K, K)


def init_params(key, k):
    """Deterministic synthetic parameters.  Weights (in, out) in bf16, biases f32."""
    dims = [(k, 64), (64, 128), (128, 1024), (1024, 512), (512, 256), (256, k * k)]
    params = []
    keys = jax.random.split(key, len(dims) * 2)
    for i, (din, dout) in enumerate(dims):
        scale = 0.05 / math.sqrt(din)
        w = (scale * jax.random.normal(keys[2 * i], (din, dout),
                                       dtype=jnp.float32)).astype(jnp.bfloat16)
        b = 0.01 * jax.random.normal(keys[2 * i + 1], (1, dout), dtype=jnp.float32)
        params.extend([w, b])
    return tuple(params)


def stnkd_reference(x, params):
    """Pure-JAX reference using the same bf16-matmul / f32-accumulate recipe."""
    (w1, b1, w2, b2, w3, b3, wf1, bf1, wf2, bf2, wf3, bf3) = params
    B, K, N = x.shape

    def mm(a, w, b):
        return jnp.dot(a.astype(jnp.bfloat16), w,
                       preferred_element_type=jnp.float32) + b

    h = jnp.transpose(x, (0, 2, 1))                     # (B, N, K)
    h = _leaky_relu(mm(h, w1, b1))
    h = _leaky_relu(mm(h, w2, b2))
    h = _leaky_relu(mm(h, w3, b3))
    g = jnp.max(h, axis=1)                              # (B, 1024)
    g = _leaky_relu(mm(g, wf1, bf1))
    g = _leaky_relu(mm(g, wf2, bf2))
    g = mm(g, wf3, bf3)                                 # (B, K*K)
    g = g + jnp.eye(K, dtype=g.dtype).reshape(1, K * K)
    return g.reshape(B, K, K)


if __name__ == "__main__":
    # Small shapes consistent with the module: K channels, N points per cloud.
    # (Module default is k=192; K=16 keeps the example small while K*K=256
    #  stays lane-friendly.)
    B, K, N = 8, 16, 64

    key = jax.random.PRNGKey(0)
    k_x, k_p = jax.random.split(key)
    x = jax.random.normal(k_x, (B, K, N), dtype=jnp.float32)
    params = init_params(k_p, K)

    out = jax.block_until_ready(stnkd_forward(x, params))
    ref = jax.block_until_ready(stnkd_reference(x, params))

    assert out.shape == (B, K, K), out.shape
    assert jnp.allclose(out, ref, rtol=1e-2, atol=1e-3), \
        float(jnp.max(jnp.abs(out - ref)))

    print("KERNEL_OK")
</pallas_src>

<mosaic_0001>
module attributes {stable_mosaic.version = 11 : i64} {
  func.func @conv_max_kernel(%arg0: i32, %arg1: memref<4x16x64xf32, #tpu.memory_space<vmem>>, %arg2: memref<16x64xbf16, #tpu.memory_space<vmem>>, %arg3: memref<1x64xf32, #tpu.memory_space<vmem>>, %arg4: memref<64x128xbf16, #tpu.memory_space<vmem>>, %arg5: memref<1x128xf32, #tpu.memory_space<vmem>>, %arg6: memref<128x1024xbf16, #tpu.memory_space<vmem>>, %arg7: memref<1x1024xf32, #tpu.memory_space<vmem>>, %arg8: memref<4x1x1024xf32, #tpu.memory_space<vmem>>) attributes {dimension_semantics = [#tpu.dimension_semantics<parallel>], iteration_bounds = array<i64: 2>, scalar_prefetch = 0 : i64, scratch_operands = 0 : i64, tpu.core_type = #tpu.core_type<tc>, window_params = [{transform_indices = @transform_0, window_bounds = array<i64: 4, 16, 64>}, {pipeline_mode = #tpu.pipeline_mode<synchronous>, transform_indices = @transform_1, window_bounds = array<i64: 16, 64>}, {pipeline_mode = #tpu.pipeline_mode<synchronous>, transform_indices = @transform_2, window_bounds = array<i64: 1, 64>}, {pipeline_mode = #tpu.pipeline_mode<synchronous>, transform_indices = @transform_3, window_bounds = array<i64: 64, 128>}, {pipeline_mode = #tpu.pipeline_mode<synchronous>, transform_indices = @transform_4, window_bounds = array<i64: 1, 128>}, {pipeline_mode = #tpu.pipeline_mode<synchronous>, transform_indices = @transform_5, window_bounds = array<i64: 128, 1024>}, {pipeline_mode = #tpu.pipeline_mode<synchronous>, transform_indices = @transform_6, window_bounds = array<i64: 1, 1024>}, {transform_indices = @transform_7, window_bounds = array<i64: 4, 1, 1024>}]} {
    %c0 = arith.constant 0 : index
    %c0_0 = arith.constant 0 : index
    %c0_1 = arith.constant 0 : index
    %0 = vector.load %arg1[%c0, %c0_0, %c0_1] : memref<4x16x64xf32, #tpu.memory_space<vmem>>, vector<1x16x64xf32>
    %1 = vector.shape_cast %0 : vector<1x16x64xf32> to vector<16x64xf32>
    %2 = tpu.transpose %1, [1, 0] : vector<16x64xf32> -> vector<64x16xf32>
    %c1 = arith.constant 1 : index
    %c0_2 = arith.constant 0 : index
    %c0_3 = arith.constant 0 : index
    %3 = vector.load %arg1[%c1, %c0_2, %c0_3] : memref<4x16x64xf32, #tpu.memory_space<vmem>>, vector<1x16x64xf32>
    %4 = vector.shape_cast %3 : vector<1x16x64xf32> to vector<16x64xf32>
    %5 = tpu.transpose %4, [1, 0] : vector<16x64xf32> -> vector<64x16xf32>
    %c2 = arith.constant 2 : index
    %c0_4 = arith.constant 0 : index
    %c0_5 = arith.constant 0 : index
    %6 = vector.load %arg1[%c2, %c0_4, %c0_5] : memref<4x16x64xf32, #tpu.memory_space<vmem>>, vector<1x16x64xf32>
    %7 = vector.shape_cast %6 : vector<1x16x64xf32> to vector<16x64xf32>
    %8 = tpu.transpose %7, [1, 0] : vector<16x64xf32> -> vector<64x16xf32>
    %c3 = arith.constant 3 : index
    %c0_6 = arith.constant 0 : index
    %c0_7 = arith.constant 0 : index
    %9 = vector.load %arg1[%c3, %c0_6, %c0_7] : memref<4x16x64xf32, #tpu.memory_space<vmem>>, vector<1x16x64xf32>
    %10 = vector.shape_cast %9 : vector<1x16x64xf32> to vector<16x64xf32>
    %11 = tpu.transpose %10, [1, 0] : vector<16x64xf32> -> vector<64x16xf32>
    %12 = tpu.concatenate %2, %5, %8, %11 in 0 : vector<64x16xf32>, vector<64x16xf32>, vector<64x16xf32>, vector<64x16xf32> -> vector<256x16xf32>
    %13 = arith.truncf %12 : vector<256x16xf32> to vector<256x16xbf16>
    %c0_8 = arith.constant 0 : index
    %c0_9 = arith.constant 0 : index
    %14 = vector.load %arg2[%c0_8, %c0_9] : memref<16x64xbf16, #tpu.memory_space<vmem>>, vector<16x64xbf16>
    %cst = arith.constant dense<0.000000e+00> : vector<256x64xf32>
    %15 = tpu.matmul %13, %14, %cst {dimension_numbers = #tpu.dot_dimension_numbers<[1], [0], [0], [1], [0, 0, 1, 1], [], []>} : vector<256x16xbf16>, vector<16x64xbf16>, vector<256x64xf32> -> vector<256x64xf32>
    %c0_10 = arith.constant 0 : index
    %c0_11 = arith.constant 0 : index
    %16 = vector.load %arg3[%c0_10, %c0_11] : memref<1x64xf32, #tpu.memory_space<vmem>>, vector<1x64xf32>
    %17 = vector.broadcast %16 : vector<1x64xf32> to vector<256x64xf32>
    %18 = arith.addf %15, %17 : vector<256x64xf32>
    %cst_12 = arith.constant 0.000000e+00 : f32
    %19 = vector.broadcast %cst_12 : f32 to vector<256x64xf32>
    %20 = arith.cmpf ogt, %18, %19 : vector<256x64xf32>
    %cst_13 = arith.constant 0.00999999977 : f32
    %21 = vector.broadcast %cst_13 : f32 to vector<256x64xf32>
    %22 = arith.mulf %21, %18 : vector<256x64xf32>
    %23 = arith.select %20, %18, %22 : vector<256x64xi1>, vector<256x64xf32>
    %24 = arith.truncf %23 : vector<256x64xf32> to vector<256x64xbf16>
    %c0_14 = arith.constant 0 : index
    %c0_15 = arith.constant 0 : index
    %25 = vector.load %arg4[%c0_14, %c0_15] : memref<64x128xbf16, #tpu.memory_space<vmem>>, vector<64x128xbf16>
    %cst_16 = arith.constant dense<0.000000e+00> : vector<256x128xf32>
    %26 = tpu.matmul %24, %25, %cst_16 {dimension_numbers = #tpu.dot_dimension_numbers<[1], [0], [0], [1], [0, 0, 1, 1], [], []>} : vector<256x64xbf16>, vector<64x128xbf16>, vector<256x128xf32> -> vector<256x128xf32>
    %c0_17 = arith.constant 0 : index
    %c0_18 = arith.constant 0 : index
    %27 = vector.load %arg5[%c0_17, %c0_18] : memref<1x128xf32, #tpu.memory_space<vmem>>, vector<1x128xf32>
    %28 = vector.broadcast %27 : vector<1x128xf32> to vector<256x128xf32>
    %29 = arith.addf %26, %28 : vector<256x128xf32>
    %cst_19 = arith.constant 0.000000e+00 : f32
    %30 = vector.broadcast %cst_19 : f32 to vector<256x128xf32>
    %31 = arith.cmpf ogt, %29, %30 : vector<256x128xf32>
    %cst_20 = arith.constant 0.00999999977 : f32
    %32 = vector.broadcast %cst_20 : f32 to vector<256x128xf32>
    %33 = arith.mulf %32, %29 : vector<256x128xf32>
    %34 = arith.select %31, %29, %33 : vector<256x128xi1>, vector<256x128xf32>
    %35 = arith.truncf %34 : vector<256x128xf32> to vector<256x128xbf16>
    %c0_21 = arith.constant 0 : index
    %c0_22 = arith.constant 0 : index
    %36 = vector.load %arg6[%c0_21, %c0_22] : memref<128x1024xbf16, #tpu.memory_space<vmem>>, vector<128x1024xbf16>
    %cst_23 = arith.constant dense<0.000000e+00> : vector<256x1024xf32>
    %37 = tpu.matmul %35, %36, %cst_23 {dimension_numbers = #tpu.dot_dimension_numbers<[1], [0], [0], [1], [0, 0, 1, 1], [], []>} : vector<256x128xbf16>, vector<128x1024xbf16>, vector<256x1024xf32> -> vector<256x1024xf32>
    %c0_24 = arith.constant 0 : index
    %c0_25 = arith.constant 0 : index
    %38 = vector.load %arg7[%c0_24, %c0_25] : memref<1x1024xf32, #tpu.memory_space<vmem>>, vector<1x1024xf32>
    %39 = vector.broadcast %38 : vector<1x1024xf32> to vector<256x1024xf32>
    %40 = arith.addf %37, %39 : vector<256x1024xf32>
    %cst_26 = arith.constant 0.000000e+00 : f32
    %41 = vector.broadcast %cst_26 : f32 to vector<256x1024xf32>
    %42 = arith.cmpf ogt, %40, %41 : vector<256x1024xf32>
    %cst_27 = arith.constant 0.00999999977 : f32
    %43 = vector.broadcast %cst_27 : f32 to vector<256x1024xf32>
    %44 = arith.mulf %43, %40 : vector<256x1024xf32>
    %45 = arith.select %42, %40, %44 : vector<256x1024xi1>, vector<256x1024xf32>
    %46 = vector.extract_strided_slice %45 {offsets = [0, 0], sizes = [64, 1024], strides = [1, 1]} : vector<256x1024xf32> to vector<64x1024xf32>
    %cst_28 = arith.constant dense<0xFF800000> : vector<1024xf32>
    %47 = vector.multi_reduction <maximumf>, %46, %cst_28 [0] : vector<64x1024xf32> to vector<1024xf32>
    %48 = vector.shape_cast %47 : vector<1024xf32> to vector<1x1024xf32>
    %c0_29 = arith.constant 0 : index
    %c0_30 = arith.constant 0 : index
    %c0_31 = arith.constant 0 : index
    %49 = vector.load %arg8[%c0_29, %c0_30, %c0_31] : memref<4x1x1024xf32, #tpu.memory_space<vmem>>, vector<1x1x1024xf32>
    %50 = vector.shape_cast %49 : vector<1x1x1024xf32> to vector<1x1024xf32>
    %51 = vector.shape_cast %48 : vector<1x1024xf32> to vector<1x1x1024xf32>
    tpu.vector_store %arg8[%c0_29, %c0_30, %c0_31], %51 {strides = array<i32>} : memref<4x1x1024xf32, #tpu.memory_space<vmem>>, vector<1x1x1024xf32>,
    %52 = vector.extract_strided_slice %45 {offsets = [64, 0], sizes = [64, 1024], strides = [1, 1]} : vector<256x1024xf32> to vector<64x1024xf32>
    %cst_32 = arith.constant dense<0xFF800000> : vector<1024xf32>
    %53 = vector.multi_reduction <maximumf>, %52, %cst_32 [0] : vector<64x1024xf32> to vector<1024xf32>
    %54 = vector.shape_cast %53 : vector<1024xf32> to vector<1x1024xf32>
    %c1_33 = arith.constant 1 : index
    %c0_34 = arith.constant 0 : index
    %c0_35 = arith.constant 0 : index
    %55 = vector.load %arg8[%c1_33, %c0_34, %c0_35] : memref<4x1x1024xf32, #tpu.memory_space<vmem>>, vector<1x1x1024xf32>
    %56 = vector.shape_cast %55 : vector<1x1x1024xf32> to vector<1x1024xf32>
    %57 = vector.shape_cast %54 : vector<1x1024xf32> to vector<1x1x1024xf32>
    tpu.vector_store %arg8[%c1_33, %c0_34, %c0_35], %57 {strides = array<i32>} : memref<4x1x1024xf32, #tpu.memory_space<vmem>>, vector<1x1x1024xf32>,
    %58 = vector.extract_strided_slice %45 {offsets = [128, 0], sizes = [64, 1024], strides = [1, 1]} : vector<256x1024xf32> to vector<64x1024xf32>
    %cst_36 = arith.constant dense<0xFF800000> : vector<1024xf32>
    %59 = vector.multi_reduction <maximumf>, %58, %cst_36 [0] : vector<64x1024xf32> to vector<1024xf32>
    %60 = vector.shape_cast %59 : vector<1024xf32> to vector<1x1024xf32>
    %c2_37 = arith.constant 2 : index
    %c0_38 = arith.constant 0 : index
    %c0_39 = arith.constant 0 : index
    %61 = vector.load %arg8[%c2_37, %c0_38, %c0_39] : memref<4x1x1024xf32, #tpu.memory_space<vmem>>, vector<1x1x1024xf32>
    %62 = vector.shape_cast %61 : vector<1x1x1024xf32> to vector<1x1024xf32>
    %63 = vector.shape_cast %60 : vector<1x1024xf32> to vector<1x1x1024xf32>
    tpu.vector_store %arg8[%c2_37, %c0_38, %c0_39], %63 {strides = array<i32>} : memref<4x1x1024xf32, #tpu.memory_space<vmem>>, vector<1x1x1024xf32>,
    %64 = vector.extract_strided_slice %45 {offsets = [192, 0], sizes = [64, 1024], strides = [1, 1]} : vector<256x1024xf32> to vector<64x1024xf32>
    %cst_40 = arith.constant dense<0xFF800000> : vector<1024xf32>
    %65 = vector.multi_reduction <maximumf>, %64, %cst_40 [0] : vector<64x1024xf32> to vector<1024xf32>
    %66 = vector.shape_cast %65 : vector<1024xf32> to vector<1x1024xf32>
    %c3_41 = arith.constant 3 : index
    %c0_42 = arith.constant 0 : index
    %c0_43 = arith.constant 0 : index
    %67 = vector.load %arg8[%c3_41, %c0_42, %c0_43] : memref<4x1x1024xf32, #tpu.memory_space<vmem>>, vector<1x1x1024xf32>
    %68 = vector.shape_cast %67 : vector<1x1x1024xf32> to vector<1x1024xf32>
    %69 = vector.shape_cast %66 : vector<1x1024xf32> to vector<1x1x1024xf32>
    tpu.vector_store %arg8[%c3_41, %c0_42, %c0_43], %69 {strides = array<i32>} : memref<4x1x1024xf32, #tpu.memory_space<vmem>>, vector<1x1x1024xf32>,
    return
  }
  func.func @transform_0(%arg0: i32) -> (i32, i32, i32) {
    %c0_i32 = arith.constant 0 : i32
    %c0_i32_0 = arith.constant 0 : i32
    %c0_i32_1 = arith.constant 0 : i32
    return %arg0, %c0_i32, %c0_i32_0 : i32, i32, i32
  }
  func.func @transform_1(%arg0: i32) -> (i32, i32) {
    %c0_i32 = arith.constant 0 : i32
    %c0_i32_0 = arith.constant 0 : i32
    %c0_i32_1 = arith.constant 0 : i32
    return %c0_i32, %c0_i32_0 : i32, i32
  }
  func.func @transform_2(%arg0: i32) -> (i32, i32) {
    %c0_i32 = arith.constant 0 : i32
    %c0_i32_0 = arith.constant 0 : i32
    %c0_i32_1 = arith.constant 0 : i32
    return %c0_i32, %c0_i32_0 : i32, i32
  }
  func.func @transform_3(%arg0: i32) -> (i32, i32) {
    %c0_i32 = arith.constant 0 : i32
    %c0_i32_0 = arith.constant 0 : i32
    %c0_i32_1 = arith.constant 0 : i32
    return %c0_i32, %c0_i32_0 : i32, i32
  }
  func.func @transform_4(%arg0: i32) -> (i32, i32) {
    %c0_i32 = arith.constant 0 : i32
    %c0_i32_0 = arith.constant 0 : i32
    %c0_i32_1 = arith.constant 0 : i32
    return %c0_i32, %c0_i32_0 : i32, i32
  }
  func.func @transform_5(%arg0: i32) -> (i32, i32) {
    %c0_i32 = arith.constant 0 : i32
    %c0_i32_0 = arith.constant 0 : i32
    %c0_i32_1 = arith.constant 0 : i32
    return %c0_i32, %c0_i32_0 : i32, i32
  }
  func.func @transform_6(%arg0: i32) -> (i32, i32) {
    %c0_i32 = arith.constant 0 : i32
    %c0_i32_0 = arith.constant 0 : i32
    %c0_i32_1 = arith.constant 0 : i32
    return %c0_i32, %c0_i32_0 : i32, i32
  }
  func.func @transform_7(%arg0: i32) -> (i32, i32, i32) {
    %c0_i32 = arith.constant 0 : i32
    %c0_i32_0 = arith.constant 0 : i32
    %c0_i32_1 = arith.constant 0 : i32
    return %arg0, %c0_i32, %c0_i32_0 : i32, i32, i32
  }
}

</mosaic_0001>

<llo_original>
// kernel: tpu_custom_call.1
$region0: #{tpu_custom_call.1}
  #allocation0 [shape = 'u32[]', space=smem, size = 0x4, offset = 0x4, fixed_abs, tag = 'smem constant byte address 0x4 - core index']
  #allocation1 [shape = 'u32[144,128]{1,0:T(1,128)}', space=vmem, size = 0x12000, scoped, tag = 'internal scratch']
  %s0 = inlined_call_operand.hbm [shape: f32[8,16,64], index: 0, kind: input, shape index: {}]
  %s1 = inlined_call_operand.hbm [shape: bf16[16,64], index: 1, kind: input, shape index: {}]
  %s2 = inlined_call_operand.vmem [shape: f32[1,64], index: 2, kind: input, shape index: {}]
  %s3 = inlined_call_operand.hbm [shape: bf16[64,128], index: 3, kind: input, shape index: {}]
  %s4 = inlined_call_operand.vmem [shape: f32[1,128], index: 4, kind: input, shape index: {}]
  %s5 = inlined_call_operand.hbm [shape: bf16[128,1024], index: 5, kind: input, shape index: {}]
  %s6 = inlined_call_operand.vmem [shape: f32[1,1024], index: 6, kind: input, shape index: {}]
  %s7 = inlined_call_operand.hbm [shape: f32[8,1,1024], index: 7, kind: output, shape index: {}]
  %s8 = sld [smem:[#allocation0]]
  $region77: #{tpu_custom_call.1} parent=0
    _
  %s10 = ssub.s32 1, %s8
  %s11 = scalar_select 0, %s10, %s8
  $region1: #{tpu_custom_call.1} parent=0
    #allocation2 [shape = 'u8[65536]{0}', space=vmem, size = 0x10000, scoped, tag = 'input window, operand 0']
    #allocation3 [shape = 's32[2]{0}', space=sflag, size = 0x8, scoped, tag = 'scoped memory for tpu_custom_call.1']
    #allocation4 [shape = 's32[2]{0}', space=sflag, size = 0x8, scoped, tag = 'scoped memory for tpu_custom_call.1']
    #allocation5 [shape = 'u8[4096]{0}', space=vmem, size = 0x1000, scoped, tag = 'input window, operand 1, single buffered']
    #allocation6 [shape = 's32[1]{0}', space=sflag, size = 0x4, scoped, tag = 'scoped memory for tpu_custom_call.1']
    #allocation7 [shape = 'u8[16384]{0}', space=vmem, size = 0x4000, scoped, tag = 'input window, operand 3, single buffered']
    #allocation8 [shape = 'u8[262144]{0}', space=vmem, size = 0x40000, scoped, tag = 'input window, operand 5, single buffered']
    #allocation9 [shape = 's32[1]{0}', space=sflag, size = 0x4, scoped, tag = 'scoped memory for tpu_custom_call.1']
    #allocation10 [shape = 'u8[32768]{0}', space=vmem, size = 0x8000, scoped, tag = 'output window, operand 0']
    %12 = vsyncpa [#allocation3], 0
    %s13 = scalar_lea.sflag [#allocation3], 1
    %14 = vsyncpa %s13, 0
    %15 = vsyncpa [#allocation6], 0
    %16 = vsyncpa [#allocation9], 0
    %17 = vsyncpa [#allocation4], 0
    %s18 = scalar_lea.sflag [#allocation4], 1
    %19 = vsyncpa %s18, 0
    loop: start=0, step=1, limit=4
    $region2: #{tpu_custom_call.1} parent=1 // loop_pre_header
      _
    $region3: #{tpu_custom_call.1} parent=1 // loop_header
      %s21 = sphi 0, %s25
      %p22 = scmp.ge.s32.totalorder %s21, 4
      %s31 = sphi 0, %s33
      %s34 = sphi 0, %s31
      %s35 = sphi 0, %s34
      %s51 = sphi 0, %s35
      %s55 = sphi 0, %s55
      %s57 = sphi 0, %s55
      %s58 = sphi 0, %s57
      %s72 = sphi 0, %s58
      %s76 = sphi 0, %s76
      %s78 = sphi 0, %s76
      %s79 = sphi 0, %s78
      %s93 = sphi 0, %s79
      %s97 = sphi 0, %s97
      %s99 = sphi 0, %s97
      %s100 = sphi 0, %s99
      %s114 = sphi 0, %s100
      %s118 = sphi 0, %s118
      %s120 = sphi 0, %s118
      %s121 = sphi 0, %s120
      %s135 = sphi 0, %s121
      %s139 = sphi 0, %s139
      %s141 = sphi 0, %s139
      %s142 = sphi 0, %s141
      %s156 = sphi 0, %s142
      %s160 = sphi 0, %s160
      %s162 = sphi 0, %s160
      %s163 = sphi 0, %s162
      %s177 = sphi 0, %s163
      %s183 = sphi 0, %s185
      %s186 = sphi 0, %s183
      %s187 = sphi 0, %s186
      %s203 = sphi 0, %s187
    $region4: #{tpu_custom_call.1} parent=1 // loop_header_branch
      %24 = sbr.rel (%p22) target = $region8
    $region5: #{tpu_custom_call.1} parent=1 // loop_body
      %s26 = ssub.s32 %s21, 1
      %s27 = ssub.s32 %s21, 2
      %s28 = sadd.s32 %s21, 1
      %s29 = ssub.s32 %s21, %s28
      %p30 = scmp.eq.s32.totalorder %s29, 0
      %s32 = sadd.s32 %s31, 1
      %s33 = scalar_select %p30, %s31, %s32
      %p36 = pneg %p30
      %p37 = scmp.eq.s32.totalorder %s21, 1
      %p38 = por %p36, %p37
      %p39 = scmp.ne.s32.totalorder %s31, %s34
      %p40 = scmp.eq.s32.totalorder %s21, 0
      %p41 = por %p39, %p40
      %p42 = scmp.ne.s32.totalorder %s31, %s34
      %p43 = scmp.eq.s32.totalorder %s26, 1
      %p44 = por %p42, %p43
      %p45 = scmp.ne.s32.totalorder %s34, %s35
      %p46 = scmp.eq.s32.totalorder %s26, 0
      %p47 = por %p45, %p46
      %p48 = scmp.ne.s32.totalorder %s34, %s35
      %p49 = scmp.eq.s32.totalorder %s27, 1
      %p50 = por %p48, %p49
      %p52 = scmp.ne.s32.totalorder %s35, %s51
      %p53 = scmp.eq.s32.totalorder %s27, 0
      %p54 = por %p52, %p53
      %s56 = sadd.s32 %s55, 1
      %p59 = scmp.eq.s32.totalorder %s21, 1
      %p60 = scmp.ne.s32.totalorder %s55, %s57
      %p61 = scmp.eq.s32.totalorder %s21, 0
      %p62 = por %p60, %p61
      %p63 = scmp.ne.s32.totalorder %s55, %s57
      %p64 = scmp.eq.s32.totalorder %s26, 1
      %p65 = por %p63, %p64
      %p66 = scmp.ne.s32.totalorder %s57, %s58
      %p67 = scmp.eq.s32.totalorder %s26, 0
      %p68 = por %p66, %p67
      %p69 = scmp.ne.s32.totalorder %s57, %s58
      %p70 = scmp.eq.s32.totalorder %s27, 1
      %p71 = por %p69, %p70
      %p73 = scmp.ne.s32.totalorder %s58, %s72
      %p74 = scmp.eq.s32.totalorder %s27, 0
      %p75 = por %p73, %p74
      %s77 = sadd.s32 %s76, 1
      %p80 = scmp.eq.s32.totalorder %s21, 1
      %p81 = scmp.ne.s32.totalorder %s76, %s78
      %p82 = scmp.eq.s32.totalorder %s21, 0
      %p83 = por %p81, %p82
      %p84 = scmp.ne.s32.totalorder %s76, %s78
      %p85 = scmp.eq.s32.totalorder %s26, 1
      %p86 = por %p84, %p85
      %p87 = scmp.ne.s32.totalorder %s78, %s79
      %p88 = scmp.eq.s32.totalorder %s26, 0
      %p89 = por %p87, %p88
      %p90 = scmp.ne.s32.totalorder %s78, %s79
      %p91 = scmp.eq.s32.totalorder %s27, 1
      %p92 = por %p90, %p91
      %p94 = scmp.ne.s32.totalorder %s79, %s93
      %p95 = scmp.eq.s32.totalorder %s27, 0
      %p96 = por %p94, %p95
      %s98 = sadd.s32 %s97, 1
      %p101 = scmp.eq.s32.totalorder %s21, 1
      %p102 = scmp.ne.s32.totalorder %s97, %s99
      %p103 = scmp.eq.s32.totalorder %s21, 0
      %p104 = por %p102, %p103
      %p105 = scmp.ne.s32.totalorder %s97, %s99
      %p106 = scmp.eq.s32.totalorder %s26, 1
      %p107 = por %p105, %p106
      %p108 = scmp.ne.s32.totalorder %s99, %s100
      %p109 = scmp.eq.s32.totalorder %s26, 0
      %p110 = por %p108, %p109
      %p111 = scmp.ne.s32.totalorder %s99, %s100
      %p112 = scmp.eq.s32.totalorder %s27, 1
      %p113 = por %p111, %p112
      %p115 = scmp.ne.s32.totalorder %s100, %s114
      %p116 = scmp.eq.s32.totalorder %s27, 0
      %p117 = por %p115, %p116
      %s119 = sadd.s32 %s118, 1
      %p122 = scmp.eq.s32.totalorder %s21, 1
      %p123 = scmp.ne.s32.totalorder %s118, %s120
      %p124 = scmp.eq.s32.totalorder %s21, 0
      %p125 = por %p123, %p124
      %p126 = scmp.ne.s32.totalorder %s118, %s120
      %p127 = scmp.eq.s32.totalorder %s26, 1
      %p128 = por %p126, %p127
      %p129 = scmp.ne.s32.totalorder %s120, %s121
      %p130 = scmp.eq.s32.totalorder %s26, 0
      %p131 = por %p129, %p130
      %p132 = scmp.ne.s32.totalorder %s120, %s121
      %p133 = scmp.eq.s32.totalorder %s27, 1
      %p134 = por %p132, %p133
      %p136 = scmp.ne.s32.totalorder %s121, %s135
      %p137 = scmp.eq.s32.totalorder %s27, 0
      %p138 = por %p136, %p137
      %s140 = sadd.s32 %s139, 1
      %p143 = scmp.eq.s32.totalorder %s21, 1
      %p144 = scmp.ne.s32.totalorder %s139, %s141
      %p145 = scmp.eq.s32.totalorder %s21, 0
      %p146 = por %p144, %p145
      %p147 = scmp.ne.s32.totalorder %s139, %s141
      %p148 = scmp.eq.s32.totalorder %s26, 1
      %p149 = por %p147, %p148
      %p150 = scmp.ne.s32.totalorder %s141, %s142
      %p151 = scmp.eq.s32.totalorder %s26, 0
      %p152 = por %p150, %p151
      %p153 = scmp.ne.s32.totalorder %s141, %s142
      %p154 = scmp.eq.s32.totalorder %s27, 1
      %p155 = por %p153, %p154
      %p157 = scmp.ne.s32.totalorder %s142, %s156
      %p158 = scmp.eq.s32.totalorder %s27, 0
      %p159 = por %p157, %p158
      %s161 = sadd.s32 %s160, 1
      %p164 = scmp.eq.s32.totalorder %s21, 1
      %p165 = scmp.ne.s32.totalorder %s160, %s162
      %p166 = scmp.eq.s32.totalorder %s21, 0
      %p167 = por %p165, %p166
      %p168 = scmp.ne.s32.totalorder %s160, %s162
      %p169 = scmp.eq.s32.totalorder %s26, 1
      %p170 = por %p168, %p169
      %p171 = scmp.ne.s32.totalorder %s162, %s163
      %p172 = scmp.eq.s32.totalorder %s26, 0
      %p173 = por %p171, %p172
      %p174 = scmp.ne.s32.totalorder %s162, %s163
      %p175 = scmp.eq.s32.totalorder %s27, 1
      %p176 = por %p174, %p175
      %p178 = scmp.ne.s32.totalorder %s163, %s177
      %p179 = scmp.eq.s32.totalorder %s27, 0
      %p180 = por %p178, %p179
      %s181 = ssub.s32 %s21, %s28
      %p182 = scmp.eq.s32.totalorder %s181, 0
      %s184 = sadd.s32 %s183, 1
      %s185 = scalar_select %p182, %s183, %s184
      %p188 = pneg %p182
      %p189 = scmp.eq.s32.totalorder %s21, 1
      %p190 = por %p188, %p189
      %p191 = scmp.ne.s32.totalorder %s183, %s186
      %p192 = scmp.eq.s32.totalorder %s21, 0
      %p193 = por %p191, %p192
      %p194 = scmp.ne.s32.totalorder %s183, %s186
      %p195 = scmp.eq.s32.totalorder %s26, 1
      %p196 = por %p194, %p195
      %p197 = scmp.ne.s32.totalorder %s186, %s187
      %p198 = scmp.eq.s32.totalorder %s26, 0
      %p199 = por %p197, %p198
      %p200 = scmp.ne.s32.totalorder %s186, %s187
      %p201 = scmp.eq.s32.totalorder %s27, 1
      %p202 = por %p200, %p201
      %p204 = scmp.ne.s32.totalorder %s187, %s203
      %p205 = scmp.eq.s32.totalorder %s27, 0
      %p206 = por %p204, %p205
      %p207 = scmp.le.s32.totalorder 1, %s21
      %p208 = scmp.lt.s32.totalorder %s21, 3
      %p209 = pnand %p207, %p208
      %p210 = pneg %p209
      // Predicated region
      $region9: #{tpu_custom_call.1} parent=5 // pred_check
        _
      $region10: #{tpu_custom_call.1} parent=5 // pred_check_branch
        %212 = sbr.rel (%p209) target = $region12
      $region11: #{tpu_custom_call.1} parent=5 // pred_region
        %s213 = ssub.s32 %s21, 1
        // Predicated region
        $region13: #{tpu_custom_call.1} parent=11 // pred_check
          %p214 = pneg %p68
        $region14: #{tpu_custom_call.1} parent=11 // pred_check_branch
          %216 = sbr.rel (%p214) target = $region16
        $region15: #{tpu_custom_call.1} parent=11 // pred_region
          %s218 = ssub.s32 128, 128
          %219 = vsyncadd [#allocation6], %s218
          %s220 = sshll.u32 [#allocation5], 4
          %s221 = int_to_ptr.vmem [resolvable:$true] %s220
          %226 = dma.hbm_to_vmem [thread:$0]  %s1, 128, %s221, [#allocation6], 64, 64, 4
        $region16: #{tpu_custom_call.1} parent=11 // pred_fallthru
          _
        // Predicated region
        $region17: #{tpu_custom_call.1} parent=11 // pred_check
          %p227 = pneg %p89
        $region18: #{tpu_custom_call.1} parent=11 // pred_check_branch
          %229 = sbr.rel (%p227) target = $region20
        $region19: #{tpu_custom_call.1} parent=11 // pred_region
          _
        $region20: #{tpu_custom_call.1} parent=11 // pred_fallthru
          _
        // Predicated region
        $region21: #{tpu_custom_call.1} parent=11 // pred_check
          %p230 = pneg %p110
        $region22: #{tpu_custom_call.1} parent=11 // pred_check_branch
          %232 = sbr.rel (%p230) target = $region24
        $region23: #{tpu_custom_call.1} parent=11 // pred_region
          %s234 = ssub.s32 512, 512
          %235 = vsyncadd [#allocation6], %s234
          %s236 = sshll.u32 [#allocation7], 4
          %s237 = int_to_ptr.vmem [resolvable:$true] %s236
          %242 = dma.hbm_to_vmem [thread:$0]  %s3, 512, %s237, [#allocation6], 64, 64, 4
        $region24: #{tpu_custom_call.1} parent=11 // pred_fallthru
          _
        // Predicated region
        $region25: #{tpu_custom_call.1} parent=11 // pred_check
          %p243 = pneg %p131
        $region26: #{tpu_custom_call.1} parent=11 // pred_check_branch
          %245 = sbr.rel (%p243) target = $region28
        $region27: #{tpu_custom_call.1} parent=11 // pred_region
          _
        $region28: #{tpu_custom_call.1} parent=11 // pred_fallthru
          _
        // Predicated region
        $region29: #{tpu_custom_call.1} parent=11 // pred_check
          %p246 = pneg %p152
        $region30: #{tpu_custom_call.1} parent=11 // pred_check_branch
          %248 = sbr.rel (%p246) target = $region32
        $region31: #{tpu_custom_call.1} parent=11 // pred_region
          %s250 = ssub.s32 8192, 8192
          %251 = vsyncadd [#allocation9], %s250
          %s252 = sshll.u32 [#allocation8], 4
          %s253 = int_to_ptr.vmem [resolvable:$true] %s252
          %258 = dma.hbm_to_vmem [thread:$0]  %s5, 8192, %s253, [#allocation9], 512, 512, 32
        $region32: #{tpu_custom_call.1} parent=11 // pred_fallthru
          _
        // Predicated region
        $region33: #{tpu_custom_call.1} parent=11 // pred_check
          %p259 = pneg %p173
        $region34: #{tpu_custom_call.1} parent=11 // pred_check_branch
          %261 = sbr.rel (%p259) target = $region36
        $region35: #{tpu_custom_call.1} parent=11 // pred_region
          _
        $region36: #{tpu_custom_call.1} parent=11 // pred_fallthru
          _
      $region12: #{tpu_custom_call.1} parent=5 // pred_fallthru
        _
      %p262 = scmp.lt.s32.totalorder %s21, 2
      // Predicated region
      $region37: #{tpu_custom_call.1} parent=5 // pred_check
        %p263 = pneg %p262
      $region38: #{tpu_custom_call.1} parent=5 // pred_check_branch
        %265 = sbr.rel (%p263) target = $region40
      $region39: #{tpu_custom_call.1} parent=5 // pred_region
        // Predicated region
        $region41: #{tpu_custom_call.1} parent=39 // pred_check
          %p266 = pneg %p41
        $region42: #{tpu_custom_call.1} parent=39 // pred_check_branch
          %268 = sbr.rel (%p266) target = $region44
        $region43: #{tpu_custom_call.1} parent=39 // pred_region
          %s269 = sand.u32 %s31, 1
          %s270 = scalar_lea.sflag [#allocation3], %s269
          %s271 = sand.u32 %s31, 1
          %s272 = smul.addr %s271, 64
          %s273 = scalar_lea.vmem [#allocation2], %s272
          %s274 = smul.u32 4, %s21
          %s276 = ssub.s32 1024, 1024
          %277 = vsyncadd %s270, %s276
          %s278 = smul.addr %s274, 2
          %s279 = smul.addr %s278, 128
          %s280 = scalar_lea.hbm %s0, %s279
          %s281 = sshll.u32 %s273, 4
          %s282 = int_to_ptr.vmem [resolvable:$true] %s281
          %287 = dma.hbm_to_vmem [thread:$0]  %s280, 1024, %s282, %s270, 128, 128, 8
        $region44: #{tpu_custom_call.1} parent=39 // pred_fallthru
          _
      $region40: #{tpu_custom_call.1} parent=5 // pred_fallthru
        _
      %p288 = scmp.le.s32.totalorder 1, %s21
      %p289 = scmp.lt.s32.totalorder %s21, 3
      %p290 = pnand %p288, %p289
      %p291 = pneg %p290
      // Predicated region
      $region45: #{tpu_custom_call.1} parent=5 // pred_check
        _
      $region46: #{tpu_custom_call.1} parent=5 // pred_check_branch
        %293 = sbr.rel (%p290) target = $region48
      $region47: #{tpu_custom_call.1} parent=5 // pred_region
        %s294 = ssub.s32 %s21, 1
        %s295 = sand.u32 %s34, 1
        %s296 = scalar_lea.sflag [#allocation3], %s295
        %s297 = sand.u32 %s34, 1
        %s298 = smul.addr %s297, 64
        %s299 = scalar_lea.vmem [#allocation2], %s298
        // Predicated region
        $region49: #{tpu_custom_call.1} parent=47 // pred_check
          %p300 = pneg %p47
        $region50: #{tpu_custom_call.1} parent=47 // pred_check_branch
          %302 = sbr.rel (%p300) target = $region52
        $region51: #{tpu_custom_call.1} parent=47 // pred_region
          %303 = dma.done %s296, 1024
        $region52: #{tpu_custom_call.1} parent=47 // pred_fallthru
          _
        // Predicated region
        $region53: #{tpu_custom_call.1} parent=47 // pred_check
          %p304 = pneg %p68
        $region54: #{tpu_custom_call.1} parent=47 // pred_check_branch
          %306 = sbr.rel (%p304) target = $region56
        $region55: #{tpu_custom_call.1} parent=47 // pred_region
          %307 = dma.done [#allocation6], 128
        $region56: #{tpu_custom_call.1} parent=47 // pred_fallthru
          _
        // Predicated region
        $region57: #{tpu_custom_call.1} parent=47 // pred_check
          %p308 = pneg %p110
        $region58: #{tpu_custom_call.1} parent=47 // pred_check_branch
          %310 = sbr.rel (%p308) target = $region60
        $region59: #{tpu_custom_call.1} parent=47 // pred_region
          %311 = dma.done [#allocation6], 512
        $region60: #{tpu_custom_call.1} parent=47 // pred_fallthru
          _
        // Predicated region
        $region61: #{tpu_custom_call.1} parent=47 // pred_check
          %p312 = pneg %p152
        $region62: #{tpu_custom_call.1} parent=47 // pred_check_branch
          %314 = sbr.rel (%p312) target = $region64
        $region63: #{tpu_custom_call.1} parent=47 // pred_region
          %315 = dma.done [#allocation9], 8192
        $region64: #{tpu_custom_call.1} parent=47 // pred_fallthru
          _
        %s316 = sand.u32 %s34, 1
        %s317 = scalar_lea.sflag [#allocation3], %s316
        %s318 = sand.u32 %s34, 1
        %s319 = smul.addr %s318, 64
        %s320 = scalar_lea.vmem [#allocation2], %s319
        %p321 = pneg %p47
        %p322 = pneg %p44
        %p323 = pneg %p68
        %p324 = pneg %p65
        %p325 = pneg %p89
        %p326 = pneg %p86
        %p327 = pneg %p110
        %p328 = pneg %p107
        %p329 = pneg %p131
        %p330 = pneg %p128
        %p331 = pneg %p152
        %p332 = pneg %p149
        %p333 = pneg %p173
        %p334 = pneg %p170
        %p335 = pneg %p199
        %p336 = pneg %p196
        %s337 = sand.u32 %s186, 1
        %s338 = scalar_lea.sflag [#allocation4], %s337
        %s339 = sand.u32 %s186, 1
        %s340 = smul.addr %s339, 32
        %s341 = scalar_lea.vmem [#allocation10], %s340
        %s342 = smul.u32 4, %s26
        %s343 = smul.u32 4, %s26
        %v345 = vld [vmem:[%s299] sm:$0xff]
        %v346 = vld [vmem:[%s299 + $0x8] sm:$0xff]
        %347 = vxpose.xlu0.b32.start [1/16] %v345, 128
        %348 = vxpose.xlu0.b32.cont [2/16] %v346, 128
        %349 = vxpose.xlu0.b32.cont [3/16] 0.0, 128
        %350 = vxpose.xlu0.b32.cont [4/16] 0.0, 128
        %351 = vxpose.xlu0.b32.cont [5/16] 0.0, 128
        %352 = vxpose.xlu0.b32.cont [6/16] 0.0, 128
        %353 = vxpose.xlu0.b32.cont [7/16] 0.0, 128
        %354 = vxpose.xlu0.b32.cont [8/16] 0.0, 128
        %355 = vxpose.xlu0.b32.cont [9/16] 0.0, 128
        %356 = vxpose.xlu0.b32.cont [10/16] 0.0, 128
        %357 = vxpose.xlu0.b32.cont [11/16] 0.0, 128
        %358 = vxpose.xlu0.b32.cont [12/16] 0.0, 128
        %359 = vxpose.xlu0.b32.cont [13/16] 0.0, 128
        %360 = vxpose.xlu0.b32.cont [14/16] 0.0, 128
        %361 = vxpose.xlu0.b32.cont [15/16] 0.0, 128
        %362 = vxpose.xlu0.b32.end [16/16] 0.0, 128
        %v363 = vpop.trf.xlu0
        %v364 = vpop.trf.xlu0
        %v365 = vpop.trf.xlu0
        %v366 = vpop.trf.xlu0
        %v367 = vpop.trf.xlu0
        %v368 = vpop.trf.xlu0
        %v369 = vpop.trf.xlu0
        %v370 = vpop.trf.xlu0
        %v371 = vpop.trf.xlu0
        %v372 = vpop.trf.xlu0
        %v373 = vpop.trf.xlu0
        %v374 = vpop.trf.xlu0
        %v375 = vpop.trf.xlu0
        %v376 = vpop.trf.xlu0
        %v377 = vpop.trf.xlu0
        %v378 = vpop.trf.xlu0
        %s379 = scalar_lea.vmem %s299, 16 [#allocation2]
        %v380 = vld [vmem:[%s379] sm:$0xff]
        %v381 = vld [vmem:[%s379 + $0x8] sm:$0xff]
        %382 = vxpose.xlu0.b32.start [1/16] %v380, 128
        %383 = vxpose.xlu0.b32.cont [2/16] %v381, 128
        %384 = vxpose.xlu0.b32.cont [3/16] 0.0, 128
        %385 = vxpose.xlu0.b32.cont [4/16] 0.0, 128
        %386 = vxpose.xlu0.b32.cont [5/16] 0.0, 128
        %387 = vxpose.xlu0.b32.cont [6/16] 0.0, 128
        %388 = vxpose.xlu0.b32.cont [7/16] 0.0, 128
        %389 = vxpose.xlu0.b32.cont [8/16] 0.0, 128
        %390 = vxpose.xlu0.b32.cont [9/16] 0.0, 128
        %391 = vxpose.xlu0.b32.cont [10/16] 0.0, 128
        %392 = vxpose.xlu0.b32.cont [11/16] 0.0, 128
        %393 = vxpose.xlu0.b32.cont [12/16] 0.0, 128
        %394 = vxpose.xlu0.b32.cont [13/16] 0.0, 128
        %395 = vxpose.xlu0.b32.cont [14/16] 0.0, 128
        %396 = vxpose.xlu0.b32.cont [15/16] 0.0, 128
        %397 = vxpose.xlu0.b32.end [16/16] 0.0, 128
        %v398 = vpop.trf.xlu0
        %v399 = vpop.trf.xlu0
        %v400 = vpop.trf.xlu0
        %v401 = vpop.trf.xlu0
        %v402 = vpop.trf.xlu0
        %v403 = vpop.trf.xlu0
        %v404 = vpop.trf.xlu0
        %v405 = vpop.trf.xlu0
        %v406 = vpop.trf.xlu0
        %v407 = vpop.trf.xlu0
        %v408 = vpop.trf.xlu0
        %v409 = vpop.trf.xlu0
        %v410 = vpop.trf.xlu0
        %v411 = vpop.trf.xlu0
        %v412 = vpop.trf.xlu0
        %v413 = vpop.trf.xlu0
        %s414 = scalar_lea.vmem %s299, 32 [#allocation2]
        %v415 = vld [vmem:[%s414] sm:$0xff]
        %v416 = vld [vmem:[%s414 + $0x8] sm:$0xff]
        %417 = vxpose.xlu0.b32.start [1/16] %v415, 128
        %418 = vxpose.xlu0.b32.cont [2/16] %v416, 128
        %419 = vxpose.xlu0.b32.cont [3/16] 0.0, 128
        %420 = vxpose.xlu0.b32.cont [4/16] 0.0, 128
        %421 = vxpose.xlu0.b32.cont [5/16] 0.0, 128
        %422 = vxpose.xlu0.b32.cont [6/16] 0.0, 128
        %423 = vxpose.xlu0.b32.cont [7/16] 0.0, 128
        %424 = vxpose.xlu0.b32.cont [8/16] 0.0, 128
        %425 = vxpose.xlu0.b32.cont [9/16] 0.0, 128
        %426 = vxpose.xlu0.b32.cont [10/16] 0.0, 128
        %427 = vxpose.xlu0.b32.cont [11/16] 0.0, 128
        %428 = vxpose.xlu0.b32.cont [12/16] 0.0, 128
        %429 = vxpose.xlu0.b32.cont [13/16] 0.0, 128
        %430 = vxpose.xlu0.b32.cont [14/16] 0.0, 128
        %431 = vxpose.xlu0.b32.cont [15/16] 0.0, 128
        %432 = vxpose.xlu0.b32.end [16/16] 0.0, 128
        %v433 = vpop.trf.xlu0
        %v434 = vpop.trf.xlu0
        %v435 = vpop.trf.xlu0
        %v436 = vpop.trf.xlu0
        %v437 = vpop.trf.xlu0
        %v438 = vpop.trf.xlu0
        %v439 = vpop.trf.xlu0
        %v440 = vpop.trf.xlu0
        %v441 = vpop.trf.xlu0
        %v442 = vpop.trf.xlu0
        %v443 = vpop.trf.xlu0
        %v444 = vpop.trf.xlu0
        %v445 = vpop.trf.xlu0
        %v446 = vpop.trf.xlu0
        %v447 = vpop.trf.xlu0
        %v448 = vpop.trf.xlu0
        %s449 = scalar_lea.vmem %s299, 48 [#allocation2]
        %v450 = vld [vmem:[%s449] sm:$0xff]
        %v451 = vld [vmem:[%s449 + $0x8] sm:$0xff]
        %452 = vxpose.xlu0.b32.start [1/16] %v450, 128
        %453 = vxpose.xlu0.b32.cont [2/16] %v451, 128
        %454 = vxpose.xlu0.b32.cont [3/16] 0.0, 128
        %455 = vxpose.xlu0.b32.cont [4/16] 0.0, 128
        %456 = vxpose.xlu0.b32.cont [5/16] 0.0, 128
        %457 = vxpose.xlu0.b32.cont [6/16] 0.0, 128
        %458 = vxpose.xlu0.b32.cont [7/16] 0.0, 128
        %459 = vxpose.xlu0.b32.cont [8/16] 0.0, 128
        %460 = vxpose.xlu0.b32.cont [9/16] 0.0, 128
        %461 = vxpose.xlu0.b32.cont [10/16] 0.0, 128
        %462 = vxpose.xlu0.b32.cont [11/16] 0.0, 128
        %463 = vxpose.xlu0.b32.cont [12/16] 0.0, 128
        %464 = vxpose.xlu0.b32.cont [13/16] 0.0, 128
        %465 = vxpose.xlu0.b32.cont [14/16] 0.0, 128
        %466 = vxpose.xlu0.b32.cont [15/16] 0.0, 128
        %467 = vxpose.xlu0.b32.end [16/16] 0.0, 128
        %v468 = vpop.trf.xlu0
        %v469 = vpop.trf.xlu0
        %v470 = vpop.trf.xlu0
        %v471 = vpop.trf.xlu0
        %v472 = vpop.trf.xlu0
        %v473 = vpop.trf.xlu0
        %v474 = vpop.trf.xlu0
        %v475 = vpop.trf.xlu0
        %v476 = vpop.trf.xlu0
        %v477 = vpop.trf.xlu0
        %v478 = vpop.trf.xlu0
        %v479 = vpop.trf.xlu0
        %v480 = vpop.trf.xlu0
        %v481 = vpop.trf.xlu0
        %v482 = vpop.trf.xlu0
        %v483 = vpop.trf.xlu0
        %v484 = vpack.c.bf16 %v364, %v363
        %v485 = vpack.c.bf16 %v366, %v365
        %v486 = vpack.c.bf16 %v368, %v367
        %v487 = vpack.c.bf16 %v370, %v369
        %v488 = vpack.c.bf16 %v399, %v398
        %v489 = vpack.c.bf16 %v401, %v400
        %v490 = vpack.c.bf16 %v403, %v402
        %v491 = vpack.c.bf16 %v405, %v404
        %v492 = vpack.c.bf16 %v434, %v433
        %v493 = vpack.c.bf16 %v436, %v435
        %v494 = vpack.c.bf16 %v438, %v437
        %v495 = vpack.c.bf16 %v440, %v439
        %v496 = vpack.c.bf16 %v469, %v468
        %v497 = vpack.c.bf16 %v471, %v470
        %v498 = vpack.c.bf16 %v473, %v472
        %v499 = vpack.c.bf16 %v475, %v474
        %v500 = vld [vmem:[#allocation5] sm:$0xf]
        %v501 = vld [vmem:[#allocation5 + $0x4] sm:$0xf]
        %v502 = vld [vmem:[%s2] sm:$0x1]
        %v504 = vlaneseq
        %v505 = vshrl.u32 %v504, 7
        %v506 = vsub.s32 0, %v505
        %v507 = vrot.slane %v502, %v506
        %v511 = vunpack.c.l.b16 %v500
        %v512 = vunpack.c.l.b16 %v501
        %v513 = vpack.c.b16 %v512, %v511
        %vm515 = vcmask 130048
        %v517 = vsel %vm515, %v484, 0
        %v520 = vsel %vm515, %v485, 0
        %v523 = vsel %vm515, %v486, 0
        %v526 = vsel %vm515, %v487, 0
        %v529 = vsel %vm515, %v488, 0
        %v532 = vsel %vm515, %v489, 0
        %v535 = vsel %vm515, %v490, 0
        %v538 = vsel %vm515, %v491, 0
        %v541 = vsel %vm515, %v492, 0
        %v544 = vsel %vm515, %v493, 0
        %v547 = vsel %vm515, %v494, 0
        %v550 = vsel %vm515, %v495, 0
        %v553 = vsel %vm515, %v496, 0
        %v556 = vsel %vm515, %v497, 0
        %v559 = vsel %vm515, %v498, 0
        %v562 = vsel %vm515, %v499, 0
        %564 = vmatprep.subr.bf16.mxu0 0
        %565 = vmatpush1.bf16.msra.mxu0 %v513
        %566 = vmatprep.subr.bf16.mxu0 0
        %567 = vmatpush1.bf16.msra.mxu0 0
        %568 = vmatprep.subr.bf16.mxu0 0
        %569 = vmatpush1.bf16.msra.mxu0 0
        %570 = vmatprep.subr.bf16.mxu0 0
        %571 = vmatpush1.bf16.msra.mxu0 0
        %572 = vmatprep.subr.bf16.mxu0 0
        %573 = vmatpush1.bf16.msra.mxu0 0
        %574 = vmatprep.subr.bf16.mxu0 0
        %575 = vmatpush1.bf16.msra.mxu0 0
        %576 = vmatprep.subr.bf16.mxu0 0
        %577 = vmatpush1.bf16.msra.mxu0 0
        %578 = vmatprep.subr.bf16.mxu0 0
        %579 = vmatpush1.bf16.msra.mxu0 0
        %580 = vmatprep.subr.bf16.mxu0 0
        %581 = vmatpush1.bf16.msra.mxu0 0
        %582 = vmatprep.subr.bf16.mxu0 0
        %583 = vmatpush1.bf16.msra.mxu0 0
        %584 = vmatprep.subr.bf16.mxu0 0
        %585 = vmatpush1.bf16.msra.mxu0 0
        %586 = vmatprep.subr.bf16.mxu0 0
        %587 = vmatpush1.bf16.msra.mxu0 0
        %588 = vmatprep.subr.bf16.mxu0 0
        %589 = vmatpush1.bf16.msra.mxu0 0
        %590 = vmatprep.subr.bf16.mxu0 0
        %591 = vmatpush1.bf16.msra.mxu0 0
        %592 = vmatprep.subr.bf16.mxu0 0
        %593 = vmatpush1.bf16.msra.mxu0 0
        %594 = vmatprep.subr.bf16.mxu0 0
        %595 = vmatpush1.bf16.msra.mxu0 0
        %596 = vmatprep.mubr.bf16.mxu0 0
        %597 = vmatmul.mubr.bf16.gmra.mrb[0].mxu0 %v517
        %v598 = vpop.f32.mrb[0].mxu0
        %v599 = vadd.f32 %v507, %v598
        %v600 = vpop.f32.mrb[0].mxu0
        %v601 = vpop.f32.mrb[0].mxu0
        %v602 = vadd.f32 %v507, %v601
        %v603 = vpop.f32.mrb[0].mxu0
        %604 = vmatprep.mubr.bf16.mxu0 0
        %605 = vmatmul.mubr.bf16.gmra.mrb[0].mxu0 %v520
        %v606 = vpop.f32.mrb[0].mxu0
        %v607 = vadd.f32 %v507, %v606
        %v608 = vpop.f32.mrb[0].mxu0
        %v609 = vpop.f32.mrb[0].mxu0
        %v610 = vadd.f32 %v507, %v609
        %v611 = vpop.f32.mrb[0].mxu0
        %612 = vmatprep.mubr.bf16.mxu0 0
        %613 = vmatmul.mubr.bf16.gmra.mrb[0].mxu0 %v523
        %v614 = vpop.f32.mrb[0].mxu0
        %v615 = vadd.f32 %v507, %v614
        %v616 = vpop.f32.mrb[0].mxu0
        %v617 = vpop.f32.mrb[0].mxu0
        %v618 = vadd.f32 %v507, %v617
        %v619 = vpop.f32.mrb[0].mxu0
        %620 = vmatprep.mubr.bf16.mxu0 0
        %621 = vmatmul.mubr.bf16.gmra.mrb[0].mxu0 %v526
        %v622 = vpop.f32.mrb[0].mxu0
        %v623 = vadd.f32 %v507, %v622
        %v624 = vpop.f32.mrb[0].mxu0
        %v625 = vpop.f32.mrb[0].mxu0
        %v626 = vadd.f32 %v507, %v625
        %v627 = vpop.f32.mrb[0].mxu0
        %628 = vmatprep.mubr.bf16.mxu0 0
        %629 = vmatmul.mubr.bf16.gmra.mrb[0].mxu0 %v529
        %v630 = vpop.f32.mrb[0].mxu0
        %v631 = vadd.f32 %v507, %v630
        %v632 = vpop.f32.mrb[0].mxu0
        %v633 = vpop.f32.mrb[0].mxu0
        %v634 = vadd.f32 %v507, %v633
        %v635 = vpop.f32.mrb[0].mxu0
        %636 = vmatprep.mubr.bf16.mxu0 0
        %637 = vmatmul.mubr.bf16.gmra.mrb[0].mxu0 %v532
        %v638 = vpop.f32.mrb[0].mxu0
        %v639 = vadd.f32 %v507, %v638
        %v640 = vpop.f32.mrb[0].mxu0
        %v641 = vpop.f32.mrb[0].mxu0
        %v642 = vadd.f32 %v507, %v641
        %v643 = vpop.f32.mrb[0].mxu0
        %644 = vmatprep.mubr.bf16.mxu0 0
        %645 = vmatmul.mubr.bf16.gmra.mrb[0].mxu0 %v535
        %v646 = vpop.f32.mrb[0].mxu0
        %v647 = vadd.f32 %v507, %v646
        %v648 = vpop.f32.mrb[0].mxu0
        %v649 = vpop.f32.mrb[0].mxu0
        %v650 = vadd.f32 %v507, %v649
        %v651 = vpop.f32.mrb[0].mxu0
        %652 = vmatprep.mubr.bf16.mxu0 0
        %653 = vmatmul.mubr.bf16.gmra.mrb[0].mxu0 %v538
        %v654 = vpop.f32.mrb[0].mxu0
        %v655 = vadd.f32 %v507, %v654
        %v656 = vpop.f32.mrb[0].mxu0
        %v657 = vpop.f32.mrb[0].mxu0
        %v658 = vadd.f32 %v507, %v657
        %v659 = vpop.f32.mrb[0].mxu0
        %660 = vmatprep.mubr.bf16.mxu0 0
        %661 = vmatmul.mubr.bf16.gmra.mrb[0].mxu0 %v541
        %v662 = vpop.f32.mrb[0].mxu0
        %v663 = vadd.f32 %v507, %v662
        %v664 = vpop.f32.mrb[0].mxu0
        %v665 = vpop.f32.mrb[0].mxu0
        %v666 = vadd.f32 %v507, %v665
        %v667 = vpop.f32.mrb[0].mxu0
        %668 = vmatprep.mubr.bf16.mxu0 0
        %669 = vmatmul.mubr.bf16.gmra.mrb[0].mxu0 %v544
        %v670 = vpop.f32.mrb[0].mxu0
        %v671 = vadd.f32 %v507, %v670
        %v672 = vpop.f32.mrb[0].mxu0
        %v673 = vpop.f32.mrb[0].mxu0
        %v674 = vadd.f32 %v507, %v673
        %v675 = vpop.f32.mrb[0].mxu0
        %676 = vmatprep.mubr.bf16.mxu0 0
        %677 = vmatmul.mubr.bf16.gmra.mrb[0].mxu0 %v547
        %v678 = vpop.f32.mrb[0].mxu0
        %v679 = vadd.f32 %v507, %v678
        %v680 = vpop.f32.mrb[0].mxu0
        %v681 = vpop.f32.mrb[0].mxu0
        %v682 = vadd.f32 %v507, %v681
        %v683 = vpop.f32.mrb[0].mxu0
        %684 = vmatprep.mubr.bf16.mxu0 0
        %685 = vmatmul.mubr.bf16.gmra.mrb[0].mxu0 %v550
        %v686 = vpop.f32.mrb[0].mxu0
        %v687 = vadd.f32 %v507, %v686
        %v688 = vpop.f32.mrb[0].mxu0
        %v689 = vpop.f32.mrb[0].mxu0
        %v690 = vadd.f32 %v507, %v689
        %v691 = vpop.f32.mrb[0].mxu0
        %692 = vmatprep.mubr.bf16.mxu0 0
        %693 = vmatmul.mubr.bf16.gmra.mrb[0].mxu0 %v553
        %v694 = vpop.f32.mrb[0].mxu0
        %v695 = vadd.f32 %v507, %v694
        %v696 = vpop.f32.mrb[0].mxu0
        %v697 = vpop.f32.mrb[0].mxu0
        %v698 = vadd.f32 %v507, %v697
        %v699 = vpop.f32.mrb[0].mxu0
        %700 = vmatprep.mubr.bf16.mxu0 0
        %701 = vmatmul.mubr.bf16.gmra.mrb[0].mxu0 %v556
        %v702 = vpop.f32.mrb[0].mxu0
        %v703 = vadd.f32 %v507, %v702
        %v704 = vpop.f32.mrb[0].mxu0
        %v705 = vpop.f32.mrb[0].mxu0
        %v706 = vadd.f32 %v507, %v705
        %v707 = vpop.f32.mrb[0].mxu0
        %708 = vmatprep.mubr.bf16.mxu0 0
        %709 = vmatmul.mubr.bf16.gmra.mrb[0].mxu0 %v559
        %v710 = vpop.f32.mrb[0].mxu0
        %v711 = vadd.f32 %v507, %v710
        %v712 = vpop.f32.mrb[0].mxu0
        %v713 = vpop.f32.mrb[0].mxu0
        %v714 = vadd.f32 %v507, %v713
        %v715 = vpop.f32.mrb[0].mxu0
        %716 = vmatprep.mubr.bf16.mxu0 0
        %717 = vmatmul.mubr.bf16.gmra.mrb[0].mxu0 %v562
        %v718 = vpop.f32.mrb[0].mxu0
        %v719 = vadd.f32 %v507, %v718
        %v720 = vpop.f32.mrb[0].mxu0
        %v721 = vpop.f32.mrb[0].mxu0
        %v722 = vadd.f32 %v507, %v721
        %v723 = vpop.f32.mrb[0].mxu0
        %724 = vdwg.mxu0
        %vm725 = vcmp.gt.f32.partialorder %v599, 0.0
        %vm726 = vcmp.gt.f32.partialorder %v602, 0.0
        %vm727 = vcmp.gt.f32.partialorder %v607, 0.0
        %vm728 = vcmp.gt.f32.partialorder %v610, 0.0
        %vm729 = vcmp.gt.f32.partialorder %v615, 0.0
        %vm730 = vcmp.gt.f32.partialorder %v618, 0.0
        %vm731 = vcmp.gt.f32.partialorder %v623, 0.0
        %vm732 = vcmp.gt.f32.partialorder %v626, 0.0
        %vm733 = vcmp.gt.f32.partialorder %v631, 0.0
        %vm734 = vcmp.gt.f32.partialorder %v634, 0.0
        %vm735 = vcmp.gt.f32.partialorder %v639, 0.0
        %vm736 = vcmp.gt.f32.partialorder %v642, 0.0
        %vm737 = vcmp.gt.f32.partialorder %v647, 0.0
        %vm738 = vcmp.gt.f32.partialorder %v650, 0.0
        %vm739 = vcmp.gt.f32.partialorder %v655, 0.0
        %vm740 = vcmp.gt.f32.partialorder %v658, 0.0
        %vm741 = vcmp.gt.f32.partialorder %v663, 0.0
        %vm742 = vcmp.gt.f32.partialorder %v666, 0.0
        %vm743 = vcmp.gt.f32.partialorder %v671, 0.0
        %vm744 = vcmp.gt.f32.partialorder %v674, 0.0
        %vm745 = vcmp.gt.f32.partialorder %v679, 0.0
        %vm746 = vcmp.gt.f32.partialorder %v682, 0.0
        %vm747 = vcmp.gt.f32.partialorder %v687, 0.0
        %vm748 = vcmp.gt.f32.partialorder %v690, 0.0
        %vm749 = vcmp.gt.f32.partialorder %v695, 0.0
        %vm750 = vcmp.gt.f32.partialorder %v698, 0.0
        %vm751 = vcmp.gt.f32.partialorder %v703, 0.0
        %vm752 = vcmp.gt.f32.partialorder %v706, 0.0
        %vm753 = vcmp.gt.f32.partialorder %v711, 0.0
        %vm754 = vcmp.gt.f32.partialorder %v714, 0.0
        %vm755 = vcmp.gt.f32.partialorder %v719, 0.0
        %vm756 = vcmp.gt.f32.partialorder %v722, 0.0
        %v757 = vmul.f32 %v599, 0.01
        %v758 = vmul.f32 %v602, 0.01
        %v759 = vmul.f32 %v607, 0.01
        %v760 = vmul.f32 %v610, 0.01
        %v761 = vmul.f32 %v615, 0.01
        %v762 = vmul.f32 %v618, 0.01
        %v763 = vmul.f32 %v623, 0.01
        %v764 = vmul.f32 %v626, 0.01
        %v765 = vmul.f32 %v631, 0.01
        %v766 = vmul.f32 %v634, 0.01
        %v767 = vmul.f32 %v639, 0.01
        %v768 = vmul.f32 %v642, 0.01
        %v769 = vmul.f32 %v647, 0.01
        %v770 = vmul.f32 %v650, 0.01
        %v771 = vmul.f32 %v655, 0.01
        %v772 = vmul.f32 %v658, 0.01
        %v773 = vmul.f32 %v663, 0.01
        %v774 = vmul.f32 %v666, 0.01
        %v775 = vmul.f32 %v671, 0.01
        %v776 = vmul.f32 %v674, 0.01
        %v777 = vmul.f32 %v679, 0.01
        %v778 = vmul.f32 %v682, 0.01
        %v779 = vmul.f32 %v687, 0.01
        %v780 = vmul.f32 %v690, 0.01
        %v781 = vmul.f32 %v695, 0.01
        %v782 = vmul.f32 %v698, 0.01
        %v783 = vmul.f32 %v703, 0.01
        %v784 = vmul.f32 %v706, 0.01
        %v785 = vmul.f32 %v711, 0.01
        %v786 = vmul.f32 %v714, 0.01
        %v787 = vmul.f32 %v719, 0.01
        %v788 = vmul.f32 %v722, 0.01
        %v789 = vsel %vm725, %v599, %v757
        %v790 = vsel %vm726, %v602, %v758
        %v791 = vsel %vm727, %v607, %v759
        %v792 = vsel %vm728, %v610, %v760
        %v793 = vsel %vm729, %v615, %v761
        %v794 = vsel %vm730, %v618, %v762
        %v795 = vsel %vm731, %v623, %v763
        %v796 = vsel %vm732, %v626, %v764
        %v797 = vsel %vm733, %v631, %v765
        %v798 = vsel %vm734, %v634, %v766
        %v799 = vsel %vm735, %v639, %v767
        %v800 = vsel %vm736, %v642, %v768
        %v801 = vsel %vm737, %v647, %v769
        %v802 = vsel %vm738, %v650, %v770
        %v803 = vsel %vm739, %v655, %v771
        %v804 = vsel %vm740, %v658, %v772
        %v805 = vsel %vm741, %v663, %v773
        %v806 = vsel %vm742, %v666, %v774
        %v807 = vsel %vm743, %v671, %v775
        %v808 = vsel %vm744, %v674, %v776
        %v809 = vsel %vm745, %v679, %v777
        %v810 = vsel %vm746, %v682, %v778
        %v811 = vsel %vm747, %v687, %v779
        %v812 = vsel %vm748, %v690, %v780
        %v813 = vsel %vm749, %v695, %v781
        %v814 = vsel %vm750, %v698, %v782
        %v815 = vsel %vm751, %v703, %v783
        %v816 = vsel %vm752, %v706, %v784
        %v817 = vsel %vm753, %v711, %v785
        %v818 = vsel %vm754, %v714, %v786
        %v819 = vsel %vm755, %v719, %v787
        %v820 = vsel %vm756, %v722, %v788
        %v821 = vpack.c.bf16 %v790, %v789
        %v822 = vpack.c.bf16 %v792, %v791
        %v823 = vpack.c.bf16 %v794, %v793
        %v824 = vpack.c.bf16 %v796, %v795
        %v825 = vpack.c.bf16 %v798, %v797
        %v826 = vpack.c.bf16 %v800, %v799
        %v827 = vpack.c.bf16 %v802, %v801
        %v828 = vpack.c.bf16 %v804, %v803
        %v829 = vpack.c.bf16 %v806, %v805
        %v830 = vpack.c.bf16 %v808, %v807
        %v831 = vpack.c.bf16 %v810, %v809
        %v832 = vpack.c.bf16 %v812, %v811
        %v833 = vpack.c.bf16 %v814, %v813
        %v834 = vpack.c.bf16 %v816, %v815
        %v835 = vpack.c.bf16 %v818, %v817
        %v836 = vpack.c.bf16 %v820, %v819
        %v837 = vld [vmem:[#allocation7] sm:$0xf]
        %v838 = vld [vmem:[#allocation7 + $0x4] sm:$0xf]
        %v839 = vld [vmem:[#allocation7 + $0x8] sm:$0xf]
        %v840 = vld [vmem:[#allocation7 + $0xc] sm:$0xf]
        %v841 = vld [vmem:[#allocation7 + $0x10] sm:$0xf]
        %v842 = vld [vmem:[#allocation7 + $0x14] sm:$0xf]
        %v843 = vld [vmem:[#allocation7 + $0x18] sm:$0xf]
        %v844 = vld [vmem:[#allocation7 + $0x1c] sm:$0xf]
        %v845 = vld [vmem:[%s4] sm:$0x1]
        %v847 = vlaneseq
        %v848 = vshrl.u32 %v847, 7
        %v849 = vsub.s32 0, %v848
        %v850 = vrot.slane %v845, %v849
        %v860 = vunpack.c.l.b16 %v837
        %v861 = vunpack.c.l.b16 %v838
        %v862 = vunpack.c.l.b16 %v839
        %v863 = vunpack.c.l.b16 %v840
        %v864 = vunpack.c.l.b16 %v841
        %v865 = vunpack.c.l.b16 %v842
        %v866 = vunpack.c.l.b16 %v843
        %v867 = vunpack.c.l.b16 %v844
        %v868 = vpack.c.b16 %v861, %v860
        %v869 = vpack.c.b16 %v863, %v862
        %v870 = vpack.c.b16 %v865, %v864
        %v871 = vpack.c.b16 %v867, %v866
        %vm876 = vcmask 523264
        %v878 = vsel %vm876, %v821, 0
        %v881 = vsel %vm876, %v822, 0
        %v884 = vsel %vm876, %v823, 0
        %v887 = vsel %vm876, %v824, 0
        %v890 = vsel %vm876, %v825, 0
        %v893 = vsel %vm876, %v826, 0
        %v896 = vsel %vm876, %v827, 0
        %v899 = vsel %vm876, %v828, 0
        %v902 = vsel %vm876, %v829, 0
        %v905 = vsel %vm876, %v830, 0
        %v908 = vsel %vm876, %v831, 0
        %v911 = vsel %vm876, %v832, 0
        %v914 = vsel %vm876, %v833, 0
        %v917 = vsel %vm876, %v834, 0
        %v920 = vsel %vm876, %v835, 0
        %v923 = vsel %vm876, %v836, 0
        %925 = vmatprep.subr.bf16.mxu0 0
        %926 = vmatpush1.bf16.msra.mxu0 %v868
        %927 = vmatprep.subr.bf16.mxu0 0
        %928 = vmatpush1.bf16.msra.mxu0 %v869
        %929 = vmatprep.subr.bf16.mxu0 0
        %930 = vmatpush1.bf16.msra.mxu0 %v870
        %931 = vmatprep.subr.bf16.mxu0 0
        %932 = vmatpush1.bf16.msra.mxu0 %v871
        %933 = vmatprep.subr.bf16.mxu0 0
        %934 = vmatpush1.bf16.msra.mxu0 0
        %935 = vmatprep.subr.bf16.mxu0 0
        %936 = vmatpush1.bf16.msra.mxu0 0
        %937 = vmatprep.subr.bf16.mxu0 0
        %938 = vmatpush1.bf16.msra.mxu0 0
        %939 = vmatprep.subr.bf16.mxu0 0
        %940 = vmatpush1.bf16.msra.mxu0 0
        %941 = vmatprep.subr.bf16.mxu0 0
        %942 = vmatpush1.bf16.msra.mxu0 0
        %943 = vmatprep.subr.bf16.mxu0 0
        %944 = vmatpush1.bf16.msra.mxu0 0
        %945 = vmatprep.subr.bf16.mxu0 0
        %946 = vmatpush1.bf16.msra.mxu0 0
        %947 = vmatprep.subr.bf16.mxu0 0
        %948 = vmatpush1.bf16.msra.mxu0 0
        %949 = vmatprep.subr.bf16.mxu0 0
        %950 = vmatpush1.bf16.msra.mxu0 0
        %951 = vmatprep.subr.bf16.mxu0 0
        %952 = vmatpush1.bf16.msra.mxu0 0
        %953 = vmatprep.subr.bf16.mxu0 0
        %954 = vmatpush1.bf16.msra.mxu0 0
        %955 = vmatprep.subr.bf16.mxu0 0
        %956 = vmatpush1.bf16.msra.mxu0 0
        %957 = vmatprep.mubr.bf16.mxu0 0
        %958 = vmatmul.mubr.bf16.gmra.mrb[0].mxu0 %v878
        %v959 = vpop.f32.mrb[0].mxu0
        %v960 = vadd.f32 %v850, %v959
        %v961 = vpop.f32.mrb[0].mxu0
        %v962 = vpop.f32.mrb[0].mxu0
        %v963 = vadd.f32 %v850, %v962
        %v964 = vpop.f32.mrb[0].mxu0
        %965 = vmatprep.mubr.bf16.mxu0 0
        %966 = vmatmul.mubr.bf16.gmra.mrb[0].mxu0 %v881
        %v967 = vpop.f32.mrb[0].mxu0
        %v968 = vadd.f32 %v850, %v967
        %v969 = vpop.f32.mrb[0].mxu0
        %v970 = vpop.f32.mrb[0].mxu0
        %v971 = vadd.f32 %v850, %v970
        %v972 = vpop.f32.mrb[0].mxu0
        %973 = vmatprep.mubr.bf16.mxu0 0
        %974 = vmatmul.mubr.bf16.gmra.mrb[0].mxu0 %v884
        %v975 = vpop.f32.mrb[0].mxu0
        %v976 = vadd.f32 %v850, %v975
        %v977 = vpop.f32.mrb[0].mxu0
        %v978 = vpop.f32.mrb[0].mxu0
        %v979 = vadd.f32 %v850, %v978
        %v980 = vpop.f32.mrb[0].mxu0
        %981 = vmatprep.mubr.bf16.mxu0 0
        %982 = vmatmul.mubr.bf16.gmra.mrb[0].mxu0 %v887
        %v983 = vpop.f32.mrb[0].mxu0
        %v984 = vadd.f32 %v850, %v983
        %v985 = vpop.f32.mrb[0].mxu0
        %v986 = vpop.f32.mrb[0].mxu0
        %v987 = vadd.f32 %v850, %v986
        %v988 = vpop.f32.mrb[0].mxu0
        %989 = vmatprep.mubr.bf16.mxu0 0
        %990 = vmatmul.mubr.bf16.gmra.mrb[0].mxu0 %v890
        %v991 = vpop.f32.mrb[0].mxu0
        %v992 = vadd.f32 %v850, %v991
        %v993 = vpop.f32.mrb[0].mxu0
        %v994 = vpop.f32.mrb[0].mxu0
        %v995 = vadd.f32 %v850, %v994
        %v996 = vpop.f32.mrb[0].mxu0
        %997 = vmatprep.mubr.bf16.mxu0 0
        %998 = vmatmul.mubr.bf16.gmra.mrb[0].mxu0 %v893
        %v999 = vpop.f32.mrb[0].mxu0
        %v1000 = vadd.f32 %v850, %v999
        %v1001 = vpop.f32.mrb[0].mxu0
        %v1002 = vpop.f32.mrb[0].mxu0
        %v1003 = vadd.f32 %v850, %v1002
        %v1004 = vpop.f32.mrb[0].mxu0
        %1005 = vmatprep.mubr.bf16.mxu0 0
        %1006 = vmatmul.mubr.bf16.gmra.mrb[0].mxu0 %v896
        %v1007 = vpop.f32.mrb[0].mxu0
        %v1008 = vadd.f32 %v850, %v1007
        %v1009 = vpop.f32.mrb[0].mxu0
        %v1010 = vpop.f32.mrb[0].mxu0
        %v1011 = vadd.f32 %v850, %v1010
        %v1012 = vpop.f32.mrb[0].mxu0
        %1013 = vmatprep.mubr.bf16.mxu0 0
        %1014 = vmatmul.mubr.bf16.gmra.mrb[0].mxu0 %v899
        %v1015 = vpop.f32.mrb[0].mxu0
        %v1016 = vadd.f32 %v850, %v1015
        %v1017 = vpop.f32.mrb[0].mxu0
        %v1018 = vpop.f32.mrb[0].mxu0
        %v1019 = vadd.f32 %v850, %v1018
        %v1020 = vpop.f32.mrb[0].mxu0
        %1021 = vmatprep.mubr.bf16.mxu0 0
        %1022 = vmatmul.mubr.bf16.gmra.mrb[0].mxu0 %v902
        %v1023 = vpop.f32.mrb[0].mxu0
        %v1024 = vadd.f32 %v850, %v1023
        %v1025 = vpop.f32.mrb[0].mxu0
        %v1026 = vpop.f32.mrb[0].mxu0
        %v1027 = vadd.f32 %v850, %v1026
        %v1028 = vpop.f32.mrb[0].mxu0
        %1029 = vmatprep.mubr.bf16.mxu0 0
        %1030 = vmatmul.mubr.bf16.gmra.mrb[0].mxu0 %v905
        %v1031 = vpop.f32.mrb[0].mxu0
        %v1032 = vadd.f32 %v850, %v1031
        %v1033 = vpop.f32.mrb[0].mxu0
        %v1034 = vpop.f32.mrb[0].mxu0
        %v1035 = vadd.f32 %v850, %v1034
        %v1036 = vpop.f32.mrb[0].mxu0
        %1037 = vmatprep.mubr.bf16.mxu0 0
        %1038 = vmatmul.mubr.bf16.gmra.mrb[0].mxu0 %v908
        %v1039 = vpop.f32.mrb[0].mxu0
        %v1040 = vadd.f32 %v850, %v1039
        %v1041 = vpop.f32.mrb[0].mxu0
        %v1042 = vpop.f32.mrb[0].mxu0
        %v1043 = vadd.f32 %v850, %v1042
        %v1044 = vpop.f32.mrb[0].mxu0
        %1045 = vmatprep.mubr.bf16.mxu0 0
        %1046 = vmatmul.mubr.bf16.gmra.mrb[0].mxu0 %v911
        %v1047 = vpop.f32.mrb[0].mxu0
        %v1048 = vadd.f32 %v850, %v1047
        %v1049 = vpop.f32.mrb[0].mxu0
        %v1050 = vpop.f32.mrb[0].mxu0
        %v1051 = vadd.f32 %v850, %v1050
        %v1052 = vpop.f32.mrb[0].mxu0
        %1053 = vmatprep.mubr.bf16.mxu0 0
        %1054 = vmatmul.mubr.bf16.gmra.mrb[0].mxu0 %v914
        %v1055 = vpop.f32.mrb[0].mxu0
        %v1056 = vadd.f32 %v850, %v1055
        %v1057 = vpop.f32.mrb[0].mxu0
        %v1058 = vpop.f32.mrb[0].mxu0
        %v1059 = vadd.f32 %v850, %v1058
        %v1060 = vpop.f32.mrb[0].mxu0
        %1061 = vmatprep.mubr.bf16.mxu0 0
        %1062 = vmatmul.mubr.bf16.gmra.mrb[0].mxu0 %v917
        %v1063 = vpop.f32.mrb[0].mxu0
        %v1064 = vadd.f32 %v850, %v1063
        %v1065 = vpop.f32.mrb[0].mxu0
        %v1066 = vpop.f32.mrb[0].mxu0
        %v1067 = vadd.f32 %v850, %v1066
        %v1068 = vpop.f32.mrb[0].mxu0
        %1069 = vmatprep.mubr.bf16.mxu0 0
        %1070 = vmatmul.mubr.bf16.gmra.mrb[0].mxu0 %v920
        %v1071 = vpop.f32.mrb[0].mxu0
        %v1072 = vadd.f32 %v850, %v1071
        %v1073 = vpop.f32.mrb[0].mxu0
        %v1074 = vpop.f32.mrb[0].mxu0
        %v1075 = vadd.f32 %v850, %v1074
        %v1076 = vpop.f32.mrb[0].mxu0
        %1077 = vmatprep.mubr.bf16.mxu0 0
        %1078 = vmatmul.mubr.bf16.gmra.mrb[0].mxu0 %v923
        %v1079 = vpop.f32.mrb[0].mxu0
        %v1080 = vadd.f32 %v850, %v1079
        %v1081 = vpop.f32.mrb[0].mxu0
        %v1082 = vpop.f32.mrb[0].mxu0
        %v1083 = vadd.f32 %v850, %v1082
        %v1084 = vpop.f32.mrb[0].mxu0
        %1085 = vdwg.mxu0
        %vm1086 = vcmp.gt.f32.partialorder %v960, 0.0
        %vm1087 = vcmp.gt.f32.partialorder %v963, 0.0
        %vm1088 = vcmp.gt.f32.partialorder %v968, 0.0
        %vm1089 = vcmp.gt.f32.partialorder %v971, 0.0
        %vm1090 = vcmp.gt.f32.partialorder %v976, 0.0
        %vm1091 = vcmp.gt.f32.partialorder %v979, 0.0
        %vm1092 = vcmp.gt.f32.partialorder %v984, 0.0
        %vm1093 = vcmp.gt.f32.partialorder %v987, 0.0
        %vm1094 = vcmp.gt.f32.partialorder %v992, 0.0
        %vm1095 = vcmp.gt.f32.partialorder %v995, 0.0
        %vm1096 = vcmp.gt.f32.partialorder %v1000, 0.0
        %vm1097 = vcmp.gt.f32.partialorder %v1003, 0.0
        %vm1098 = vcmp.gt.f32.partialorder %v1008, 0.0
        %vm1099 = vcmp.gt.f32.partialorder %v1011, 0.0
        %vm1100 = vcmp.gt.f32.partialorder %v1016, 0.0
        %vm1101 = vcmp.gt.f32.partialorder %v1019, 0.0
        %vm1102 = vcmp.gt.f32.partialorder %v1024, 0.0
        %vm1103 = vcmp.gt.f32.partialorder %v1027, 0.0
        %vm1104 = vcmp.gt.f32.partialorder %v1032, 0.0
        %vm1105 = vcmp.gt.f32.partialorder %v1035, 0.0
        %vm1106 = vcmp.gt.f32.partialorder %v1040, 0.0
        %vm1107 = vcmp.gt.f32.partialorder %v1043, 0.0
        %vm1108 = vcmp.gt.f32.partialorder %v1048, 0.0
        %vm1109 = vcmp.gt.f32.partialorder %v1051, 0.0
        %vm1110 = vcmp.gt.f32.partialorder %v1056, 0.0
        %vm1111 = vcmp.gt.f32.partialorder %v1059, 0.0
        %vm1112 = vcmp.gt.f32.partialorder %v1064, 0.0
        %vm1113 = vcmp.gt.f32.partialorder %v1067, 0.0
        %vm1114 = vcmp.gt.f32.partialorder %v1072, 0.0
        %vm1115 = vcmp.gt.f32.partialorder %v1075, 0.0
        %vm1116 = vcmp.gt.f32.partialorder %v1080, 0.0
        %vm1117 = vcmp.gt.f32.partialorder %v1083, 0.0
        %v1118 = vmul.f32 %v960, 0.01
        %v1119 = vmul.f32 %v963, 0.01
        %v1120 = vmul.f32 %v968, 0.01
        %v1121 = vmul.f32 %v971, 0.01
        %v1122 = vmul.f32 %v976, 0.01
        %v1123 = vmul.f32 %v979, 0.01
        %v1124 = vmul.f32 %v984, 0.01
        %v1125 = vmul.f32 %v987, 0.01
        %v1126 = vmul.f32 %v992, 0.01
        %v1127 = vmul.f32 %v995, 0.01
        %v1128 = vmul.f32 %v1000, 0.01
        %v1129 = vmul.f32 %v1003, 0.01
        %v1130 = vmul.f32 %v1008, 0.01
        %v1131 = vmul.f32 %v1011, 0.01
        %v1132 = vmul.f32 %v1016, 0.01
        %v1133 = vmul.f32 %v1019, 0.01
        %v1134 = vmul.f32 %v1024, 0.01
        %v1135 = vmul.f32 %v1027, 0.01
        %v1136 = vmul.f32 %v1032, 0.01
        %v1137 = vmul.f32 %v1035, 0.01
        %v1138 = vmul.f32 %v1040, 0.01
        %v1139 = vmul.f32 %v1043, 0.01
        %v1140 = vmul.f32 %v1048, 0.01
        %v1141 = vmul.f32 %v1051, 0.01
        %v1142 = vmul.f32 %v1056, 0.01
        %v1143 = vmul.f32 %v1059, 0.01
        %v1144 = vmul.f32 %v1064, 0.01
        %v1145 = vmul.f32 %v1067, 0.01
        %v1146 = vmul.f32 %v1072, 0.01
        %v1147 = vmul.f32 %v1075, 0.01
        %v1148 = vmul.f32 %v1080, 0.01
        %v1149 = vmul.f32 %v1083, 0.01
        %v1150 = vsel %vm1086, %v960, %v1118
        %v1151 = vsel %vm1087, %v963, %v1119
        %v1152 = vsel %vm1088, %v968, %v1120
        %v1153 = vsel %vm1089, %v971, %v1121
        %v1154 = vsel %vm1090, %v976, %v1122
        %v1155 = vsel %vm1091, %v979, %v1123
        %v1156 = vsel %vm1092, %v984, %v1124
        %v1157 = vsel %vm1093, %v987, %v1125
        %v1158 = vsel %vm1094, %v992, %v1126
        %v1159 = vsel %vm1095, %v995, %v1127
        %v1160 = vsel %vm1096, %v1000, %v1128
        %v1161 = vsel %vm1097, %v1003, %v1129
        %v1162 = vsel %vm1098, %v1008, %v1130
        %v1163 = vsel %vm1099, %v1011, %v1131
        %v1164 = vsel %vm1100, %v1016, %v1132
        %v1165 = vsel %vm1101, %v1019, %v1133
        %v1166 = vsel %vm1102, %v1024, %v1134
        %v1167 = vsel %vm1103, %v1027, %v1135
        %v1168 = vsel %vm1104, %v1032, %v1136
        %v1169 = vsel %vm1105, %v1035, %v1137
        %v1170 = vsel %vm1106, %v1040, %v1138
        %v1171 = vsel %vm1107, %v1043, %v1139
        %v1172 = vsel %vm1108, %v1048, %v1140
        %v1173 = vsel %vm1109, %v1051, %v1141
        %v1174 = vsel %vm1110, %v1056, %v1142
        %v1175 = vsel %vm1111, %v1059, %v1143
        %v1176 = vsel %vm1112, %v1064, %v1144
        %v1177 = vsel %vm1113, %v1067, %v1145
        %v1178 = vsel %vm1114, %v1072, %v1146
        %v1179 = vsel %vm1115, %v1075, %v1147
        %v1180 = vsel %vm1116, %v1080, %v1148
        %v1181 = vsel %vm1117, %v1083, %v1149
        %v1182 = vpack.c.bf16 %v1151, %v1150
        %v1183 = vpack.c.bf16 %v1153, %v1152
        %v1184 = vpack.c.bf16 %v1155, %v1154
        %v1185 = vpack.c.bf16 %v1157, %v1156
        %v1186 = vpack.c.bf16 %v1159, %v1158
        %v1187 = vpack.c.bf16 %v1161, %v1160
        %v1188 = vpack.c.bf16 %v1163, %v1162
        %v1189 = vpack.c.bf16 %v1165, %v1164
        %v1190 = vpack.c.bf16 %v1167, %v1166
        %v1191 = vpack.c.bf16 %v1169, %v1168
        %v1192 = vpack.c.bf16 %v1171, %v1170
        %v1193 = vpack.c.bf16 %v1173, %v1172
        %v1194 = vpack.c.bf16 %v1175, %v1174
        %v1195 = vpack.c.bf16 %v1177, %v1176
        %v1196 = vpack.c.bf16 %v1179, %v1178
        %v1197 = vpack.c.bf16 %v1181, %v1180
        %v1198 = vld [vmem:[#allocation8] sm:$0xff]
        %v1199 = vld [vmem:[#allocation8 + $0x8] sm:$0xff]
        %v1200 = vld [vmem:[#allocation8 + $0x10] sm:$0xff]
        %v1201 = vld [vmem:[#allocation8 + $0x18] sm:$0xff]
        %v1202 = vld [vmem:[#allocation8 + $0x20] sm:$0xff]
        %v1203 = vld [vmem:[#allocation8 + $0x28] sm:$0xff]
        %v1204 = vld [vmem:[#allocation8 + $0x30] sm:$0xff]
        %v1205 = vld [vmem:[#allocation8 + $0x38] sm:$0xff]
        %v1206 = vld [vmem:[#allocation8 + $0x40] sm:$0xff]
        %v1207 = vld [vmem:[#allocation8 + $0x48] sm:$0xff]
        %v1208 = vld [vmem:[#allocation8 + $0x50] sm:$0xff]
        %v1209 = vld [vmem:[#allocation8 + $0x58] sm:$0xff]
        %v1210 = vld [vmem:[#allocation8 + $0x60] sm:$0xff]
        %v1211 = vld [vmem:[#allocation8 + $0x68] sm:$0xff]
        %v1212 = vld [vmem:[#allocation8 + $0x70] sm:$0xff]
        %v1213 = vld [vmem:[#allocation8 + $0x78] sm:$0xff]
        %v1214 = vld [vmem:[#allocation8 + $0x80] sm:$0xff]
        %v1215 = vld [vmem:[#allocation8 + $0x88] sm:$0xff]
        %v1216 = vld [vmem:[#allocation8 + $0x90] sm:$0xff]
        %v1217 = vld [vmem:[#allocation8 + $0x98] sm:$0xff]
        %v1218 = vld [vmem:[#allocation8 + $0xa0] sm:$0xff]
        %v1219 = vld [vmem:[#allocation8 + $0xa8] sm:$0xff]
        %v1220 = vld [vmem:[#allocation8 + $0xb0] sm:$0xff]
        %v1221 = vld [vmem:[#allocation8 + $0xb8] sm:$0xff]
        %v1222 = vld [vmem:[#allocation8 + $0xc0] sm:$0xff]
        %v1223 = vld [vmem:[#allocation8 + $0xc8] sm:$0xff]
        %v1224 = vld [vmem:[#allocation8 + $0xd0] sm:$0xff]
        %v1225 = vld [vmem:[#allocation8 + $0xd8] sm:$0xff]
        %v1226 = vld [vmem:[#allocation8 + $0xe0] sm:$0xff]
        %v1227 = vld [vmem:[#allocation8 + $0xe8] sm:$0xff]
        %v1228 = vld [vmem:[#allocation8 + $0xf0] sm:$0xff]
        %v1229 = vld [vmem:[#allocation8 + $0xf8] sm:$0xff]
        %v1230 = vld [vmem:[#allocation8 + $0x100] sm:$0xff]
        %v1231 = vld [vmem:[#allocation8 + $0x108] sm:$0xff]
        %v1232 = vld [vmem:[#allocation8 + $0x110] sm:$0xff]
        %v1233 = vld [vmem:[#allocation8 + $0x118] sm:$0xff]
        %v1234 = vld [vmem:[#allocation8 + $0x120] sm:$0xff]
        %v1235 = vld [vmem:[#allocation8 + $0x128] sm:$0xff]
        %v1236 = vld [vmem:[#allocation8 + $0x130] sm:$0xff]
        %v1237 = vld [vmem:[#allocation8 + $0x138] sm:$0xff]
        %v1238 = vld [vmem:[#allocation8 + $0x140] sm:$0xff]
        %v1239 = vld [vmem:[#allocation8 + $0x148] sm:$0xff]
        %v1240 = vld [vmem:[#allocation8 + $0x150] sm:$0xff]
        %v1241 = vld [vmem:[#allocation8 + $0x158] sm:$0xff]
        %v1242 = vld [vmem:[#allocation8 + $0x160] sm:$0xff]
        %v1243 = vld [vmem:[#allocation8 + $0x168] sm:$0xff]
        %v1244 = vld [vmem:[#allocation8 + $0x170] sm:$0xff]
        %v1245 = vld [vmem:[#allocation8 + $0x178] sm:$0xff]
        %v1246 = vld [vmem:[#allocation8 + $0x180] sm:$0xff]
        %v1247 = vld [vmem:[#allocation8 + $0x188] sm:$0xff]
        %v1248 = vld [vmem:[#allocation8 + $0x190] sm:$0xff]
        %v1249 = vld [vmem:[#allocation8 + $0x198] sm:$0xff]
        %v1250 = vld [vmem:[#allocation8 + $0x1a0] sm:$0xff]
        %v1251 = vld [vmem:[#allocation8 + $0x1a8] sm:$0xff]
        %v1252 = vld [vmem:[#allocation8 + $0x1b0] sm:$0xff]
        %v1253 = vld [vmem:[#allocation8 + $0x1b8] sm:$0xff]
        %v1254 = vld [vmem:[#allocation8 + $0x1c0] sm:$0xff]
        %v1255 = vld [vmem:[#allocation8 + $0x1c8] sm:$0xff]
        %v1256 = vld [vmem:[#allocation8 + $0x1d0] sm:$0xff]
        %v1257 = vld [vmem:[#allocation8 + $0x1d8] sm:$0xff]
        %v1258 = vld [vmem:[#allocation8 + $0x1e0] sm:$0xff]
        %v1259 = vld [vmem:[#allocation8 + $0x1e8] sm:$0xff]
        %v1260 = vld [vmem:[#allocation8 + $0x1f0] sm:$0xff]
        %v1261 = vld [vmem:[#allocation8 + $0x1f8] sm:$0xff]
        %v1262 = vld [vmem:[%s6] sm:$0xff]
        %v1264 = vlaneseq
        %v1265 = vshrl.u32 %v1264, 7
        %v1266 = vsub.s32 0, %v1265
        %v1267 = vrot.slane %v1262, %v1266
        %v1268 = vlaneseq
        %v1269 = vshrl.u32 %v1268, 7
        %v1270 = vsub.s32 1, %v1269
        %v1271 = vrot.slane %v1262, %v1270
        %v1272 = vlaneseq
        %v1273 = vshrl.u32 %v1272, 7
        %v1274 = vsub.s32 2, %v1273
        %v1275 = vrot.slane %v1262, %v1274
        %v1276 = vlaneseq
        %v1277 = vshrl.u32 %v1276, 7
        %v1278 = vsub.s32 3, %v1277
        %v1279 = vrot.slane %v1262, %v1278
        %v1280 = vlaneseq
        %v1281 = vshrl.u32 %v1280, 7
        %v1282 = vsub.s32 4, %v1281
        %v1283 = vrot.slane %v1262, %v1282
        %v1284 = vlaneseq
        %v1285 = vshrl.u32 %v1284, 7
        %v1286 = vsub.s32 5, %v1285
        %v1287 = vrot.slane %v1262, %v1286
        %v1288 = vlaneseq
        %v1289 = vshrl.u32 %v1288, 7
        %v1290 = vsub.s32 6, %v1289
        %v1291 = vrot.slane %v1262, %v1290
        %v1292 = vlaneseq
        %v1293 = vshrl.u32 %v1292, 7
        %v1294 = vsub.s32 7, %v1293
        %v1295 = vrot.slane %v1262, %v1294
        %v1368 = vunpack.c.l.b16 %v1198
        %v1369 = vunpack.c.h.b16 %v1198
        %v1370 = vunpack.c.l.b16 %v1199
        %v1371 = vunpack.c.h.b16 %v1199
        %v1372 = vunpack.c.l.b16 %v1200
        %v1373 = vunpack.c.h.b16 %v1200
        %v1374 = vunpack.c.l.b16 %v1201
        %v1375 = vunpack.c.h.b16 %v1201
        %v1376 = vunpack.c.l.b16 %v1202
        %v1377 = vunpack.c.h.b16 %v1202
        %v1378 = vunpack.c.l.b16 %v1203
        %v1379 = vunpack.c.h.b16 %v1203
        %v1380 = vunpack.c.l.b16 %v1204
        %v1381 = vunpack.c.h.b16 %v1204
        %v1382 = vunpack.c.l.b16 %v1205
        %v1383 = vunpack.c.h.b16 %v1205
        %v1384 = vunpack.c.l.b16 %v1206
        %v1385 = vunpack.c.h.b16 %v1206
        %v1386 = vunpack.c.l.b16 %v1207
        %v1387 = vunpack.c.h.b16 %v1207
        %v1388 = vunpack.c.l.b16 %v1208
        %v1389 = vunpack.c.h.b16 %v1208
        %v1390 = vunpack.c.l.b16 %v1209
        %v1391 = vunpack.c.h.b16 %v1209
        %v1392 = vunpack.c.l.b16 %v1210
        %v1393 = vunpack.c.h.b16 %v1210
        %v1394 = vunpack.c.l.b16 %v1211
        %v1395 = vunpack.c.h.b16 %v1211
        %v1396 = vunpack.c.l.b16 %v1212
        %v1397 = vunpack.c.h.b16 %v1212
        %v1398 = vunpack.c.l.b16 %v1213
        %v1399 = vunpack.c.h.b16 %v1213
        %v1400 = vunpack.c.l.b16 %v1214
        %v1401 = vunpack.c.h.b16 %v1214
        %v1402 = vunpack.c.l.b16 %v1215
        %v1403 = vunpack.c.h.b16 %v1215
        %v1404 = vunpack.c.l.b16 %v1216
        %v1405 = vunpack.c.h.b16 %v1216
        %v1406 = vunpack.c.l.b16 %v1217
        %v1407 = vunpack.c.h.b16 %v1217
        %v1408 = vunpack.c.l.b16 %v1218
        %v1409 = vunpack.c.h.b16 %v1218
        %v1410 = vunpack.c.l.b16 %v1219
        %v1411 = vunpack.c.h.b16 %v1219
        %v1412 = vunpack.c.l.b16 %v1220
        %v1413 = vunpack.c.h.b16 %v1220
        %v1414 = vunpack.c.l.b16 %v1221
        %v1415 = vunpack.c.h.b16 %v1221
        %v1416 = vunpack.c.l.b16 %v1222
        %v1417 = vunpack.c.h.b16 %v1222
        %v1418 = vunpack.c.l.b16 %v1223
        %v1419 = vunpack.c.h.b16 %v1223
        %v1420 = vunpack.c.l.b16 %v1224
        %v1421 = vunpack.c.h.b16 %v1224
        %v1422 = vunpack.c.l.b16 %v1225
        %v1423 = vunpack.c.h.b16 %v1225
        %v1424 = vunpack.c.l.b16 %v1226
        %v1425 = vunpack.c.h.b16 %v1226
        %v1426 = vunpack.c.l.b16 %v1227
        %v1427 = vunpack.c.h.b16 %v1227
        %v1428 = vunpack.c.l.b16 %v1228
        %v1429 = vunpack.c.h.b16 %v1228
        %v1430 = vunpack.c.l.b16 %v1229
        %v1431 = vunpack.c.h.b16 %v1229
        %v1432 = vunpack.c.l.b16 %v1230
        %v1433 = vunpack.c.h.b16 %v1230
        %v1434 = vunpack.c.l.b16 %v1231
        %v1435 = vunpack.c.h.b16 %v1231
        %v1436 = vunpack.c.l.b16 %v1232
        %v1437 = vunpack.c.h.b16 %v1232
        %v1438 = vunpack.c.l.b16 %v1233
        %v1439 = vunpack.c.h.b16 %v1233
        %v1440 = vunpack.c.l.b16 %v1234
        %v1441 = vunpack.c.h.b16 %v1234
        %v1442 = vunpack.c.l.b16 %v1235
        %v1443 = vunpack.c.h.b16 %v1235
        %v1444 = vunpack.c.l.b16 %v1236
        %v1445 = vunpack.c.h.b16 %v1236
        %v1446 = vunpack.c.l.b16 %v1237
        %v1447 = vunpack.c.h.b16 %v1237
        %v1448 = vunpack.c.l.b16 %v1238
        %v1449 = vunpack.c.h.b16 %v1238
        %v1450 = vunpack.c.l.b16 %v1239
        %v1451 = vunpack.c.h.b16 %v1239
        %v1452 = vunpack.c.l.b16 %v1240
        %v1453 = vunpack.c.h.b16 %v1240
        %v1454 = vunpack.c.l.b16 %v1241
        %v1455 = vunpack.c.h.b16 %v1241
        %v1456 = vunpack.c.l.b16 %v1242
        %v1457 = vunpack.c.h.b16 %v1242
        %v1458 = vunpack.c.l.b16 %v1243
        %v1459 = vunpack.c.h.b16 %v1243
        %v1460 = vunpack.c.l.b16 %v1244
        %v1461 = vunpack.c.h.b16 %v1244
        %v1462 = vunpack.c.l.b16 %v1245
        %v1463 = vunpack.c.h.b16 %v1245
        %v1464 = vunpack.c.l.b16 %v1246
        %v1465 = vunpack.c.h.b16 %v1246
        %v1466 = vunpack.c.l.b16 %v1247
        %v1467 = vunpack.c.h.b16 %v1247
        %v1468 = vunpack.c.l.b16 %v1248
        %v1469 = vunpack.c.h.b16 %v1248
        %v1470 = vunpack.c.l.b16 %v1249
        %v1471 = vunpack.c.h.b16 %v1249
        %v1472 = vunpack.c.l.b16 %v1250
        %v1473 = vunpack.c.h.b16 %v1250
        %v1474 = vunpack.c.l.b16 %v1251
        %v1475 = vunpack.c.h.b16 %v1251
        %v1476 = vunpack.c.l.b16 %v1252
        %v1477 = vunpack.c.h.b16 %v1252
        %v1478 = vunpack.c.l.b16 %v1253
        %v1479 = vunpack.c.h.b16 %v1253
        %v1480 = vunpack.c.l.b16 %v1254
        %v1481 = vunpack.c.h.b16 %v1254
        %v1482 = vunpack.c.l.b16 %v1255
        %v1483 = vunpack.c.h.b16 %v1255
        %v1484 = vunpack.c.l.b16 %v1256
        %v1485 = vunpack.c.h.b16 %v1256
        %v1486 = vunpack.c.l.b16 %v1257
        %v1487 = vunpack.c.h.b16 %v1257
        %v1488 = vunpack.c.l.b16 %v1258
        %v1489 = vunpack.c.h.b16 %v1258
        %v1490 = vunpack.c.l.b16 %v1259
        %v1491 = vunpack.c.h.b16 %v1259
        %v1492 = vunpack.c.l.b16 %v1260
        %v1493 = vunpack.c.h.b16 %v1260
        %v1494 = vunpack.c.l.b16 %v1261
        %v1495 = vunpack.c.h.b16 %v1261
        %v1496 = vpack.c.b16 %v1376, %v1368
        %v1497 = vpack.c.b16 %v1377, %v1369
        %v1498 = vpack.c.b16 %v1378, %v1370
        %v1499 = vpack.c.b16 %v1379, %v1371
        %v1500 = vpack.c.b16 %v1380, %v1372
        %v1501 = vpack.c.b16 %v1381, %v1373
        %v1502 = vpack.c.b16 %v1382, %v1374
        %v1503 = vpack.c.b16 %v1383, %v1375
        %v1504 = vpack.c.b16 %v1392, %v1384
        %v1505 = vpack.c.b16 %v1393, %v1385
        %v1506 = vpack.c.b16 %v1394, %v1386
        %v1507 = vpack.c.b16 %v1395, %v1387
        %v1508 = vpack.c.b16 %v1396, %v1388
        %v1509 = vpack.c.b16 %v1397, %v1389
        %v1510 = vpack.c.b16 %v1398, %v1390
        %v1511 = vpack.c.b16 %v1399, %v1391
        %v1512 = vpack.c.b16 %v1408, %v1400
        %v1513 = vpack.c.b16 %v1409, %v1401
        %v1514 = vpack.c.b16 %v1410, %v1402
        %v1515 = vpack.c.b16 %v1411, %v1403
        %v1516 = vpack.c.b16 %v1412, %v1404
        %v1517 = vpack.c.b16 %v1413, %v1405
        %v1518 = vpack.c.b16 %v1414, %v1406
        %v1519 = vpack.c.b16 %v1415, %v1407
        %v1520 = vpack.c.b16 %v1424, %v1416
        %v1521 = vpack.c.b16 %v1425, %v1417
        %v1522 = vpack.c.b16 %v1426, %v1418
        %v1523 = vpack.c.b16 %v1427, %v1419
        %v1524 = vpack.c.b16 %v1428, %v1420
        %v1525 = vpack.c.b16 %v1429, %v1421
        %v1526 = vpack.c.b16 %v1430, %v1422
        %v1527 = vpack.c.b16 %v1431, %v1423
        %v1528 = vpack.c.b16 %v1440, %v1432
        %v1529 = vpack.c.b16 %v1441, %v1433
        %v1530 = vpack.c.b16 %v1442, %v1434
        %v1531 = vpack.c.b16 %v1443, %v1435
        %v1532 = vpack.c.b16 %v1444, %v1436
        %v1533 = vpack.c.b16 %v1445, %v1437
        %v1534 = vpack.c.b16 %v1446, %v1438
        %v1535 = vpack.c.b16 %v1447, %v1439
        %v1536 = vpack.c.b16 %v1456, %v1448
        %v1537 = vpack.c.b16 %v1457, %v1449
        %v1538 = vpack.c.b16 %v1458, %v1450
        %v1539 = vpack.c.b16 %v1459, %v1451
        %v1540 = vpack.c.b16 %v1460, %v1452
        %v1541 = vpack.c.b16 %v1461, %v1453
        %v1542 = vpack.c.b16 %v1462, %v1454
        %v1543 = vpack.c.b16 %v1463, %v1455
        %v1544 = vpack.c.b16 %v1472, %v1464
        %v1545 = vpack.c.b16 %v1473, %v1465
        %v1546 = vpack.c.b16 %v1474, %v1466
        %v1547 = vpack.c.b16 %v1475, %v1467
        %v1548 = vpack.c.b16 %v1476, %v1468
        %v1549 = vpack.c.b16 %v1477, %v1469
        %v1550 = vpack.c.b16 %v1478, %v1470
        %v1551 = vpack.c.b16 %v1479, %v1471
        %v1552 = vpack.c.b16 %v1488, %v1480
        %v1553 = vpack.c.b16 %v1489, %v1481
        %v1554 = vpack.c.b16 %v1490, %v1482
        %v1555 = vpack.c.b16 %v1491, %v1483
        %v1556 = vpack.c.b16 %v1492, %v1484
        %v1557 = vpack.c.b16 %v1493, %v1485
        %v1558 = vpack.c.b16 %v1494, %v1486
        %v1559 = vpack.c.b16 %v1495, %v1487
        %1624 = vmatprep.subr.bf16.mxu0 %v1497
        %1625 = vmatpush1.bf16.msra.mxu0 %v1496
        %1626 = vmatprep.subr.bf16.mxu0 %v1505
        %1627 = vmatpush1.bf16.msra.mxu0 %v1504
        %1628 = vmatprep.subr.bf16.mxu0 %v1513
        %1629 = vmatpush1.bf16.msra.mxu0 %v1512
        %1630 = vmatprep.subr.bf16.mxu0 %v1521
        %1631 = vmatpush1.bf16.msra.mxu0 %v1520
        %1632 = vmatprep.subr.bf16.mxu0 %v1529
        %1633 = vmatpush1.bf16.msra.mxu0 %v1528
        %1634 = vmatprep.subr.bf16.mxu0 %v1537
        %1635 = vmatpush1.bf16.msra.mxu0 %v1536
        %1636 = vmatprep.subr.bf16.mxu0 %v1545
        %1637 = vmatpush1.bf16.msra.mxu0 %v1544
        %1638 = vmatprep.subr.bf16.mxu0 %v1553
        %1639 = vmatpush1.bf16.msra.mxu0 %v1552
        %1640 = vmatprep.subr.bf16.mxu0 0
        %1641 = vmatpush1.bf16.msra.mxu0 0
        %1642 = vmatprep.subr.bf16.mxu0 0
        %1643 = vmatpush1.bf16.msra.mxu0 0
        %1644 = vmatprep.subr.bf16.mxu0 0
        %1645 = vmatpush1.bf16.msra.mxu0 0
        %1646 = vmatprep.subr.bf16.mxu0 0
        %1647 = vmatpush1.bf16.msra.mxu0 0
        %1648 = vmatprep.subr.bf16.mxu0 0
        %1649 = vmatpush1.bf16.msra.mxu0 0
        %1650 = vmatprep.subr.bf16.mxu0 0
        %1651 = vmatpush1.bf16.msra.mxu0 0
        %1652 = vmatprep.subr.bf16.mxu0 0
        %1653 = vmatpush1.bf16.msra.mxu0 0
        %1654 = vmatprep.subr.bf16.mxu0 0
        %1655 = vmatpush1.bf16.msra.mxu0 0
        %1656 = vmatprep.mubr.bf16.mxu0 0
        %1657 = vmatmul.mubr.bf16.gmra.mrb[0].mxu0 %v1182
        %v1658 = vpop.f32.mrb[0].mxu0
        %v1659 = vadd.f32 %v1267, %v1658
        %v1660 = vpop.f32.mrb[0].mxu0
        %v1661 = vadd.f32 %v1271, %v1660
        %v1662 = vpop.f32.mrb[0].mxu0
        %v1663 = vadd.f32 %v1267, %v1662
        %v1664 = vpop.f32.mrb[0].mxu0
        %v1665 = vadd.f32 %v1271, %v1664
        %1666 = vmatprep.mubr.bf16.mxu0 0
        %1667 = vmatmul.mubr.bf16.gmra.mrb[0].mxu0 %v1183
        %v1668 = vpop.f32.mrb[0].mxu0
        %v1669 = vadd.f32 %v1267, %v1668
        %v1670 = vpop.f32.mrb[0].mxu0
        %v1671 = vadd.f32 %v1271, %v1670
        %v1672 = vpop.f32.mrb[0].mxu0
        %v1673 = vadd.f32 %v1267, %v1672
        %v1674 = vpop.f32.mrb[0].mxu0
        %v1675 = vadd.f32 %v1271, %v1674
        %1676 = vmatprep.mubr.bf16.mxu0 0
        %1677 = vmatmul.mubr.bf16.gmra.mrb[0].mxu0 %v1184
        %v1678 = vpop.f32.mrb[0].mxu0
        %v1679 = vadd.f32 %v1267, %v1678
        %v1680 = vpop.f32.mrb[0].mxu0
        %v1681 = vadd.f32 %v1271, %v1680
        %v1682 = vpop.f32.mrb[0].mxu0
        %v1683 = vadd.f32 %v1267, %v1682
        %v1684 = vpop.f32.mrb[0].mxu0
        %v1685 = vadd.f32 %v1271, %v1684
        %1686 = vmatprep.mubr.bf16.mxu0 0
        %1687 = vmatmul.mubr.bf16.gmra.mrb[0].mxu0 %v1185
        %v1688 = vpop.f32.mrb[0].mxu0
        %v1689 = vadd.f32 %v1267, %v1688
        %v1690 = vpop.f32.mrb[0].mxu0
        %v1691 = vadd.f32 %v1271, %v1690
        %v1692 = vpop.f32.mrb[0].mxu0
        %v1693 = vadd.f32 %v1267, %v1692
        %v1694 = vpop.f32.mrb[0].mxu0
        %v1695 = vadd.f32 %v1271, %v1694
        %1696 = vmatprep.mubr.bf16.mxu0 0
        %1697 = vmatmul.mubr.bf16.gmra.mrb[0].mxu0 %v1186
        %v1698 = vpop.f32.mrb[0].mxu0
        %v1699 = vadd.f32 %v1267, %v1698
        %v1700 = vpop.f32.mrb[0].mxu0
        %v1701 = vadd.f32 %v1271, %v1700
        %v1702 = vpop.f32.mrb[0].mxu0
        %v1703 = vadd.f32 %v1267, %v1702
        %v1704 = vpop.f32.mrb[0].mxu0
        %v1705 = vadd.f32 %v1271, %v1704
        %1706 = vmatprep.mubr.bf16.mxu0 0
        %1707 = vmatmul.mubr.bf16.gmra.mrb[0].mxu0 %v1187
        %v1708 = vpop.f32.mrb[0].mxu0
        %v1709 = vadd.f32 %v1267, %v1708
        %v1710 = vpop.f32.mrb[0].mxu0
        %v1711 = vadd.f32 %v1271, %v1710
        %v1712 = vpop.f32.mrb[0].mxu0
        %v1713 = vadd.f32 %v1267, %v1712
        %v1714 = vpop.f32.mrb[0].mxu0
        %v1715 = vadd.f32 %v1271, %v1714
        %1716 = vmatprep.mubr.bf16.mxu0 0
        %1717 = vmatmul.mubr.bf16.gmra.mrb[0].mxu0 %v1188
        %v1718 = vpop.f32.mrb[0].mxu0
        %v1719 = vadd.f32 %v1267, %v1718
        %v1720 = vpop.f32.mrb[0].mxu0
        %v1721 = vadd.f32 %v1271, %v1720
        %v1722 = vpop.f32.mrb[0].mxu0
        %v1723 = vadd.f32 %v1267, %v1722
        %v1724 = vpop.f32.mrb[0].mxu0
        %v1725 = vadd.f32 %v1271, %v1724
        %1726 = vmatprep.mubr.bf16.mxu0 0
        %1727 = vmatmul.mubr.bf16.gmra.mrb[0].mxu0 %v1189
        %v1728 = vpop.f32.mrb[0].mxu0
        %v1729 = vadd.f32 %v1267, %v1728
        %v1730 = vpop.f32.mrb[0].mxu0
        %v1731 = vadd.f32 %v1271, %v1730
        %v1732 = vpop.f32.mrb[0].mxu0
        %v1733 = vadd.f32 %v1267, %v1732
        %v1734 = vpop.f32.mrb[0].mxu0
        %v1735 = vadd.f32 %v1271, %v1734
        %1736 = vmatprep.mubr.bf16.mxu0 0
        %1737 = vmatmul.mubr.bf16.gmra.mrb[0].mxu0 %v1190
        %v1738 = vpop.f32.mrb[0].mxu0
        %v1739 = vadd.f32 %v1267, %v1738
        %v1740 = vpop.f32.mrb[0].mxu0
        %v1741 = vadd.f32 %v1271, %v1740
        %v1742 = vpop.f32.mrb[0].mxu0
        %v1743 = vadd.f32 %v1267, %v1742
        %v1744 = vpop.f32.mrb[0].mxu0
        %v1745 = vadd.f32 %v1271, %v1744
        %1746 = vmatprep.mubr.bf16.mxu0 0
        %1747 = vmatmul.mubr.bf16.gmra.mrb[0].mxu0 %v1191
        %v1748 = vpop.f32.mrb[0].mxu0
        %v1749 = vadd.f32 %v1267, %v1748
        %v1750 = vpop.f32.mrb[0].mxu0
        %v1751 = vadd.f32 %v1271, %v1750
        %v1752 = vpop.f32.mrb[0].mxu0
        %v1753 = vadd.f32 %v1267, %v1752
        %v1754 = vpop.f32.mrb[0].mxu0
        %v1755 = vadd.f32 %v1271, %v1754
        %1756 = vmatprep.mubr.bf16.mxu0 0
        %1757 = vmatmul.mubr.bf16.gmra.mrb[0].mxu0 %v1192
        %v1758 = vpop.f32.mrb[0].mxu0
        %v1759 = vadd.f32 %v1267, %v1758
        %v1760 = vpop.f32.mrb[0].mxu0
        %v1761 = vadd.f32 %v1271, %v1760
        %v1762 = vpop.f32.mrb[0].mxu0
        %v1763 = vadd.f32 %v1267, %v1762
        %v1764 = vpop.f32.mrb[0].mxu0
        %v1765 = vadd.f32 %v1271, %v1764
        %1766 = vmatprep.mubr.bf16.mxu0 0
        %1767 = vmatmul.mubr.bf16.gmra.mrb[0].mxu0 %v1193
        %v1768 = vpop.f32.mrb[0].mxu0
        %v1769 = vadd.f32 %v1267, %v1768
        %v1770 = vpop.f32.mrb[0].mxu0
        %v1771 = vadd.f32 %v1271, %v1770
        %v1772 = vpop.f32.mrb[0].mxu0
        %v1773 = vadd.f32 %v1267, %v1772
        %v1774 = vpop.f32.mrb[0].mxu0
        %v1775 = vadd.f32 %v1271, %v1774
        %1776 = vmatprep.mubr.bf16.mxu0 0
        %1777 = vmatmul.mubr.bf16.gmra.mrb[0].mxu0 %v1194
        %v1778 = vpop.f32.mrb[0].mxu0
        %v1779 = vadd.f32 %v1267, %v1778
        %v1780 = vpop.f32.mrb[0].mxu0
        %v1781 = vadd.f32 %v1271, %v1780
        %v1782 = vpop.f32.mrb[0].mxu0
        %v1783 = vadd.f32 %v1267, %v1782
        %v1784 = vpop.f32.mrb[0].mxu0
        %v1785 = vadd.f32 %v1271, %v1784
        %1786 = vmatprep.mubr.bf16.mxu0 0
        %1787 = vmatmul.mubr.bf16.gmra.mrb[0].mxu0 %v1195
        %v1788 = vpop.f32.mrb[0].mxu0
        %v1789 = vadd.f32 %v1267, %v1788
        %v1790 = vpop.f32.mrb[0].mxu0
        %v1791 = vadd.f32 %v1271, %v1790
        %v1792 = vpop.f32.mrb[0].mxu0
        %v1793 = vadd.f32 %v1267, %v1792
        %v1794 = vpop.f32.mrb[0].mxu0
        %v1795 = vadd.f32 %v1271, %v1794
        %1796 = vmatprep.mubr.bf16.mxu0 0
        %1797 = vmatmul.mubr.bf16.gmra.mrb[0].mxu0 %v1196
        %v1798 = vpop.f32.mrb[0].mxu0
        %v1799 = vadd.f32 %v1267, %v1798
        %v1800 = vpop.f32.mrb[0].mxu0
        %v1801 = vadd.f32 %v1271, %v1800
        %v1802 = vpop.f32.mrb[0].mxu0
        %v1803 = vadd.f32 %v1267, %v1802
        %v1804 = vpop.f32.mrb[0].mxu0
        %v1805 = vadd.f32 %v1271, %v1804
        %1806 = vmatprep.mubr.bf16.mxu0 0
        %1807 = vmatmul.mubr.bf16.gmra.mrb[0].mxu0 %v1197
        %v1808 = vpop.f32.mrb[0].mxu0
        %v1809 = vadd.f32 %v1267, %v1808
        %v1810 = vpop.f32.mrb[0].mxu0
        %v1811 = vadd.f32 %v1271, %v1810
        %v1812 = vpop.f32.mrb[0].mxu0
        %v1813 = vadd.f32 %v1267, %v1812
        %v1814 = vpop.f32.mrb[0].mxu0
        %v1815 = vadd.f32 %v1271, %v1814
        %1816 = vdwg.mxu0
        %1817 = vmatprep.subr.bf16.mxu0 %v1499
        %1818 = vmatpush1.bf16.msra.mxu0 %v1498
        %1819 = vmatprep.subr.bf16.mxu0 %v1507
        %1820 = vmatpush1.bf16.msra.mxu0 %v1506
        %1821 = vmatprep.subr.bf16.mxu0 %v1515
        %1822 = vmatpush1.bf16.msra.mxu0 %v1514
        %1823 = vmatprep.subr.bf16.mxu0 %v1523
        %1824 = vmatpush1.bf16.msra.mxu0 %v1522
        %1825 = vmatprep.subr.bf16.mxu0 %v1531
        %1826 = vmatpush1.bf16.msra.mxu0 %v1530
        %1827 = vmatprep.subr.bf16.mxu0 %v1539
        %1828 = vmatpush1.bf16.msra.mxu0 %v1538
        %1829 = vmatprep.subr.bf16.mxu0 %v1547
        %1830 = vmatpush1.bf16.msra.mxu0 %v1546
        %1831 = vmatprep.subr.bf16.mxu0 %v1555
        %1832 = vmatpush1.bf16.msra.mxu0 %v1554
        %1833 = vmatprep.subr.bf16.mxu0 0
        %1834 = vmatpush1.bf16.msra.mxu0 0
        %1835 = vmatprep.subr.bf16.mxu0 0
        %1836 = vmatpush1.bf16.msra.mxu0 0
        %1837 = vmatprep.subr.bf16.mxu0 0
        %1838 = vmatpush1.bf16.msra.mxu0 0
        %1839 = vmatprep.subr.bf16.mxu0 0
        %1840 = vmatpush1.bf16.msra.mxu0 0
        %1841 = vmatprep.subr.bf16.mxu0 0
        %1842 = vmatpush1.bf16.msra.mxu0 0
        %1843 = vmatprep.subr.bf16.mxu0 0
        %1844 = vmatpush1.bf16.msra.mxu0 0
        %1845 = vmatprep.subr.bf16.mxu0 0
        %1846 = vmatpush1.bf16.msra.mxu0 0
        %1847 = vmatprep.subr.bf16.mxu0 0
        %1848 = vmatpush1.bf16.msra.mxu0 0
        %1849 = vmatprep.mubr.bf16.mxu0 0
        %1850 = vmatmul.mubr.bf16.gmra.mrb[0].mxu0 %v1182
        %v1851 = vpop.f32.mrb[0].mxu0
        %v1852 = vadd.f32 %v1275, %v1851
        %v1853 = vpop.f32.mrb[0].mxu0
        %v1854 = vadd.f32 %v1279, %v1853
        %v1855 = vpop.f32.mrb[0].mxu0
        %v1856 = vadd.f32 %v1275, %v1855
        %v1857 = vpop.f32.mrb[0].mxu0
        %v1858 = vadd.f32 %v1279, %v1857
        %1859 = vmatprep.mubr.bf16.mxu0 0
        %1860 = vmatmul.mubr.bf16.gmra.mrb[0].mxu0 %v1183
        %v1861 = vpop.f32.mrb[0].mxu0
        %v1862 = vadd.f32 %v1275, %v1861
        %v1863 = vpop.f32.mrb[0].mxu0
        %v1864 = vadd.f32 %v1279, %v1863
        %v1865 = vpop.f32.mrb[0].mxu0
        %v1866 = vadd.f32 %v1275, %v1865
        %v1867 = vpop.f32.mrb[0].mxu0
        %v1868 = vadd.f32 %v1279, %v1867
        %1869 = vmatprep.mubr.bf16.mxu0 0
        %1870 = vmatmul.mubr.bf16.gmra.mrb[0].mxu0 %v1184
        %v1871 = vpop.f32.mrb[0].mxu0
        %v1872 = vadd.f32 %v1275, %v1871
        %v1873 = vpop.f32.mrb[0].mxu0
        %v1874 = vadd.f32 %v1279, %v1873
        %v1875 = vpop.f32.mrb[0].mxu0
        %v1876 = vadd.f32 %v1275, %v1875
        %v1877 = vpop.f32.mrb[0].mxu0
        %v1878 = vadd.f32 %v1279, %v1877
        %1879 = vmatprep.mubr.bf16.mxu0 0
        %1880 = vmatmul.mubr.bf16.gmra.mrb[0].mxu0 %v1185
        %v1881 = vpop.f32.mrb[0].mxu0
        %v1882 = vadd.f32 %v1275, %v1881
        %v1883 = vpop.f32.mrb[0].mxu0
        %v1884 = vadd.f32 %v1279, %v1883
        %v1885 = vpop.f32.mrb[0].mxu0
        %v1886 = vadd.f32 %v1275, %v1885
        %v1887 = vpop.f32.mrb[0].mxu0
        %v1888 = vadd.f32 %v1279, %v1887
        %1889 = vmatprep.mubr.bf16.mxu0 0
        %1890 = vmatmul.mubr.bf16.gmra.mrb[0].mxu0 %v1186
        %v1891 = vpop.f32.mrb[0].mxu0
        %v1892 = vadd.f32 %v1275, %v1891
        %v1893 = vpop.f32.mrb[0].mxu0
        %v1894 = vadd.f32 %v1279, %v1893
        %v1895 = vpop.f32.mrb[0].mxu0
        %v1896 = vadd.f32 %v1275, %v1895
        %v1897 = vpop.f32.mrb[0].mxu0
        %v1898 = vadd.f32 %v1279, %v1897
        %1899 = vmatprep.mubr.bf16.mxu0 0
        %1900 = vmatmul.mubr.bf16.gmra.mrb[0].mxu0 %v1187
        %v1901 = vpop.f32.mrb[0].mxu0
        %v1902 = vadd.f32 %v1275, %v1901
        %v1903 = vpop.f32.mrb[0].mxu0
        %v1904 = vadd.f32 %v1279, %v1903
        %v1905 = vpop.f32.mrb[0].mxu0
        %v1906 = vadd.f32 %v1275, %v1905
        %v1907 = vpop.f32.mrb[0].mxu0
        %v1908 = vadd.f32 %v1279, %v1907
        %1909 = vmatprep.mubr.bf16.mxu0 0
        %1910 = vmatmul.mubr.bf16.gmra.mrb[0].mxu0 %v1188
        %v1911 = vpop.f32.mrb[0].mxu0
        %v1912 = vadd.f32 %v1275, %v1911
        %v1913 = vpop.f32.mrb[0].mxu0
        %v1914 = vadd.f32 %v1279, %v1913
        %v1915 = vpop.f32.mrb[0].mxu0
        %v1916 = vadd.f32 %v1275, %v1915
        %v1917 = vpop.f32.mrb[0].mxu0
        %v1918 = vadd.f32 %v1279, %v1917
        %1919 = vmatprep.mubr.bf16.mxu0 0
        %1920 = vmatmul.mubr.bf16.gmra.mrb[0].mxu0 %v1189
        %v1921 = vpop.f32.mrb[0].mxu0
        %v1922 = vadd.f32 %v1275, %v1921
        %v1923 = vpop.f32.mrb[0].mxu0
        %v1924 = vadd.f32 %v1279, %v1923
        %v1925 = vpop.f32.mrb[0].mxu0
        %v1926 = vadd.f32 %v1275, %v1925
        %v1927 = vpop.f32.mrb[0].mxu0
        %v1928 = vadd.f32 %v1279, %v1927
        %1929 = vmatprep.mubr.bf16.mxu0 0
        %1930 = vmatmul.mubr.bf16.gmra.mrb[0].mxu0 %v1190
        %v1931 = vpop.f32.mrb[0].mxu0
        %v1932 = vadd.f32 %v1275, %v1931
        %v1933 = vpop.f32.mrb[0].mxu0
        %v1934 = vadd.f32 %v1279, %v1933
        %v1935 = vpop.f32.mrb[0].mxu0
        %v1936 = vadd.f32 %v1275, %v1935
        %v1937 = vpop.f32.mrb[0].mxu0
        %v1938 = vadd.f32 %v1279, %v1937
        %1939 = vmatprep.mubr.bf16.mxu0 0
        %1940 = vmatmul.mubr.bf16.gmra.mrb[0].mxu0 %v1191
        %v1941 = vpop.f32.mrb[0].mxu0
        %v1942 = vadd.f32 %v1275, %v1941
        %v1943 = vpop.f32.mrb[0].mxu0
        %v1944 = vadd.f32 %v1279, %v1943
        %v1945 = vpop.f32.mrb[0].mxu0
        %v1946 = vadd.f32 %v1275, %v1945
        %v1947 = vpop.f32.mrb[0].mxu0
        %v1948 = vadd.f32 %v1279, %v1947
        %1949 = vmatprep.mubr.bf16.mxu0 0
        %1950 = vmatmul.mubr.bf16.gmra.mrb[0].mxu0 %v1192
        %v1951 = vpop.f32.mrb[0].mxu0
        %v1952 = vadd.f32 %v1275, %v1951
        %v1953 = vpop.f32.mrb[0].mxu0
        %v1954 = vadd.f32 %v1279, %v1953
        %v1955 = vpop.f32.mrb[0].mxu0
        %v1956 = vadd.f32 %v1275, %v1955
        %v1957 = vpop.f32.mrb[0].mxu0
        %v1958 = vadd.f32 %v1279, %v1957
        %1959 = vmatprep.mubr.bf16.mxu0 0
        %1960 = vmatmul.mubr.bf16.gmra.mrb[0].mxu0 %v1193
        %v1961 = vpop.f32.mrb[0].mxu0
        %v1962 = vadd.f32 %v1275, %v1961
        %v1963 = vpop.f32.mrb[0].mxu0
        %v1964 = vadd.f32 %v1279, %v1963
        %v1965 = vpop.f32.mrb[0].mxu0
        %v1966 = vadd.f32 %v1275, %v1965
        %v1967 = vpop.f32.mrb[0].mxu0
        %v1968 = vadd.f32 %v1279, %v1967
        %1969 = vmatprep.mubr.bf16.mxu0 0
        %1970 = vmatmul.mubr.bf16.gmra.mrb[0].mxu0 %v1194
        %v1971 = vpop.f32.mrb[0].mxu0
        %v1972 = vadd.f32 %v1275, %v1971
        %v1973 = vpop.f32.mrb[0].mxu0
        %v1974 = vadd.f32 %v1279, %v1973
        %v1975 = vpop.f32.mrb[0].mxu0
        %v1976 = vadd.f32 %v1275, %v1975
        %v1977 = vpop.f32.mrb[0].mxu0
        %v1978 = vadd.f32 %v1279, %v1977
        %1979 = vmatprep.mubr.bf16.mxu0 0
        %1980 = vmatmul.mubr.bf16.gmra.mrb[0].mxu0 %v1195
        %v1981 = vpop.f32.mrb[0].mxu0
        %v1982 = vadd.f32 %v1275, %v1981
        %v1983 = vpop.f32.mrb[0].mxu0
        %v1984 = vadd.f32 %v1279, %v1983
        %v1985 = vpop.f32.mrb[0].mxu0
        %v1986 = vadd.f32 %v1275, %v1985
        %v1987 = vpop.f32.mrb[0].mxu0
        %v1988 = vadd.f32 %v1279, %v1987
        %1989 = vmatprep.mubr.bf16.mxu0 0
        %1990 = vmatmul.mubr.bf16.gmra.mrb[0].mxu0 %v1196
        %v1991 = vpop.f32.mrb[0].mxu0
        %v1992 = vadd.f32 %v1275, %v1991
        %v1993 = vpop.f32.mrb[0].mxu0
        %v1994 = vadd.f32 %v1279, %v1993
        %v1995 = vpop.f32.mrb[0].mxu0
        %v1996 = vadd.f32 %v1275, %v1995
        %v1997 = vpop.f32.mrb[0].mxu0
        %v1998 = vadd.f32 %v1279, %v1997
        %1999 = vmatprep.mubr.bf16.mxu0 0
        %2000 = vmatmul.mubr.bf16.gmra.mrb[0].mxu0 %v1197
        %v2001 = vpop.f32.mrb[0].mxu0
        %v2002 = vadd.f32 %v1275, %v2001
        %v2003 = vpop.f32.mrb[0].mxu0
        %v2004 = vadd.f32 %v1279, %v2003
        %v2005 = vpop.f32.mrb[0].mxu0
        %v2006 = vadd.f32 %v1275, %v2005
        %v2007 = vpop.f32.mrb[0].mxu0
        %v2008 = vadd.f32 %v1279, %v2007
        %2009 = vdwg.mxu0
        %2010 = vmatprep.subr.bf16.mxu0 %v1501
        %2011 = vmatpush1.bf16.msra.mxu0 %v1500
        %2012 = vmatprep.subr.bf16.mxu0 %v1509
        %2013 = vmatpush1.bf16.msra.mxu0 %v1508
        %2014 = vmatprep.subr.bf16.mxu0 %v1517
        %2015 = vmatpush1.bf16.msra.mxu0 %v1516
        %2016 = vmatprep.subr.bf16.mxu0 %v1525
        %2017 = vmatpush1.bf16.msra.mxu0 %v1524
        %2018 = vmatprep.subr.bf16.mxu0 %v1533
        %2019 = vmatpush1.bf16.msra.mxu0 %v1532
        %2020 = vmatprep.subr.bf16.mxu0 %v1541
        %2021 = vmatpush1.bf16.msra.mxu0 %v1540
        %2022 = vmatprep.subr.bf16.mxu0 %v1549
        %2023 = vmatpush1.bf16.msra.mxu0 %v1548
        %2024 = vmatprep.subr.bf16.mxu0 %v1557
        %2025 = vmatpush1.bf16.msra.mxu0 %v1556
        %2026 = vmatprep.subr.bf16.mxu0 0
        %2027 = vmatpush1.bf16.msra.mxu0 0
        %2028 = vmatprep.subr.bf16.mxu0 0
        %2029 = vmatpush1.bf16.msra.mxu0 0
        %2030 = vmatprep.subr.bf16.mxu0 0
        %2031 = vmatpush1.bf16.msra.mxu0 0
        %2032 = vmatprep.subr.bf16.mxu0 0
        %2033 = vmatpush1.bf16.msra.mxu0 0
        %2034 = vmatprep.subr.bf16.mxu0 0
        %2035 = vmatpush1.bf16.msra.mxu0 0
        %2036 = vmatprep.subr.bf16.mxu0 0
        %2037 = vmatpush1.bf16.msra.mxu0 0
        %2038 = vmatprep.subr.bf16.mxu0 0
        %2039 = vmatpush1.bf16.msra.mxu0 0
        %2040 = vmatprep.subr.bf16.mxu0 0
        %2041 = vmatpush1.bf16.msra.mxu0 0
        %2042 = vmatprep.mubr.bf16.mxu0 0
        %2043 = vmatmul.mubr.bf16.gmra.mrb[0].mxu0 %v1182
        %v2044 = vpop.f32.mrb[0].mxu0
        %v2045 = vadd.f32 %v1283, %v2044
        %v2046 = vpop.f32.mrb[0].mxu0
        %v2047 = vadd.f32 %v1287, %v2046
        %v2048 = vpop.f32.mrb[0].mxu0
        %v2049 = vadd.f32 %v1283, %v2048
        %v2050 = vpop.f32.mrb[0].mxu0
        %v2051 = vadd.f32 %v1287, %v2050
        %2052 = vmatprep.mubr.bf16.mxu0 0
        %2053 = vmatmul.mubr.bf16.gmra.mrb[0].mxu0 %v1183
        %v2054 = vpop.f32.mrb[0].mxu0
        %v2055 = vadd.f32 %v1283, %v2054
        %v2056 = vpop.f32.mrb[0].mxu0
        %v2057 = vadd.f32 %v1287, %v2056
        %v2058 = vpop.f32.mrb[0].mxu0
        %v2059 = vadd.f32 %v1283, %v2058
        %v2060 = vpop.f32.mrb[0].mxu0
        %v2061 = vadd.f32 %v1287, %v2060
        %2062 = vmatprep.mubr.bf16.mxu0 0
        %2063 = vmatmul.mubr.bf16.gmra.mrb[0].mxu0 %v1184
        %v2064 = vpop.f32.mrb[0].mxu0
        %v2065 = vadd.f32 %v1283, %v2064
        %v2066 = vpop.f32.mrb[0].mxu0
        %v2067 = vadd.f32 %v1287, %v2066
        %v2068 = vpop.f32.mrb[0].mxu0
        %v2069 = vadd.f32 %v1283, %v2068
        %v2070 = vpop.f32.mrb[0].mxu0
        %v2071 = vadd.f32 %v1287, %v2070
        %2072 = vmatprep.mubr.bf16.mxu0 0
        %2073 = vmatmul.mubr.bf16.gmra.mrb[0].mxu0 %v1185
        %v2074 = vpop.f32.mrb[0].mxu0
        %v2075 = vadd.f32 %v1283, %v2074
        %v2076 = vpop.f32.mrb[0].mxu0
        %v2077 = vadd.f32 %v1287, %v2076
        %v2078 = vpop.f32.mrb[0].mxu0
        %v2079 = vadd.f32 %v1283, %v2078
        %v2080 = vpop.f32.mrb[0].mxu0
        %v2081 = vadd.f32 %v1287, %v2080
        %2082 = vmatprep.mubr.bf16.mxu0 0
        %2083 = vmatmul.mubr.bf16.gmra.mrb[0].mxu0 %v1186
        %v2084 = vpop.f32.mrb[0].mxu0
        %v2085 = vadd.f32 %v1283, %v2084
        %v2086 = vpop.f32.mrb[0].mxu0
        %v2087 = vadd.f32 %v1287, %v2086
        %v2088 = vpop.f32.mrb[0].mxu0
        %v2089 = vadd.f32 %v1283, %v2088
        %v2090 = vpop.f32.mrb[0].mxu0
        %v2091 = vadd.f32 %v1287, %v2090
        %2092 = vmatprep.mubr.bf16.mxu0 0
        %2093 = vmatmul.mubr.bf16.gmra.mrb[0].mxu0 %v1187
        %v2094 = vpop.f32.mrb[0].mxu0
        %v2095 = vadd.f32 %v1283, %v2094
        %v2096 = vpop.f32.mrb[0].mxu0
        %v2097 = vadd.f32 %v1287, %v2096
        %v2098 = vpop.f32.mrb[0].mxu0
        %v2099 = vadd.f32 %v1283, %v2098
        %v2100 = vpop.f32.mrb[0].mxu0
        %v2101 = vadd.f32 %v1287, %v2100
        %2102 = vmatprep.mubr.bf16.mxu0 0
        %2103 = vmatmul.mubr.bf16.gmra.mrb[0].mxu0 %v1188
        %v2104 = vpop.f32.mrb[0].mxu0
        %v2105 = vadd.f32 %v1283, %v2104
        %v2106 = vpop.f32.mrb[0].mxu0
        %v2107 = vadd.f32 %v1287, %v2106
        %v2108 = vpop.f32.mrb[0].mxu0
        %v2109 = vadd.f32 %v1283, %v2108
        %v2110 = vpop.f32.mrb[0].mxu0
        %v2111 = vadd.f32 %v1287, %v2110
        %2112 = vmatprep.mubr.bf16.mxu0 0
        %2113 = vmatmul.mubr.bf16.gmra.mrb[0].mxu0 %v1189
        %v2114 = vpop.f32.mrb[0].mxu0
        %v2115 = vadd.f32 %v1283, %v2114
        %v2116 = vpop.f32.mrb[0].mxu0
        %v2117 = vadd.f32 %v1287, %v2116
        %v2118 = vpop.f32.mrb[0].mxu0
        %v2119 = vadd.f32 %v1283, %v2118
        %v2120 = vpop.f32.mrb[0].mxu0
        %v2121 = vadd.f32 %v1287, %v2120
        %2122 = vmatprep.mubr.bf16.mxu0 0
        %2123 = vmatmul.mubr.bf16.gmra.mrb[0].mxu0 %v1190
        %v2124 = vpop.f32.mrb[0].mxu0
        %v2125 = vadd.f32 %v1283, %v2124
        %v2126 = vpop.f32.mrb[0].mxu0
        %v2127 = vadd.f32 %v1287, %v2126
        %v2128 = vpop.f32.mrb[0].mxu0
        %v2129 = vadd.f32 %v1283, %v2128
        %v2130 = vpop.f32.mrb[0].mxu0
        %v2131 = vadd.f32 %v1287, %v2130
        %2132 = vmatprep.mubr.bf16.mxu0 0
        %2133 = vmatmul.mubr.bf16.gmra.mrb[0].mxu0 %v1191
        %v2134 = vpop.f32.mrb[0].mxu0
        %v2135 = vadd.f32 %v1283, %v2134
        %v2136 = vpop.f32.mrb[0].mxu0
        %v2137 = vadd.f32 %v1287, %v2136
        %v2138 = vpop.f32.mrb[0].mxu0
        %v2139 = vadd.f32 %v1283, %v2138
        %v2140 = vpop.f32.mrb[0].mxu0
        %v2141 = vadd.f32 %v1287, %v2140
        %2142 = vmatprep.mubr.bf16.mxu0 0
        %2143 = vmatmul.mubr.bf16.gmra.mrb[0].mxu0 %v1192
        %v2144 = vpop.f32.mrb[0].mxu0
        %v2145 = vadd.f32 %v1283, %v2144
        %v2146 = vpop.f32.mrb[0].mxu0
        %v2147 = vadd.f32 %v1287, %v2146
        %v2148 = vpop.f32.mrb[0].mxu0
        %v2149 = vadd.f32 %v1283, %v2148
        %v2150 = vpop.f32.mrb[0].mxu0
        %v2151 = vadd.f32 %v1287, %v2150
        %2152 = vmatprep.mubr.bf16.mxu0 0
        %2153 = vmatmul.mubr.bf16.gmra.mrb[0].mxu0 %v1193
        %v2154 = vpop.f32.mrb[0].mxu0
        %v2155 = vadd.f32 %v1283, %v2154
        %v2156 = vpop.f32.mrb[0].mxu0
        %v2157 = vadd.f32 %v1287, %v2156
        %v2158 = vpop.f32.mrb[0].mxu0
        %v2159 = vadd.f32 %v1283, %v2158
        %v2160 = vpop.f32.mrb[0].mxu0
        %v2161 = vadd.f32 %v1287, %v2160
        %2162 = vmatprep.mubr.bf16.mxu0 0
        %2163 = vmatmul.mubr.bf16.gmra.mrb[0].mxu0 %v1194
        %v2164 = vpop.f32.mrb[0].mxu0
        %v2165 = vadd.f32 %v1283, %v2164
        %v2166 = vpop.f32.mrb[0].mxu0
        %v2167 = vadd.f32 %v1287, %v2166
        %v2168 = vpop.f32.mrb[0].mxu0
        %v2169 = vadd.f32 %v1283, %v2168
        %v2170 = vpop.f32.mrb[0].mxu0
        %v2171 = vadd.f32 %v1287, %v2170
        %2172 = vmatprep.mubr.bf16.mxu0 0
        %2173 = vmatmul.mubr.bf16.gmra.mrb[0].mxu0 %v1195
        %v2174 = vpop.f32.mrb[0].mxu0
        %v2175 = vadd.f32 %v1283, %v2174
        %v2176 = vpop.f32.mrb[0].mxu0
        %v2177 = vadd.f32 %v1287, %v2176
        %v2178 = vpop.f32.mrb[0].mxu0
        %v2179 = vadd.f32 %v1283, %v2178
        %v2180 = vpop.f32.mrb[0].mxu0
        %v2181 = vadd.f32 %v1287, %v2180
        %2182 = vmatprep.mubr.bf16.mxu0 0
        %2183 = vmatmul.mubr.bf16.gmra.mrb[0].mxu0 %v1196
        %v2184 = vpop.f32.mrb[0].mxu0
        %v2185 = vadd.f32 %v1283, %v2184
        %v2186 = vpop.f32.mrb[0].mxu0
        %v2187 = vadd.f32 %v1287, %v2186
        %v2188 = vpop.f32.mrb[0].mxu0
        %v2189 = vadd.f32 %v1283, %v2188
        %v2190 = vpop.f32.mrb[0].mxu0
        %v2191 = vadd.f32 %v1287, %v2190
        %2192 = vmatprep.mubr.bf16.mxu0 0
        %2193 = vmatmul.mubr.bf16.gmra.mrb[0].mxu0 %v1197
        %v2194 = vpop.f32.mrb[0].mxu0
        %v2195 = vadd.f32 %v1283, %v2194
        %v2196 = vpop.f32.mrb[0].mxu0
        %v2197 = vadd.f32 %v1287, %v2196
        %v2198 = vpop.f32.mrb[0].mxu0
        %v2199 = vadd.f32 %v1283, %v2198
        %v2200 = vpop.f32.mrb[0].mxu0
        %v2201 = vadd.f32 %v1287, %v2200
        %2202 = vdwg.mxu0
        %2203 = vmatprep.subr.bf16.mxu0 %v1503
        %2204 = vmatpush1.bf16.msra.mxu0 %v1502
        %2205 = vmatprep.subr.bf16.mxu0 %v1511
        %2206 = vmatpush1.bf16.msra.mxu0 %v1510
        %2207 = vmatprep.subr.bf16.mxu0 %v1519
        %2208 = vmatpush1.bf16.msra.mxu0 %v1518
        %2209 = vmatprep.subr.bf16.mxu0 %v1527
        %2210 = vmatpush1.bf16.msra.mxu0 %v1526
        %2211 = vmatprep.subr.bf16.mxu0 %v1535
        %2212 = vmatpush1.bf16.msra.mxu0 %v1534
        %2213 = vmatprep.subr.bf16.mxu0 %v1543
        %2214 = vmatpush1.bf16.msra.mxu0 %v1542
        %2215 = vmatprep.subr.bf16.mxu0 %v1551
        %2216 = vmatpush1.bf16.msra.mxu0 %v1550
        %2217 = vmatprep.subr.bf16.mxu0 %v1559
        %2218 = vmatpush1.bf16.msra.mxu0 %v1558
        %2219 = vmatprep.subr.bf16.mxu0 0
        %2220 = vmatpush1.bf16.msra.mxu0 0
        %2221 = vmatprep.subr.bf16.mxu0 0
        %2222 = vmatpush1.bf16.msra.mxu0 0
        %2223 = vmatprep.subr.bf16.mxu0 0
        %2224 = vmatpush1.bf16.msra.mxu0 0
        %2225 = vmatprep.subr.bf16.mxu0 0
        %2226 = vmatpush1.bf16.msra.mxu0 0
        %2227 = vmatprep.subr.bf16.mxu0 0
        %2228 = vmatpush1.bf16.msra.mxu0 0
        %2229 = vmatprep.subr.bf16.mxu0 0
        %2230 = vmatpush1.bf16.msra.mxu0 0
        %2231 = vmatprep.subr.bf16.mxu0 0
        %2232 = vmatpush1.bf16.msra.mxu0 0
        %2233 = vmatprep.subr.bf16.mxu0 0
        %2234 = vmatpush1.bf16.msra.mxu0 0
        %2235 = vmatprep.mubr.bf16.mxu0 0
        %2236 = vmatmul.mubr.bf16.gmra.mrb[0].mxu0 %v1182
        %v2237 = vpop.f32.mrb[0].mxu0
        %v2238 = vadd.f32 %v1291, %v2237
        %v2239 = vpop.f32.mrb[0].mxu0
        %v2240 = vadd.f32 %v1295, %v2239
        %v2241 = vpop.f32.mrb[0].mxu0
        %v2242 = vadd.f32 %v1291, %v2241
        %v2243 = vpop.f32.mrb[0].mxu0
        %v2244 = vadd.f32 %v1295, %v2243
        %2245 = vmatprep.mubr.bf16.mxu0 0
        %2246 = vmatmul.mubr.bf16.gmra.mrb[0].mxu0 %v1183
        %v2247 = vpop.f32.mrb[0].mxu0
        %v2248 = vadd.f32 %v1291, %v2247
        %v2249 = vpop.f32.mrb[0].mxu0
        %v2250 = vadd.f32 %v1295, %v2249
        %v2251 = vpop.f32.mrb[0].mxu0
        %v2252 = vadd.f32 %v1291, %v2251
        %v2253 = vpop.f32.mrb[0].mxu0
        %v2254 = vadd.f32 %v1295, %v2253
        %2255 = vmatprep.mubr.bf16.mxu0 0
        %2256 = vmatmul.mubr.bf16.gmra.mrb[0].mxu0 %v1184
        %v2257 = vpop.f32.mrb[0].mxu0
        %v2258 = vadd.f32 %v1291, %v2257
        %v2259 = vpop.f32.mrb[0].mxu0
        %v2260 = vadd.f32 %v1295, %v2259
        %v2261 = vpop.f32.mrb[0].mxu0
        %v2262 = vadd.f32 %v1291, %v2261
        %v2263 = vpop.f32.mrb[0].mxu0
        %v2264 = vadd.f32 %v1295, %v2263
        %2265 = vmatprep.mubr.bf16.mxu0 0
        %2266 = vmatmul.mubr.bf16.gmra.mrb[0].mxu0 %v1185
        %v2267 = vpop.f32.mrb[0].mxu0
        %v2268 = vadd.f32 %v1291, %v2267
        %v2269 = vpop.f32.mrb[0].mxu0
        %v2270 = vadd.f32 %v1295, %v2269
        %v2271 = vpop.f32.mrb[0].mxu0
        %v2272 = vadd.f32 %v1291, %v2271
        %v2273 = vpop.f32.mrb[0].mxu0
        %v2274 = vadd.f32 %v1295, %v2273
        %2275 = vmatprep.mubr.bf16.mxu0 0
        %2276 = vmatmul.mubr.bf16.gmra.mrb[0].mxu0 %v1186
        %v2277 = vpop.f32.mrb[0].mxu0
        %v2278 = vadd.f32 %v1291, %v2277
        %v2279 = vpop.f32.mrb[0].mxu0
        %v2280 = vadd.f32 %v1295, %v2279
        %v2281 = vpop.f32.mrb[0].mxu0
        %v2282 = vadd.f32 %v1291, %v2281
        %v2283 = vpop.f32.mrb[0].mxu0
        %v2284 = vadd.f32 %v1295, %v2283
        %2285 = vmatprep.mubr.bf16.mxu0 0
        %2286 = vmatmul.mubr.bf16.gmra.mrb[0].mxu0 %v1187
        %v2287 = vpop.f32.mrb[0].mxu0
        %v2288 = vadd.f32 %v1291, %v2287
        %v2289 = vpop.f32.mrb[0].mxu0
        %v2290 = vadd.f32 %v1295, %v2289
        %v2291 = vpop.f32.mrb[0].mxu0
        %v2292 = vadd.f32 %v1291, %v2291
        %v2293 = vpop.f32.mrb[0].mxu0
        %v2294 = vadd.f32 %v1295, %v2293
        %2295 = vmatprep.mubr.bf16.mxu0 0
        %2296 = vmatmul.mubr.bf16.gmra.mrb[0].mxu0 %v1188
        %v2297 = vpop.f32.mrb[0].mxu0
        %v2298 = vadd.f32 %v1291, %v2297
        %v2299 = vpop.f32.mrb[0].mxu0
        %v2300 = vadd.f32 %v1295, %v2299
        %v2301 = vpop.f32.mrb[0].mxu0
        %v2302 = vadd.f32 %v1291, %v2301
        %v2303 = vpop.f32.mrb[0].mxu0
        %v2304 = vadd.f32 %v1295, %v2303
        %2305 = vmatprep.mubr.bf16.mxu0 0
        %2306 = vmatmul.mubr.bf16.gmra.mrb[0].mxu0 %v1189
        %v2307 = vpop.f32.mrb[0].mxu0
        %v2308 = vadd.f32 %v1291, %v2307
        %v2309 = vpop.f32.mrb[0].mxu0
        %v2310 = vadd.f32 %v1295, %v2309
        %v2311 = vpop.f32.mrb[0].mxu0
        %v2312 = vadd.f32 %v1291, %v2311
        %v2313 = vpop.f32.mrb[0].mxu0
        %v2314 = vadd.f32 %v1295, %v2313
        %2315 = vmatprep.mubr.bf16.mxu0 0
        %2316 = vmatmul.mubr.bf16.gmra.mrb[0].mxu0 %v1190
        %v2317 = vpop.f32.mrb[0].mxu0
        %v2318 = vadd.f32 %v1291, %v2317
        %v2319 = vpop.f32.mrb[0].mxu0
        %v2320 = vadd.f32 %v1295, %v2319
        %v2321 = vpop.f32.mrb[0].mxu0
        %v2322 = vadd.f32 %v1291, %v2321
        %v2323 = vpop.f32.mrb[0].mxu0
        %v2324 = vadd.f32 %v1295, %v2323
        %2325 = vmatprep.mubr.bf16.mxu0 0
        %2326 = vmatmul.mubr.bf16.gmra.mrb[0].mxu0 %v1191
        %v2327 = vpop.f32.mrb[0].mxu0
        %v2328 = vadd.f32 %v1291, %v2327
        %v2329 = vpop.f32.mrb[0].mxu0
        %v2330 = vadd.f32 %v1295, %v2329
        %v2331 = vpop.f32.mrb[0].mxu0
        %v2332 = vadd.f32 %v1291, %v2331
        %v2333 = vpop.f32.mrb[0].mxu0
        %v2334 = vadd.f32 %v1295, %v2333
        %2335 = vmatprep.mubr.bf16.mxu0 0
        %2336 = vmatmul.mubr.bf16.gmra.mrb[0].mxu0 %v1192
        %v2337 = vpop.f32.mrb[0].mxu0
        %v2338 = vadd.f32 %v1291, %v2337
        %v2339 = vpop.f32.mrb[0].mxu0
        %v2340 = vadd.f32 %v1295, %v2339
        %v2341 = vpop.f32.mrb[0].mxu0
        %v2342 = vadd.f32 %v1291, %v2341
        %v2343 = vpop.f32.mrb[0].mxu0
        %v2344 = vadd.f32 %v1295, %v2343
        %2345 = vmatprep.mubr.bf16.mxu0 0
        %2346 = vmatmul.mubr.bf16.gmra.mrb[0].mxu0 %v1193
        %v2347 = vpop.f32.mrb[0].mxu0
        %v2348 = vadd.f32 %v1291, %v2347
        %v2349 = vpop.f32.mrb[0].mxu0
        %v2350 = vadd.f32 %v1295, %v2349
        %v2351 = vpop.f32.mrb[0].mxu0
        %v2352 = vadd.f32 %v1291, %v2351
        %v2353 = vpop.f32.mrb[0].mxu0
        %v2354 = vadd.f32 %v1295, %v2353
        %2355 = vmatprep.mubr.bf16.mxu0 0
        %2356 = vmatmul.mubr.bf16.gmra.mrb[0].mxu0 %v1194
        %v2357 = vpop.f32.mrb[0].mxu0
        %v2358 = vadd.f32 %v1291, %v2357
        %v2359 = vpop.f32.mrb[0].mxu0
        %v2360 = vadd.f32 %v1295, %v2359
        %v2361 = vpop.f32.mrb[0].mxu0
        %v2362 = vadd.f32 %v1291, %v2361
        %v2363 = vpop.f32.mrb[0].mxu0
        %v2364 = vadd.f32 %v1295, %v2363
        %2365 = vmatprep.mubr.bf16.mxu0 0
        %2366 = vmatmul.mubr.bf16.gmra.mrb[0].mxu0 %v1195
        %v2367 = vpop.f32.mrb[0].mxu0
        %v2368 = vadd.f32 %v1291, %v2367
        %v2369 = vpop.f32.mrb[0].mxu0
        %v2370 = vadd.f32 %v1295, %v2369
        %v2371 = vpop.f32.mrb[0].mxu0
        %v2372 = vadd.f32 %v1291, %v2371
        %v2373 = vpop.f32.mrb[0].mxu0
        %v2374 = vadd.f32 %v1295, %v2373
        %2375 = vmatprep.mubr.bf16.mxu0 0
        %2376 = vmatmul.mubr.bf16.gmra.mrb[0].mxu0 %v1196
        %v2377 = vpop.f32.mrb[0].mxu0
        %v2378 = vadd.f32 %v1291, %v2377
        %v2379 = vpop.f32.mrb[0].mxu0
        %v2380 = vadd.f32 %v1295, %v2379
        %v2381 = vpop.f32.mrb[0].mxu0
        %v2382 = vadd.f32 %v1291, %v2381
        %v2383 = vpop.f32.mrb[0].mxu0
        %v2384 = vadd.f32 %v1295, %v2383
        %2385 = vmatprep.mubr.bf16.mxu0 0
        %2386 = vmatmul.mubr.bf16.gmra.mrb[0].mxu0 %v1197
        %v2387 = vpop.f32.mrb[0].mxu0
        %v2388 = vadd.f32 %v1291, %v2387
        %v2389 = vpop.f32.mrb[0].mxu0
        %v2390 = vadd.f32 %v1295, %v2389
        %v2391 = vpop.f32.mrb[0].mxu0
        %v2392 = vadd.f32 %v1291, %v2391
        %v2393 = vpop.f32.mrb[0].mxu0
        %v2394 = vadd.f32 %v1295, %v2393
        %2395 = vdwg.mxu0
        %vm2396 = vcmp.gt.f32.partialorder %v1659, 0.0
        %vm2397 = vcmp.gt.f32.partialorder %v1661, 0.0
        %vm2398 = vcmp.gt.f32.partialorder %v1852, 0.0
        %vm2399 = vcmp.gt.f32.partialorder %v1854, 0.0
        %vm2400 = vcmp.gt.f32.partialorder %v2045, 0.0
        %vm2401 = vcmp.gt.f32.partialorder %v2047, 0.0
        %vm2402 = vcmp.gt.f32.partialorder %v2238, 0.0
        %vm2403 = vcmp.gt.f32.partialorder %v2240, 0.0
        %vm2404 = vcmp.gt.f32.partialorder %v1663, 0.0
        %vm2405 = vcmp.gt.f32.partialorder %v1665, 0.0
        %vm2406 = vcmp.gt.f32.partialorder %v1856, 0.0
        %vm2407 = vcmp.gt.f32.partialorder %v1858, 0.0
        %vm2408 = vcmp.gt.f32.partialorder %v2049, 0.0
        %vm2409 = vcmp.gt.f32.partialorder %v2051, 0.0
        %vm2410 = vcmp.gt.f32.partialorder %v2242, 0.0
        %vm2411 = vcmp.gt.f32.partialorder %v2244, 0.0
        %vm2412 = vcmp.gt.f32.partialorder %v1669, 0.0
        %vm2413 = vcmp.gt.f32.partialorder %v1671, 0.0
        %vm2414 = vcmp.gt.f32.partialorder %v1862, 0.0
        %vm2415 = vcmp.gt.f32.partialorder %v1864, 0.0
        %vm2416 = vcmp.gt.f32.partialorder %v2055, 0.0
        %vm2417 = vcmp.gt.f32.partialorder %v2057, 0.0
        %vm2418 = vcmp.gt.f32.partialorder %v2248, 0.0
        %vm2419 = vcmp.gt.f32.partialorder %v2250, 0.0
        %vm2420 = vcmp.gt.f32.partialorder %v1673, 0.0
        %vm2421 = vcmp.gt.f32.partialorder %v1675, 0.0
        %vm2422 = vcmp.gt.f32.partialorder %v1866, 0.0
        %vm2423 = vcmp.gt.f32.partialorder %v1868, 0.0
        %vm2424 = vcmp.gt.f32.partialorder %v2059, 0.0
        %vm2425 = vcmp.gt.f32.partialorder %v2061, 0.0
        %vm2426 = vcmp.gt.f32.partialorder %v2252, 0.0
        %vm2427 = vcmp.gt.f32.partialorder %v2254, 0.0
        %vm2428 = vcmp.gt.f32.partialorder %v1679, 0.0
        %vm2429 = vcmp.gt.f32.partialorder %v1681, 0.0
        %vm2430 = vcmp.gt.f32.partialorder %v1872, 0.0
        %vm2431 = vcmp.gt.f32.partialorder %v1874, 0.0
        %vm2432 = vcmp.gt.f32.partialorder %v2065, 0.0
        %vm2433 = vcmp.gt.f32.partialorder %v2067, 0.0
        %vm2434 = vcmp.gt.f32.partialorder %v2258, 0.0
        %vm2435 = vcmp.gt.f32.partialorder %v2260, 0.0
        %vm2436 = vcmp.gt.f32.partialorder %v1683, 0.0
        %vm2437 = vcmp.gt.f32.partialorder %v1685, 0.0
        %vm2438 = vcmp.gt.f32.partialorder %v1876, 0.0
        %vm2439 = vcmp.gt.f32.partialorder %v1878, 0.0
        %vm2440 = vcmp.gt.f32.partialorder %v2069, 0.0
        %vm2441 = vcmp.gt.f32.partialorder %v2071, 0.0
        %vm2442 = vcmp.gt.f32.partialorder %v2262, 0.0
        %vm2443 = vcmp.gt.f32.partialorder %v2264, 0.0
        %vm2444 = vcmp.gt.f32.partialorder %v1689, 0.0
        %vm2445 = vcmp.gt.f32.partialorder %v1691, 0.0
        %vm2446 = vcmp.gt.f32.partialorder %v1882, 0.0
        %vm2447 = vcmp.gt.f32.partialorder %v1884, 0.0
        %vm2448 = vcmp.gt.f32.partialorder %v2075, 0.0
        %vm2449 = vcmp.gt.f32.partialorder %v2077, 0.0
        %vm2450 = vcmp.gt.f32.partialorder %v2268, 0.0
        %vm2451 = vcmp.gt.f32.partialorder %v2270, 0.0
        %vm2452 = vcmp.gt.f32.partialorder %v1693, 0.0
        %vm2453 = vcmp.gt.f32.partialorder %v1695, 0.0
        %vm2454 = vcmp.gt.f32.partialorder %v1886, 0.0
        %vm2455 = vcmp.gt.f32.partialorder %v1888, 0.0
        %vm2456 = vcmp.gt.f32.partialorder %v2079, 0.0
        %vm2457 = vcmp.gt.f32.partialorder %v2081, 0.0
        %vm2458 = vcmp.gt.f32.partialorder %v2272, 0.0
        %vm2459 = vcmp.gt.f32.partialorder %v2274, 0.0
        %vm2460 = vcmp.gt.f32.partialorder %v1699, 0.0
        %vm2461 = vcmp.gt.f32.partialorder %v1701, 0.0
        %vm2462 = vcmp.gt.f32.partialorder %v1892, 0.0
        %vm2463 = vcmp.gt.f32.partialorder %v1894, 0.0
        %vm2464 = vcmp.gt.f32.partialorder %v2085, 0.0
        %vm2465 = vcmp.gt.f32.partialorder %v2087, 0.0
        %vm2466 = vcmp.gt.f32.partialorder %v2278, 0.0
        %vm2467 = vcmp.gt.f32.partialorder %v2280, 0.0
        %vm2468 = vcmp.gt.f32.partialorder %v1703, 0.0
        %vm2469 = vcmp.gt.f32.partialorder %v1705, 0.0
        %vm2470 = vcmp.gt.f32.partialorder %v1896, 0.0
        %vm2471 = vcmp.gt.f32.partialorder %v1898, 0.0
        %vm2472 = vcmp.gt.f32.partialorder %v2089, 0.0
        %vm2473 = vcmp.gt.f32.partialorder %v2091, 0.0
        %vm2474 = vcmp.gt.f32.partialorder %v2282, 0.0
        %vm2475 = vcmp.gt.f32.partialorder %v2284, 0.0
        %vm2476 = vcmp.gt.f32.partialorder %v1709, 0.0
        %vm2477 = vcmp.gt.f32.partialorder %v1711, 0.0
        %vm2478 = vcmp.gt.f32.partialorder %v1902, 0.0
        %vm2479 = vcmp.gt.f32.partialorder %v1904, 0.0
        %vm2480 = vcmp.gt.f32.partialorder %v2095, 0.0
        %vm2481 = vcmp.gt.f32.partialorder %v2097, 0.0
        %vm2482 = vcmp.gt.f32.partialorder %v2288, 0.0
        %vm2483 = vcmp.gt.f32.partialorder %v2290, 0.0
        %vm2484 = vcmp.gt.f32.partialorder %v1713, 0.0
        %vm2485 = vcmp.gt.f32.partialorder %v1715, 0.0
        %vm2486 = vcmp.gt.f32.partialorder %v1906, 0.0
        %vm2487 = vcmp.gt.f32.partialorder %v1908, 0.0
        %vm2488 = vcmp.gt.f32.partialorder %v2099, 0.0
        %vm2489 = vcmp.gt.f32.partialorder %v2101, 0.0
        %vm2490 = vcmp.gt.f32.partialorder %v2292, 0.0
        %vm2491 = vcmp.gt.f32.partialorder %v2294, 0.0
        %vm2492 = vcmp.gt.f32.partialorder %v1719, 0.0
        %vm2493 = vcmp.gt.f32.partialorder %v1721, 0.0
        %vm2494 = vcmp.gt.f32.partialorder %v1912, 0.0
        %vm2495 = vcmp.gt.f32.partialorder %v1914, 0.0
        %vm2496 = vcmp.gt.f32.partialorder %v2105, 0.0
        %vm2497 = vcmp.gt.f32.partialorder %v2107, 0.0
        %vm2498 = vcmp.gt.f32.partialorder %v2298, 0.0
        %vm2499 = vcmp.gt.f32.partialorder %v2300, 0.0
        %vm2500 = vcmp.gt.f32.partialorder %v1723, 0.0
        %vm2501 = vcmp.gt.f32.partialorder %v1725, 0.0
        %vm2502 = vcmp.gt.f32.partialorder %v1916, 0.0
        %vm2503 = vcmp.gt.f32.partialorder %v1918, 0.0
        %vm2504 = vcmp.gt.f32.partialorder %v2109, 0.0
        %vm2505 = vcmp.gt.f32.partialorder %v2111, 0.0
        %vm2506 = vcmp.gt.f32.partialorder %v2302, 0.0
        %vm2507 = vcmp.gt.f32.partialorder %v2304, 0.0
        %vm2508 = vcmp.gt.f32.partialorder %v1729, 0.0
        %vm2509 = vcmp.gt.f32.partialorder %v1731, 0.0
        %vm2510 = vcmp.gt.f32.partialorder %v1922, 0.0
        %vm2511 = vcmp.gt.f32.partialorder %v1924, 0.0
        %vm2512 = vcmp.gt.f32.partialorder %v2115, 0.0
        %vm2513 = vcmp.gt.f32.partialorder %v2117, 0.0
        %vm2514 = vcmp.gt.f32.partialorder %v2308, 0.0
        %vm2515 = vcmp.gt.f32.partialorder %v2310, 0.0
        %vm2516 = vcmp.gt.f32.partialorder %v1733, 0.0
        %vm2517 = vcmp.gt.f32.partialorder %v1735, 0.0
        %vm2518 = vcmp.gt.f32.partialorder %v1926, 0.0
        %vm2519 = vcmp.gt.f32.partialorder %v1928, 0.0
        %vm2520 = vcmp.gt.f32.partialorder %v2119, 0.0
        %vm2521 = vcmp.gt.f32.partialorder %v2121, 0.0
        %vm2522 = vcmp.gt.f32.partialorder %v2312, 0.0
        %vm2523 = vcmp.gt.f32.partialorder %v2314, 0.0
        %vm2524 = vcmp.gt.f32.partialorder %v1739, 0.0
        %vm2525 = vcmp.gt.f32.partialorder %v1741, 0.0
        %vm2526 = vcmp.gt.f32.partialorder %v1932, 0.0
        %vm2527 = vcmp.gt.f32.partialorder %v1934, 0.0
        %vm2528 = vcmp.gt.f32.partialorder %v2125, 0.0
        %vm2529 = vcmp.gt.f32.partialorder %v2127, 0.0
        %vm2530 = vcmp.gt.f32.partialorder %v2318, 0.0
        %vm2531 = vcmp.gt.f32.partialorder %v2320, 0.0
        %vm2532 = vcmp.gt.f32.partialorder %v1743, 0.0
        %vm2533 = vcmp.gt.f32.partialorder %v1745, 0.0
        %vm2534 = vcmp.gt.f32.partialorder %v1936, 0.0
        %vm2535 = vcmp.gt.f32.partialorder %v1938, 0.0
        %vm2536 = vcmp.gt.f32.partialorder %v2129, 0.0
        %vm2537 = vcmp.gt.f32.partialorder %v2131, 0.0
        %vm2538 = vcmp.gt.f32.partialorder %v2322, 0.0
        %vm2539 = vcmp.gt.f32.partialorder %v2324, 0.0
        %vm2540 = vcmp.gt.f32.partialorder %v1749, 0.0
        %vm2541 = vcmp.gt.f32.partialorder %v1751, 0.0
        %vm2542 = vcmp.gt.f32.partialorder %v1942, 0.0
        %vm2543 = vcmp.gt.f32.partialorder %v1944, 0.0
        %vm2544 = vcmp.gt.f32.partialorder %v2135, 0.0
        %vm2545 = vcmp.gt.f32.partialorder %v2137, 0.0
        %vm2546 = vcmp.gt.f32.partialorder %v2328, 0.0
        %vm2547 = vcmp.gt.f32.partialorder %v2330, 0.0
        %vm2548 = vcmp.gt.f32.partialorder %v1753, 0.0
        %vm2549 = vcmp.gt.f32.partialorder %v1755, 0.0
        %vm2550 = vcmp.gt.f32.partialorder %v1946, 0.0
        %vm2551 = vcmp.gt.f32.partialorder %v1948, 0.0
        %vm2552 = vcmp.gt.f32.partialorder %v2139, 0.0
        %vm2553 = vcmp.gt.f32.partialorder %v2141, 0.0
        %vm2554 = vcmp.gt.f32.partialorder %v2332, 0.0
        %vm2555 = vcmp.gt.f32.partialorder %v2334, 0.0
        %vm2556 = vcmp.gt.f32.partialorder %v1759, 0.0
        %vm2557 = vcmp.gt.f32.partialorder %v1761, 0.0
        %vm2558 = vcmp.gt.f32.partialorder %v1952, 0.0
        %vm2559 = vcmp.gt.f32.partialorder %v1954, 0.0
        %vm2560 = vcmp.gt.f32.partialorder %v2145, 0.0
        %vm2561 = vcmp.gt.f32.partialorder %v2147, 0.0
        %vm2562 = vcmp.gt.f32.partialorder %v2338, 0.0
        %vm2563 = vcmp.gt.f32.partialorder %v2340, 0.0
        %vm2564 = vcmp.gt.f32.partialorder %v1763, 0.0
        %vm2565 = vcmp.gt.f32.partialorder %v1765, 0.0
        %vm2566 = vcmp.gt.f32.partialorder %v1956, 0.0
        %vm2567 = vcmp.gt.f32.partialorder %v1958, 0.0
        %vm2568 = vcmp.gt.f32.partialorder %v2149, 0.0
        %vm2569 = vcmp.gt.f32.partialorder %v2151, 0.0
        %vm2570 = vcmp.gt.f32.partialorder %v2342, 0.0
        %vm2571 = vcmp.gt.f32.partialorder %v2344, 0.0
        %vm2572 = vcmp.gt.f32.partialorder %v1769, 0.0
        %vm2573 = vcmp.gt.f32.partialorder %v1771, 0.0
        %vm2574 = vcmp.gt.f32.partialorder %v1962, 0.0
        %vm2575 = vcmp.gt.f32.partialorder %v1964, 0.0
        %vm2576 = vcmp.gt.f32.partialorder %v2155, 0.0
        %vm2577 = vcmp.gt.f32.partialorder %v2157, 0.0
        %vm2578 = vcmp.gt.f32.partialorder %v2348, 0.0
        %vm2579 = vcmp.gt.f32.partialorder %v2350, 0.0
        %vm2580 = vcmp.gt.f32.partialorder %v1773, 0.0
        %vm2581 = vcmp.gt.f32.partialorder %v1775, 0.0
        %vm2582 = vcmp.gt.f32.partialorder %v1966, 0.0
        %vm2583 = vcmp.gt.f32.partialorder %v1968, 0.0
        %vm2584 = vcmp.gt.f32.partialorder %v2159, 0.0
        %vm2585 = vcmp.gt.f32.partialorder %v2161, 0.0
        %vm2586 = vcmp.gt.f32.partialorder %v2352, 0.0
        %vm2587 = vcmp.gt.f32.partialorder %v2354, 0.0
        %vm2588 = vcmp.gt.f32.partialorder %v1779, 0.0
        %vm2589 = vcmp.gt.f32.partialorder %v1781, 0.0
        %vm2590 = vcmp.gt.f32.partialorder %v1972, 0.0
        %vm2591 = vcmp.gt.f32.partialorder %v1974, 0.0
        %vm2592 = vcmp.gt.f32.partialorder %v2165, 0.0
        %vm2593 = vcmp.gt.f32.partialorder %v2167, 0.0
        %vm2594 = vcmp.gt.f32.partialorder %v2358, 0.0
        %vm2595 = vcmp.gt.f32.partialorder %v2360, 0.0
        %vm2596 = vcmp.gt.f32.partialorder %v1783, 0.0
        %vm2597 = vcmp.gt.f32.partialorder %v1785, 0.0
        %vm2598 = vcmp.gt.f32.partialorder %v1976, 0.0
        %vm2599 = vcmp.gt.f32.partialorder %v1978, 0.0
        %vm2600 = vcmp.gt.f32.partialorder %v2169, 0.0
        %vm2601 = vcmp.gt.f32.partialorder %v2171, 0.0
        %vm2602 = vcmp.gt.f32.partialorder %v2362, 0.0
        %vm2603 = vcmp.gt.f32.partialorder %v2364, 0.0
        %vm2604 = vcmp.gt.f32.partialorder %v1789, 0.0
        %vm2605 = vcmp.gt.f32.partialorder %v1791, 0.0
        %vm2606 = vcmp.gt.f32.partialorder %v1982, 0.0
        %vm2607 = vcmp.gt.f32.partialorder %v1984, 0.0
        %vm2608 = vcmp.gt.f32.partialorder %v2175, 0.0
        %vm2609 = vcmp.gt.f32.partialorder %v2177, 0.0
        %vm2610 = vcmp.gt.f32.partialorder %v2368, 0.0
        %vm2611 = vcmp.gt.f32.partialorder %v2370, 0.0
        %vm2612 = vcmp.gt.f32.partialorder %v1793, 0.0
        %vm2613 = vcmp.gt.f32.partialorder %v1795, 0.0
        %vm2614 = vcmp.gt.f32.partialorder %v1986, 0.0
        %vm2615 = vcmp.gt.f32.partialorder %v1988, 0.0
        %vm2616 = vcmp.gt.f32.partialorder %v2179, 0.0
        %vm2617 = vcmp.gt.f32.partialorder %v2181, 0.0
        %vm2618 = vcmp.gt.f32.partialorder %v2372, 0.0
        %vm2619 = vcmp.gt.f32.partialorder %v2374, 0.0
        %vm2620 = vcmp.gt.f32.partialorder %v1799, 0.0
        %vm2621 = vcmp.gt.f32.partialorder %v1801, 0.0
        %vm2622 = vcmp.gt.f32.partialorder %v1992, 0.0
        %vm2623 = vcmp.gt.f32.partialorder %v1994, 0.0
        %vm2624 = vcmp.gt.f32.partialorder %v2185, 0.0
        %vm2625 = vcmp.gt.f32.partialorder %v2187, 0.0
        %vm2626 = vcmp.gt.f32.partialorder %v2378, 0.0
        %vm2627 = vcmp.gt.f32.partialorder %v2380, 0.0
        %vm2628 = vcmp.gt.f32.partialorder %v1803, 0.0
        %vm2629 = vcmp.gt.f32.partialorder %v1805, 0.0
        %vm2630 = vcmp.gt.f32.partialorder %v1996, 0.0
        %vm2631 = vcmp.gt.f32.partialorder %v1998, 0.0
        %vm2632 = vcmp.gt.f32.partialorder %v2189, 0.0
        %vm2633 = vcmp.gt.f32.partialorder %v2191, 0.0
        %vm2634 = vcmp.gt.f32.partialorder %v2382, 0.0
        %vm2635 = vcmp.gt.f32.partialorder %v2384, 0.0
        %vm2636 = vcmp.gt.f32.partialorder %v1809, 0.0
        %vm2637 = vcmp.gt.f32.partialorder %v1811, 0.0
        %vm2638 = vcmp.gt.f32.partialorder %v2002, 0.0
        %vm2639 = vcmp.gt.f32.partialorder %v2004, 0.0
        %vm2640 = vcmp.gt.f32.partialorder %v2195, 0.0
        %vm2641 = vcmp.gt.f32.partialorder %v2197, 0.0
        %vm2642 = vcmp.gt.f32.partialorder %v2388, 0.0
        %vm2643 = vcmp.gt.f32.partialorder %v2390, 0.0
        %vm2644 = vcmp.gt.f32.partialorder %v1813, 0.0
        %vm2645 = vcmp.gt.f32.partialorder %v1815, 0.0
        %vm2646 = vcmp.gt.f32.partialorder %v2006, 0.0
        %vm2647 = vcmp.gt.f32.partialorder %v2008, 0.0
        %vm2648 = vcmp.gt.f32.partialorder %v2199, 0.0
        %vm2649 = vcmp.gt.f32.partialorder %v2201, 0.0
        %vm2650 = vcmp.gt.f32.partialorder %v2392, 0.0
        %vm2651 = vcmp.gt.f32.partialorder %v2394, 0.0
        %v2652 = vmul.f32 %v1659, 0.01
        %v2653 = vmul.f32 %v1661, 0.01
        %v2654 = vmul.f32 %v1852, 0.01
        %v2655 = vmul.f32 %v1854, 0.01
        %v2656 = vmul.f32 %v2045, 0.01
        %v2657 = vmul.f32 %v2047, 0.01
        %v2658 = vmul.f32 %v2238, 0.01
        %v2659 = vmul.f32 %v2240, 0.01
        %v2660 = vmul.f32 %v1663, 0.01
        %v2661 = vmul.f32 %v1665, 0.01
        %v2662 = vmul.f32 %v1856, 0.01
        %v2663 = vmul.f32 %v1858, 0.01
        %v2664 = vmul.f32 %v2049, 0.01
        %v2665 = vmul.f32 %v2051, 0.01
        %v2666 = vmul.f32 %v2242, 0.01
        %v2667 = vmul.f32 %v2244, 0.01
        %v2668 = vmul.f32 %v1669, 0.01
        %v2669 = vmul.f32 %v1671, 0.01
        %v2670 = vmul.f32 %v1862, 0.01
        %v2671 = vmul.f32 %v1864, 0.01
        %v2672 = vmul.f32 %v2055, 0.01
        %v2673 = vmul.f32 %v2057, 0.01
        %v2674 = vmul.f32 %v2248, 0.01
        %v2675 = vmul.f32 %v2250, 0.01
        %v2676 = vmul.f32 %v1673, 0.01
        %v2677 = vmul.f32 %v1675, 0.01
        %v2678 = vmul.f32 %v1866, 0.01
        %v2679 = vmul.f32 %v1868, 0.01
        %v2680 = vmul.f32 %v2059, 0.01
        %v2681 = vmul.f32 %v2061, 0.01
        %v2682 = vmul.f32 %v2252, 0.01
        %v2683 = vmul.f32 %v2254, 0.01
        %v2684 = vmul.f32 %v1679, 0.01
        %v2685 = vmul.f32 %v1681, 0.01
        %v2686 = vmul.f32 %v1872, 0.01
        %v2687 = vmul.f32 %v1874, 0.01
        %v2688 = vmul.f32 %v2065, 0.01
        %v2689 = vmul.f32 %v2067, 0.01
        %v2690 = vmul.f32 %v2258, 0.01
        %v2691 = vmul.f32 %v2260, 0.01
        %v2692 = vmul.f32 %v1683, 0.01
        %v2693 = vmul.f32 %v1685, 0.01
        %v2694 = vmul.f32 %v1876, 0.01
        %v2695 = vmul.f32 %v1878, 0.01
        %v2696 = vmul.f32 %v2069, 0.01
        %v2697 = vmul.f32 %v2071, 0.01
        %v2698 = vmul.f32 %v2262, 0.01
        %v2699 = vmul.f32 %v2264, 0.01
        %v2700 = vmul.f32 %v1689, 0.01
        %v2701 = vmul.f32 %v1691, 0.01
        %v2702 = vmul.f32 %v1882, 0.01
        %v2703 = vmul.f32 %v1884, 0.01
        %v2704 = vmul.f32 %v2075, 0.01
        %v2705 = vmul.f32 %v2077, 0.01
        %v2706 = vmul.f32 %v2268, 0.01
        %v2707 = vmul.f32 %v2270, 0.01
        %v2708 = vmul.f32 %v1693, 0.01
        %v2709 = vmul.f32 %v1695, 0.01
        %v2710 = vmul.f32 %v1886, 0.01
        %v2711 = vmul.f32 %v1888, 0.01
        %v2712 = vmul.f32 %v2079, 0.01
        %v2713 = vmul.f32 %v2081, 0.01
        %v2714 = vmul.f32 %v2272, 0.01
        %v2715 = vmul.f32 %v2274, 0.01
        %v2716 = vmul.f32 %v1699, 0.01
        %v2717 = vmul.f32 %v1701, 0.01
        %v2718 = vmul.f32 %v1892, 0.01
        %v2719 = vmul.f32 %v1894, 0.01
        %v2720 = vmul.f32 %v2085, 0.01
        %v2721 = vmul.f32 %v2087, 0.01
        %v2722 = vmul.f32 %v2278, 0.01
        %v2723 = vmul.f32 %v2280, 0.01
        %v2724 = vmul.f32 %v1703, 0.01
        %v2725 = vmul.f32 %v1705, 0.01
        %v2726 = vmul.f32 %v1896, 0.01
        %v2727 = vmul.f32 %v1898, 0.01
        %v2728 = vmul.f32 %v2089, 0.01
        %v2729 = vmul.f32 %v2091, 0.01
        %v2730 = vmul.f32 %v2282, 0.01
        %v2731 = vmul.f32 %v2284, 0.01
        %v2732 = vmul.f32 %v1709, 0.01
        %v2733 = vmul.f32 %v1711, 0.01
        %v2734 = vmul.f32 %v1902, 0.01
        %v2735 = vmul.f32 %v1904, 0.01
        %v2736 = vmul.f32 %v2095, 0.01
        %v2737 = vmul.f32 %v2097, 0.01
        %v2738 = vmul.f32 %v2288, 0.01
        %v2739 = vmul.f32 %v2290, 0.01
        %v2740 = vmul.f32 %v1713, 0.01
        %v2741 = vmul.f32 %v1715, 0.01
        %v2742 = vmul.f32 %v1906, 0.01
        %v2743 = vmul.f32 %v1908, 0.01
        %v2744 = vmul.f32 %v2099, 0.01
        %v2745 = vmul.f32 %v2101, 0.01
        %v2746 = vmul.f32 %v2292, 0.01
        %v2747 = vmul.f32 %v2294, 0.01
        %v2748 = vmul.f32 %v1719, 0.01
        %v2749 = vmul.f32 %v1721, 0.01
        %v2750 = vmul.f32 %v1912, 0.01
        %v2751 = vmul.f32 %v1914, 0.01
        %v2752 = vmul.f32 %v2105, 0.01
        %v2753 = vmul.f32 %v2107, 0.01
        %v2754 = vmul.f32 %v2298, 0.01
        %v2755 = vmul.f32 %v2300, 0.01
        %v2756 = vmul.f32 %v1723, 0.01
        %v2757 = vmul.f32 %v1725, 0.01
        %v2758 = vmul.f32 %v1916, 0.01
        %v2759 = vmul.f32 %v1918, 0.01
        %v2760 = vmul.f32 %v2109, 0.01
        %v2761 = vmul.f32 %v2111, 0.01
        %v2762 = vmul.f32 %v2302, 0.01
        %v2763 = vmul.f32 %v2304, 0.01
        %v2764 = vmul.f32 %v1729, 0.01
        %v2765 = vmul.f32 %v1731, 0.01
        %v2766 = vmul.f32 %v1922, 0.01
        %v2767 = vmul.f32 %v1924, 0.01
        %v2768 = vmul.f32 %v2115, 0.01
        %v2769 = vmul.f32 %v2117, 0.01
        %v2770 = vmul.f32 %v2308, 0.01
        %v2771 = vmul.f32 %v2310, 0.01
        %v2772 = vmul.f32 %v1733, 0.01
        %v2773 = vmul.f32 %v1735, 0.01
        %v2774 = vmul.f32 %v1926, 0.01
        %v2775 = vmul.f32 %v1928, 0.01
        %v2776 = vmul.f32 %v2119, 0.01
        %v2777 = vmul.f32 %v2121, 0.01
        %v2778 = vmul.f32 %v2312, 0.01
        %v2779 = vmul.f32 %v2314, 0.01
        %v2780 = vmul.f32 %v1739, 0.01
        %v2781 = vmul.f32 %v1741, 0.01
        %v2782 = vmul.f32 %v1932, 0.01
        %v2783 = vmul.f32 %v1934, 0.01
        %v2784 = vmul.f32 %v2125, 0.01
        %v2785 = vmul.f32 %v2127, 0.01
        %v2786 = vmul.f32 %v2318, 0.01
        %v2787 = vmul.f32 %v2320, 0.01
        %v2788 = vmul.f32 %v1743, 0.01
        %v2789 = vmul.f32 %v1745, 0.01
        %v2790 = vmul.f32 %v1936, 0.01
        %v2791 = vmul.f32 %v1938, 0.01
        %v2792 = vmul.f32 %v2129, 0.01
        %v2793 = vmul.f32 %v2131, 0.01
        %v2794 = vmul.f32 %v2322, 0.01
        %v2795 = vmul.f32 %v2324, 0.01
        %v2796 = vmul.f32 %v1749, 0.01
        %v2797 = vmul.f32 %v1751, 0.01
        %v2798 = vmul.f32 %v1942, 0.01
        %v2799 = vmul.f32 %v1944, 0.01
        %v2800 = vmul.f32 %v2135, 0.01
        %v2801 = vmul.f32 %v2137, 0.01
        %v2802 = vmul.f32 %v2328, 0.01
        %v2803 = vmul.f32 %v2330, 0.01
        %v2804 = vmul.f32 %v1753, 0.01
        %v2805 = vmul.f32 %v1755, 0.01
        %v2806 = vmul.f32 %v1946, 0.01
        %v2807 = vmul.f32 %v1948, 0.01
        %v2808 = vmul.f32 %v2139, 0.01
        %v2809 = vmul.f32 %v2141, 0.01
        %v2810 = vmul.f32 %v2332, 0.01
        %v2811 = vmul.f32 %v2334, 0.01
        %v2812 = vmul.f32 %v1759, 0.01
        %v2813 = vmul.f32 %v1761, 0.01
        %v2814 = vmul.f32 %v1952, 0.01
        %v2815 = vmul.f32 %v1954, 0.01
        %v2816 = vmul.f32 %v2145, 0.01
        %v2817 = vmul.f32 %v2147, 0.01
        %v2818 = vmul.f32 %v2338, 0.01
        %v2819 = vmul.f32 %v2340, 0.01
        %v2820 = vmul.f32 %v1763, 0.01
        %v2821 = vmul.f32 %v1765, 0.01
        %v2822 = vmul.f32 %v1956, 0.01
        %v2823 = vmul.f32 %v1958, 0.01
        %v2824 = vmul.f32 %v2149, 0.01
        %v2825 = vmul.f32 %v2151, 0.01
        %v2826 = vmul.f32 %v2342, 0.01
        %v2827 = vmul.f32 %v2344, 0.01
        %v2828 = vmul.f32 %v1769, 0.01
        %v2829 = vmul.f32 %v1771, 0.01
        %v2830 = vmul.f32 %v1962, 0.01
        %v2831 = vmul.f32 %v1964, 0.01
        %v2832 = vmul.f32 %v2155, 0.01
        %v2833 = vmul.f32 %v2157, 0.01
        %v2834 = vmul.f32 %v2348, 0.01
        %v2835 = vmul.f32 %v2350, 0.01
        %v2836 = vmul.f32 %v1773, 0.01
        %v2837 = vmul.f32 %v1775, 0.01
        %v2838 = vmul.f32 %v1966, 0.01
        %v2839 = vmul.f32 %v1968, 0.01
        %v2840 = vmul.f32 %v2159, 0.01
        %v2841 = vmul.f32 %v2161, 0.01
        %v2842 = vmul.f32 %v2352, 0.01
        %v2843 = vmul.f32 %v2354, 0.01
        %v2844 = vmul.f32 %v1779, 0.01
        %v2845 = vmul.f32 %v1781, 0.01
        %v2846 = vmul.f32 %v1972, 0.01
        %v2847 = vmul.f32 %v1974, 0.01
        %v2848 = vmul.f32 %v2165, 0.01
        %v2849 = vmul.f32 %v2167, 0.01
        %v2850 = vmul.f32 %v2358, 0.01
        %v2851 = vmul.f32 %v2360, 0.01
        %v2852 = vmul.f32 %v1783, 0.01
        %v2853 = vmul.f32 %v1785, 0.01
        %v2854 = vmul.f32 %v1976, 0.01
        %v2855 = vmul.f32 %v1978, 0.01
        %v2856 = vmul.f32 %v2169, 0.01
        %v2857 = vmul.f32 %v2171, 0.01
        %v2858 = vmul.f32 %v2362, 0.01
        %v2859 = vmul.f32 %v2364, 0.01
        %v2860 = vmul.f32 %v1789, 0.01
        %v2861 = vmul.f32 %v1791, 0.01
        %v2862 = vmul.f32 %v1982, 0.01
        %v2863 = vmul.f32 %v1984, 0.01
        %v2864 = vmul.f32 %v2175, 0.01
        %v2865 = vmul.f32 %v2177, 0.01
        %v2866 = vmul.f32 %v2368, 0.01
        %v2867 = vmul.f32 %v2370, 0.01
        %v2868 = vmul.f32 %v1793, 0.01
        %v2869 = vmul.f32 %v1795, 0.01
        %v2870 = vmul.f32 %v1986, 0.01
        %v2871 = vmul.f32 %v1988, 0.01
        %v2872 = vmul.f32 %v2179, 0.01
        %v2873 = vmul.f32 %v2181, 0.01
        %v2874 = vmul.f32 %v2372, 0.01
        %v2875 = vmul.f32 %v2374, 0.01
        %v2876 = vmul.f32 %v1799, 0.01
        %v2877 = vmul.f32 %v1801, 0.01
        %v2878 = vmul.f32 %v1992, 0.01
        %v2879 = vmul.f32 %v1994, 0.01
        %v2880 = vmul.f32 %v2185, 0.01
        %v2881 = vmul.f32 %v2187, 0.01
        %v2882 = vmul.f32 %v2378, 0.01
        %v2883 = vmul.f32 %v2380, 0.01
        %v2884 = vmul.f32 %v1803, 0.01
        %v2885 = vmul.f32 %v1805, 0.01
        %v2886 = vmul.f32 %v1996, 0.01
        %v2887 = vmul.f32 %v1998, 0.01
        %v2888 = vmul.f32 %v2189, 0.01
        %v2889 = vmul.f32 %v2191, 0.01
        %v2890 = vmul.f32 %v2382, 0.01
        %v2891 = vmul.f32 %v2384, 0.01
        %v2892 = vmul.f32 %v1809, 0.01
        %v2893 = vmul.f32 %v1811, 0.01
        %v2894 = vmul.f32 %v2002, 0.01
        %v2895 = vmul.f32 %v2004, 0.01
        %v2896 = vmul.f32 %v2195, 0.01
        %v2897 = vmul.f32 %v2197, 0.01
        %v2898 = vmul.f32 %v2388, 0.01
        %v2899 = vmul.f32 %v2390, 0.01
        %v2900 = vmul.f32 %v1813, 0.01
        %v2901 = vmul.f32 %v1815, 0.01
        %v2902 = vmul.f32 %v2006, 0.01
        %v2903 = vmul.f32 %v2008, 0.01
        %v2904 = vmul.f32 %v2199, 0.01
        %v2905 = vmul.f32 %v2201, 0.01
        %v2906 = vmul.f32 %v2392, 0.01
        %v2907 = vmul.f32 %v2394, 0.01
        %v2908 = vsel %vm2396, %v1659, %v2652
        %v2909 = vsel %vm2397, %v1661, %v2653
        %v2910 = vsel %vm2398, %v1852, %v2654
        %v2911 = vsel %vm2399, %v1854, %v2655
        %v2912 = vsel %vm2400, %v2045, %v2656
        %v2913 = vsel %vm2401, %v2047, %v2657
        %v2914 = vsel %vm2402, %v2238, %v2658
        %v2915 = vsel %vm2403, %v2240, %v2659
        %v2916 = vsel %vm2404, %v1663, %v2660
        %v2917 = vsel %vm2405, %v1665, %v2661
        %v2918 = vsel %vm2406, %v1856, %v2662
        %v2919 = vsel %vm2407, %v1858, %v2663
        %v2920 = vsel %vm2408, %v2049, %v2664
        %v2921 = vsel %vm2409, %v2051, %v2665
        %v2922 = vsel %vm2410, %v2242, %v2666
        %v2923 = vsel %vm2411, %v2244, %v2667
        %v2924 = vsel %vm2412, %v1669, %v2668
        %v2925 = vsel %vm2413, %v1671, %v2669
        %v2926 = vsel %vm2414, %v1862, %v2670
        %v2927 = vsel %vm2415, %v1864, %v2671
        %v2928 = vsel %vm2416, %v2055, %v2672
        %v2929 = vsel %vm2417, %v2057, %v2673
        %v2930 = vsel %vm2418, %v2248, %v2674
        %v2931 = vsel %vm2419, %v2250, %v2675
        %v2932 = vsel %vm2420, %v1673, %v2676
        %v2933 = vsel %vm2421, %v1675, %v2677
        %v2934 = vsel %vm2422, %v1866, %v2678
        %v2935 = vsel %vm2423, %v1868, %v2679
        %v2936 = vsel %vm2424, %v2059, %v2680
        %v2937 = vsel %vm2425, %v2061, %v2681
        %v2938 = vsel %vm2426, %v2252, %v2682
        %v2939 = vsel %vm2427, %v2254, %v2683
        %v2940 = vsel %vm2428, %v1679, %v2684
        %v2941 = vsel %vm2429, %v1681, %v2685
        %v2942 = vsel %vm2430, %v1872, %v2686
        %v2943 = vsel %vm2431, %v1874, %v2687
        %v2944 = vsel %vm2432, %v2065, %v2688
        %v2945 = vsel %vm2433, %v2067, %v2689
        %v2946 = vsel %vm2434, %v2258, %v2690
        %v2947 = vsel %vm2435, %v2260, %v2691
        %v2948 = vsel %vm2436, %v1683, %v2692
        %v2949 = vsel %vm2437, %v1685, %v2693
        %v2950 = vsel %vm2438, %v1876, %v2694
        %v2951 = vsel %vm2439, %v1878, %v2695
        %v2952 = vsel %vm2440, %v2069, %v2696
        %v2953 = vsel %vm2441, %v2071, %v2697
        %v2954 = vsel %vm2442, %v2262, %v2698
        %v2955 = vsel %vm2443, %v2264, %v2699
        %v2956 = vsel %vm2444, %v1689, %v2700
        %v2957 = vsel %vm2445, %v1691, %v2701
        %v2958 = vsel %vm2446, %v1882, %v2702
        %v2959 = vsel %vm2447, %v1884, %v2703
        %v2960 = vsel %vm2448, %v2075, %v2704
        %v2961 = vsel %vm2449, %v2077, %v2705
        %v2962 = vsel %vm2450, %v2268, %v2706
        %v2963 = vsel %vm2451, %v2270, %v2707
        %v2964 = vsel %vm2452, %v1693, %v2708
        %v2965 = vsel %vm2453, %v1695, %v2709
        %v2966 = vsel %vm2454, %v1886, %v2710
        %v2967 = vsel %vm2455, %v1888, %v2711
        %v2968 = vsel %vm2456, %v2079, %v2712
        %v2969 = vsel %vm2457, %v2081, %v2713
        %v2970 = vsel %vm2458, %v2272, %v2714
        %v2971 = vsel %vm2459, %v2274, %v2715
        %v2972 = vsel %vm2460, %v1699, %v2716
        %v2973 = vsel %vm2461, %v1701, %v2717
        %v2974 = vsel %vm2462, %v1892, %v2718
        %v2975 = vsel %vm2463, %v1894, %v2719
        %v2976 = vsel %vm2464, %v2085, %v2720
        %v2977 = vsel %vm2465, %v2087, %v2721
        %v2978 = vsel %vm2466, %v2278, %v2722
        %v2979 = vsel %vm2467, %v2280, %v2723
        %v2980 = vsel %vm2468, %v1703, %v2724
        %v2981 = vsel %vm2469, %v1705, %v2725
        %v2982 = vsel %vm2470, %v1896, %v2726
        %v2983 = vsel %vm2471, %v1898, %v2727
        %v2984 = vsel %vm2472, %v2089, %v2728
        %v2985 = vsel %vm2473, %v2091, %v2729
        %v2986 = vsel %vm2474, %v2282, %v2730
        %v2987 = vsel %vm2475, %v2284, %v2731
        %v2988 = vsel %vm2476, %v1709, %v2732
        %v2989 = vsel %vm2477, %v1711, %v2733
        %v2990 = vsel %vm2478, %v1902, %v2734
        %v2991 = vsel %vm2479, %v1904, %v2735
        %v2992 = vsel %vm2480, %v2095, %v2736
        %v2993 = vsel %vm2481, %v2097, %v2737
        %v2994 = vsel %vm2482, %v2288, %v2738
        %v2995 = vsel %vm2483, %v2290, %v2739
        %v2996 = vsel %vm2484, %v1713, %v2740
        %v2997 = vsel %vm2485, %v1715, %v2741
        %v2998 = vsel %vm2486, %v1906, %v2742
        %v2999 = vsel %vm2487, %v1908, %v2743
        %v3000 = vsel %vm2488, %v2099, %v2744
        %v3001 = vsel %vm2489, %v2101, %v2745
        %v3002 = vsel %vm2490, %v2292, %v2746
        %v3003 = vsel %vm2491, %v2294, %v2747
        %v3004 = vsel %vm2492, %v1719, %v2748
        %v3005 = vsel %vm2493, %v1721, %v2749
        %v3006 = vsel %vm2494, %v1912, %v2750
        %v3007 = vsel %vm2495, %v1914, %v2751
        %v3008 = vsel %vm2496, %v2105, %v2752
        %v3009 = vsel %vm2497, %v2107, %v2753
        %v3010 = vsel %vm2498, %v2298, %v2754
        %v3011 = vsel %vm2499, %v2300, %v2755
        %v3012 = vsel %vm2500, %v1723, %v2756
        %v3013 = vsel %vm2501, %v1725, %v2757
        %v3014 = vsel %vm2502, %v1916, %v2758
        %v3015 = vsel %vm2503, %v1918, %v2759
        %v3016 = vsel %vm2504, %v2109, %v2760
        %v3017 = vsel %vm2505, %v2111, %v2761
        %v3018 = vsel %vm2506, %v2302, %v2762
        %v3019 = vsel %vm2507, %v2304, %v2763
        %v3020 = vsel %vm2508, %v1729, %v2764
        %v3021 = vsel %vm2509, %v1731, %v2765
        %v3022 = vsel %vm2510, %v1922, %v2766
        %v3023 = vsel %vm2511, %v1924, %v2767
        %v3024 = vsel %vm2512, %v2115, %v2768
        %v3025 = vsel %vm2513, %v2117, %v2769
        %v3026 = vsel %vm2514, %v2308, %v2770
        %v3027 = vsel %vm2515, %v2310, %v2771
        %v3028 = vsel %vm2516, %v1733, %v2772
        %v3029 = vsel %vm2517, %v1735, %v2773
        %v3030 = vsel %vm2518, %v1926, %v2774
        %v3031 = vsel %vm2519, %v1928, %v2775
        %v3032 = vsel %vm2520, %v2119, %v2776
        %v3033 = vsel %vm2521, %v2121, %v2777
        %v3034 = vsel %vm2522, %v2312, %v2778
        %v3035 = vsel %vm2523, %v2314, %v2779
        %v3036 = vsel %vm2524, %v1739, %v2780
        %v3037 = vsel %vm2525, %v1741, %v2781
        %v3038 = vsel %vm2526, %v1932, %v2782
        %v3039 = vsel %vm2527, %v1934, %v2783
        %v3040 = vsel %vm2528, %v2125, %v2784
        %v3041 = vsel %vm2529, %v2127, %v2785
        %v3042 = vsel %vm2530, %v2318, %v2786
        %v3043 = vsel %vm2531, %v2320, %v2787
        %v3044 = vsel %vm2532, %v1743, %v2788
        %v3045 = vsel %vm2533, %v1745, %v2789
        %v3046 = vsel %vm2534, %v1936, %v2790
        %v3047 = vsel %vm2535, %v1938, %v2791
        %v3048 = vsel %vm2536, %v2129, %v2792
        %v3049 = vsel %vm2537, %v2131, %v2793
        %v3050 = vsel %vm2538, %v2322, %v2794
        %v3051 = vsel %vm2539, %v2324, %v2795
        %v3052 = vsel %vm2540, %v1749, %v2796
        %v3053 = vsel %vm2541, %v1751, %v2797
        %v3054 = vsel %vm2542, %v1942, %v2798
        %v3055 = vsel %vm2543, %v1944, %v2799
        %v3056 = vsel %vm2544, %v2135, %v2800
        %v3057 = vsel %vm2545, %v2137, %v2801
        %v3058 = vsel %vm2546, %v2328, %v2802
        %v3059 = vsel %vm2547, %v2330, %v2803
        %v3060 = vsel %vm2548, %v1753, %v2804
        %v3061 = vsel %vm2549, %v1755, %v2805
        %v3062 = vsel %vm2550, %v1946, %v2806
        %v3063 = vsel %vm2551, %v1948, %v2807
        %v3064 = vsel %vm2552, %v2139, %v2808
        %v3065 = vsel %vm2553, %v2141, %v2809
        %v3066 = vsel %vm2554, %v2332, %v2810
        %v3067 = vsel %vm2555, %v2334, %v2811
        %v3068 = vsel %vm2556, %v1759, %v2812
        %v3069 = vsel %vm2557, %v1761, %v2813
        %v3070 = vsel %vm2558, %v1952, %v2814
        %v3071 = vsel %vm2559, %v1954, %v2815
        %v3072 = vsel %vm2560, %v2145, %v2816
        %v3073 = vsel %vm2561, %v2147, %v2817
        %v3074 = vsel %vm2562, %v2338, %v2818
        %v3075 = vsel %vm2563, %v2340, %v2819
        %v3076 = vsel %vm2564, %v1763, %v2820
        %v3077 = vsel %vm2565, %v1765, %v2821
        %v3078 = vsel %vm2566, %v1956, %v2822
        %v3079 = vsel %vm2567, %v1958, %v2823
        %v3080 = vsel %vm2568, %v2149, %v2824
        %v3081 = vsel %vm2569, %v2151, %v2825
        %v3082 = vsel %vm2570, %v2342, %v2826
        %v3083 = vsel %vm2571, %v2344, %v2827
        %v3084 = vsel %vm2572, %v1769, %v2828
        %v3085 = vsel %vm2573, %v1771, %v2829
        %v3086 = vsel %vm2574, %v1962, %v2830
        %v3087 = vsel %vm2575, %v1964, %v2831
        %v3088 = vsel %vm2576, %v2155, %v2832
        %v3089 = vsel %vm2577, %v2157, %v2833
        %v3090 = vsel %vm2578, %v2348, %v2834
        %v3091 = vsel %vm2579, %v2350, %v2835
        %v3092 = vsel %vm2580, %v1773, %v2836
        %v3093 = vsel %vm2581, %v1775, %v2837
        %v3094 = vsel %vm2582, %v1966, %v2838
        %v3095 = vsel %vm2583, %v1968, %v2839
        %v3096 = vsel %vm2584, %v2159, %v2840
        %v3097 = vsel %vm2585, %v2161, %v2841
        %v3098 = vsel %vm2586, %v2352, %v2842
        %v3099 = vsel %vm2587, %v2354, %v2843
        %v3100 = vsel %vm2588, %v1779, %v2844
        %v3101 = vsel %vm2589, %v1781, %v2845
        %v3102 = vsel %vm2590, %v1972, %v2846
        %v3103 = vsel %vm2591, %v1974, %v2847
        %v3104 = vsel %vm2592, %v2165, %v2848
        %v3105 = vsel %vm2593, %v2167, %v2849
        %v3106 = vsel %vm2594, %v2358, %v2850
        %v3107 = vsel %vm2595, %v2360, %v2851
        %v3108 = vsel %vm2596, %v1783, %v2852
        %v3109 = vsel %vm2597, %v1785, %v2853
        %v3110 = vsel %vm2598, %v1976, %v2854
        %v3111 = vsel %vm2599, %v1978, %v2855
        %v3112 = vsel %vm2600, %v2169, %v2856
        %v3113 = vsel %vm2601, %v2171, %v2857
        %v3114 = vsel %vm2602, %v2362, %v2858
        %v3115 = vsel %vm2603, %v2364, %v2859
        %v3116 = vsel %vm2604, %v1789, %v2860
        %v3117 = vsel %vm2605, %v1791, %v2861
        %v3118 = vsel %vm2606, %v1982, %v2862
        %v3119 = vsel %vm2607, %v1984, %v2863
        %v3120 = vsel %vm2608, %v2175, %v2864
        %v3121 = vsel %vm2609, %v2177, %v2865
        %v3122 = vsel %vm2610, %v2368, %v2866
        %v3123 = vsel %vm2611, %v2370, %v2867
        %v3124 = vsel %vm2612, %v1793, %v2868
        %v3125 = vsel %vm2613, %v1795, %v2869
        %v3126 = vsel %vm2614, %v1986, %v2870
        %v3127 = vsel %vm2615, %v1988, %v2871
        %v3128 = vsel %vm2616, %v2179, %v2872
        %v3129 = vsel %vm2617, %v2181, %v2873
        %v3130 = vsel %vm2618, %v2372, %v2874
        %v3131 = vsel %vm2619, %v2374, %v2875
        %v3132 = vsel %vm2620, %v1799, %v2876
        %v3133 = vsel %vm2621, %v1801, %v2877
        %v3134 = vsel %vm2622, %v1992, %v2878
        %v3135 = vsel %vm2623, %v1994, %v2879
        %v3136 = vsel %vm2624, %v2185, %v2880
        %v3137 = vsel %vm2625, %v2187, %v2881
        %v3138 = vsel %vm2626, %v2378, %v2882
        %v3139 = vsel %vm2627, %v2380, %v2883
        %v3140 = vsel %vm2628, %v1803, %v2884
        %v3141 = vsel %vm2629, %v1805, %v2885
        %v3142 = vsel %vm2630, %v1996, %v2886
        %v3143 = vsel %vm2631, %v1998, %v2887
        %v3144 = vsel %vm2632, %v2189, %v2888
        %v3145 = vsel %vm2633, %v2191, %v2889
        %v3146 = vsel %vm2634, %v2382, %v2890
        %v3147 = vsel %vm2635, %v2384, %v2891
        %v3148 = vsel %vm2636, %v1809, %v2892
        %v3149 = vsel %vm2637, %v1811, %v2893
        %v3150 = vsel %vm2638, %v2002, %v2894
        %v3151 = vsel %vm2639, %v2004, %v2895
        %v3152 = vsel %vm2640, %v2195, %v2896
        %v3153 = vsel %vm2641, %v2197, %v2897
        %v3154 = vsel %vm2642, %v2388, %v2898
        %v3155 = vsel %vm2643, %v2390, %v2899
        %v3156 = vsel %vm2644, %v1813, %v2900
        %v3157 = vsel %vm2645, %v1815, %v2901
        %v3158 = vsel %vm2646, %v2006, %v2902
        %v3159 = vsel %vm2647, %v2008, %v2903
        %v3160 = vsel %vm2648, %v2199, %v2904
        %v3161 = vsel %vm2649, %v2201, %v2905
        %v3162 = vsel %vm2650, %v2392, %v2906
        %v3163 = vsel %vm2651, %v2394, %v2907
        %v3164 = vmax.f32 %v2908, %v2916
        %v3165 = vmax.f32 %v3164, %v2924
        %v3166 = vmax.f32 %v3165, %v2932
        %v3167 = vmax.f32 %v3166, %v2940
        %v3168 = vmax.f32 %v3167, %v2948
        %v3169 = vmax.f32 %v3168, %v2956
        %v3170 = vmax.f32 %v3169, %v2964
        %v3171 = vrot.slane %v3170, 4
        %v3172 = vmax.f32 %v3170, %v3171
        %v3173 = vrot.slane %v3172, 2
        %v3174 = vmax.f32 %v3172, %v3173
        %v3175 = vrot.slane %v3174, 1
        %v3176 = vmax.f32 %v3174, %v3175
        %v3177 = vmax.f32 %v2909, %v2917
        %v3178 = vmax.f32 %v3177, %v2925
        %v3179 = vmax.f32 %v3178, %v2933
        %v3180 = vmax.f32 %v3179, %v2941
        %v3181 = vmax.f32 %v3180, %v2949
        %v3182 = vmax.f32 %v3181, %v2957
        %v3183 = vmax.f32 %v3182, %v2965
        %v3184 = vrot.slane %v3183, 4
        %v3185 = vmax.f32 %v3183, %v3184
        %v3186 = vrot.slane %v3185, 2
        %v3187 = vmax.f32 %v3185, %v3186
        %v3188 = vrot.slane %v3187, 1
        %v3189 = vmax.f32 %v3187, %v3188
        %v3190 = vmax.f32 %v2910, %v2918
        %v3191 = vmax.f32 %v3190, %v2926
        %v3192 = vmax.f32 %v3191, %v2934
        %v3193 = vmax.f32 %v3192, %v2942
        %v3194 = vmax.f32 %v3193, %v2950
        %v3195 = vmax.f32 %v3194, %v2958
        %v3196 = vmax.f32 %v3195, %v2966
        %v3197 = vrot.slane %v3196, 4
        %v3198 = vmax.f32 %v3196, %v3197
        %v3199 = vrot.slane %v3198, 2
        %v3200 = vmax.f32 %v3198, %v3199
        %v3201 = vrot.slane %v3200, 1
        %v3202 = vmax.f32 %v3200, %v3201
        %v3203 = vmax.f32 %v2911, %v2919
        %v3204 = vmax.f32 %v3203, %v2927
        %v3205 = vmax.f32 %v3204, %v2935
        %v3206 = vmax.f32 %v3205, %v2943
        %v3207 = vmax.f32 %v3206, %v2951
        %v3208 = vmax.f32 %v3207, %v2959
        %v3209 = vmax.f32 %v3208, %v2967
        %v3210 = vrot.slane %v3209, 4
        %v3211 = vmax.f32 %v3209, %v3210
        %v3212 = vrot.slane %v3211, 2
        %v3213 = vmax.f32 %v3211, %v3212
        %v3214 = vrot.slane %v3213, 1
        %v3215 = vmax.f32 %v3213, %v3214
        %v3216 = vmax.f32 %v2912, %v2920
        %v3217 = vmax.f32 %v3216, %v2928
        %v3218 = vmax.f32 %v3217, %v2936
        %v3219 = vmax.f32 %v3218, %v2944
        %v3220 = vmax.f32 %v3219, %v2952
        %v3221 = vmax.f32 %v3220, %v2960
        %v3222 = vmax.f32 %v3221, %v2968
        %v3223 = vrot.slane %v3222, 4
        %v3224 = vmax.f32 %v3222, %v3223
        %v3225 = vrot.slane %v3224, 2
        %v3226 = vmax.f32 %v3224, %v3225
        %v3227 = vrot.slane %v3226, 1
        %v3228 = vmax.f32 %v3226, %v3227
        %v3229 = vmax.f32 %v2913, %v2921
        %v3230 = vmax.f32 %v3229, %v2929
        %v3231 = vmax.f32 %v3230, %v2937
        %v3232 = vmax.f32 %v3231, %v2945
        %v3233 = vmax.f32 %v3232, %v2953
        %v3234 = vmax.f32 %v3233, %v2961
        %v3235 = vmax.f32 %v3234, %v2969
        %v3236 = vrot.slane %v3235, 4
        %v3237 = vmax.f32 %v3235, %v3236
        %v3238 = vrot.slane %v3237, 2
        %v3239 = vmax.f32 %v3237, %v3238
        %v3240 = vrot.slane %v3239, 1
        %v3241 = vmax.f32 %v3239, %v3240
        %v3242 = vmax.f32 %v2914, %v2922
        %v3243 = vmax.f32 %v3242, %v2930
        %v3244 = vmax.f32 %v3243, %v2938
        %v3245 = vmax.f32 %v3244, %v2946
        %v3246 = vmax.f32 %v3245, %v2954
        %v3247 = vmax.f32 %v3246, %v2962
        %v3248 = vmax.f32 %v3247, %v2970
        %v3249 = vrot.slane %v3248, 4
        %v3250 = vmax.f32 %v3248, %v3249
        %v3251 = vrot.slane %v3250, 2
        %v3252 = vmax.f32 %v3250, %v3251
        %v3253 = vrot.slane %v3252, 1
        %v3254 = vmax.f32 %v3252, %v3253
        %v3255 = vmax.f32 %v2915, %v2923
        %v3256 = vmax.f32 %v3255, %v2931
        %v3257 = vmax.f32 %v3256, %v2939
        %v3258 = vmax.f32 %v3257, %v2947
        %v3259 = vmax.f32 %v3258, %v2955
        %v3260 = vmax.f32 %v3259, %v2963
        %v3261 = vmax.f32 %v3260, %v2971
        %v3262 = vrot.slane %v3261, 4
        %v3263 = vmax.f32 %v3261, %v3262
        %v3264 = vrot.slane %v3263, 2
        %v3265 = vmax.f32 %v3263, %v3264
        %v3266 = vrot.slane %v3265, 1
        %v3267 = vmax.f32 %v3265, %v3266
        %v3276 = vcombine.low %v3176, %v3189
        %v3277 = vcombine.low %v3202, %v3215
        %v3278 = vcombine.low %v3228, %v3241
        %v3279 = vcombine.low %v3254, %v3267
        %v3281 = vunpack.c.l.s4 1966171168
        %v3282 = vunpack.c.0.s8 %v3281
        %v3283 = vlaneseq
        %v3284 = vshrl.u32 %v3283, 7
        %v3285 = vsub.s32 %v3282, %v3284
        %v3286 = vrot.slane %v3276, %v3285
        %v3288 = vunpack.c.l.s4 1966171168
        %v3289 = vunpack.c.0.s8 %v3288
        %v3290 = vlaneseq
        %v3291 = vshrl.u32 %v3290, 7
        %v3292 = vsub.s32 %v3289, %v3291
        %v3293 = vrot.slane %v3277, %v3292
        %v3295 = vunpack.c.l.s4 1966171168
        %v3296 = vunpack.c.0.s8 %v3295
        %v3297 = vlaneseq
        %v3298 = vshrl.u32 %v3297, 7
        %v3299 = vsub.s32 %v3296, %v3298
        %v3300 = vrot.slane %v3278, %v3299
        %v3302 = vunpack.c.l.s4 1966171168
        %v3303 = vunpack.c.0.s8 %v3302
        %v3304 = vlaneseq
        %v3305 = vshrl.u32 %v3304, 7
        %v3306 = vsub.s32 %v3303, %v3305
        %v3307 = vrot.slane %v3279, %v3306
        %v3308 = vcombine.low %v3286, %v3293
        %v3309 = vcombine.low %v3300, %v3307
        %v3311 = vunpack.c.l.s4 1966171168
        %v3312 = vunpack.c.0.s8 %v3311
        %v3313 = vlaneseq
        %v3314 = vshrl.u32 %v3313, 7
        %v3315 = vsub.s32 %v3312, %v3314
        %v3316 = vrot.slane %v3308, %v3315
        %v3318 = vunpack.c.l.s4 1966171168
        %v3319 = vunpack.c.0.s8 %v3318
        %v3320 = vlaneseq
        %v3321 = vshrl.u32 %v3320, 7
        %v3322 = vsub.s32 %v3319, %v3321
        %v3323 = vrot.slane %v3309, %v3322
        %v3324 = vcombine.low %v3316, %v3323
        %3326 = vst [vmem:[%s341] sm:$0xff] %v3324
        %v3327 = vmax.f32 %v2972, %v2980
        %v3328 = vmax.f32 %v3327, %v2988
        %v3329 = vmax.f32 %v3328, %v2996
        %v3330 = vmax.f32 %v3329, %v3004
        %v3331 = vmax.f32 %v3330, %v3012
        %v3332 = vmax.f32 %v3331, %v3020
        %v3333 = vmax.f32 %v3332, %v3028
        %v3334 = vrot.slane %v3333, 4
        %v3335 = vmax.f32 %v3333, %v3334
        %v3336 = vrot.slane %v3335, 2
        %v3337 = vmax.f32 %v3335, %v3336
        %v3338 = vrot.slane %v3337, 1
        %v3339 = vmax.f32 %v3337, %v3338
        %v3340 = vmax.f32 %v2973, %v2981
        %v3341 = vmax.f32 %v3340, %v2989
        %v3342 = vmax.f32 %v3341, %v2997
        %v3343 = vmax.f32 %v3342, %v3005
        %v3344 = vmax.f32 %v3343, %v3013
        %v3345 = vmax.f32 %v3344, %v3021
        %v3346 = vmax.f32 %v3345, %v3029
        %v3347 = vrot.slane %v3346, 4
        %v3348 = vmax.f32 %v3346, %v3347
        %v3349 = vrot.slane %v3348, 2
        %v3350 = vmax.f32 %v3348, %v3349
        %v3351 = vrot.slane %v3350, 1
        %v3352 = vmax.f32 %v3350, %v3351
        %v3353 = vmax.f32 %v2974, %v2982
        %v3354 = vmax.f32 %v3353, %v2990
        %v3355 = vmax.f32 %v3354, %v2998
        %v3356 = vmax.f32 %v3355, %v3006
        %v3357 = vmax.f32 %v3356, %v3014
        %v3358 = vmax.f32 %v3357, %v3022
        %v3359 = vmax.f32 %v3358, %v3030
        %v3360 = vrot.slane %v3359, 4
        %v3361 = vmax.f32 %v3359, %v3360
        %v3362 = vrot.slane %v3361, 2
        %v3363 = vmax.f32 %v3361, %v3362
        %v3364 = vrot.slane %v3363, 1
        %v3365 = vmax.f32 %v3363, %v3364
        %v3366 = vmax.f32 %v2975, %v2983
        %v3367 = vmax.f32 %v3366, %v2991
        %v3368 = vmax.f32 %v3367, %v2999
        %v3369 = vmax.f32 %v3368, %v3007
        %v3370 = vmax.f32 %v3369, %v3015
        %v3371 = vmax.f32 %v3370, %v3023
        %v3372 = vmax.f32 %v3371, %v3031
        %v3373 = vrot.slane %v3372, 4
        %v3374 = vmax.f32 %v3372, %v3373
        %v3375 = vrot.slane %v3374, 2
        %v3376 = vmax.f32 %v3374, %v3375
        %v3377 = vrot.slane %v3376, 1
        %v3378 = vmax.f32 %v3376, %v3377
        %v3379 = vmax.f32 %v2976, %v2984
        %v3380 = vmax.f32 %v3379, %v2992
        %v3381 = vmax.f32 %v3380, %v3000
        %v3382 = vmax.f32 %v3381, %v3008
        %v3383 = vmax.f32 %v3382, %v3016
        %v3384 = vmax.f32 %v3383, %v3024
        %v3385 = vmax.f32 %v3384, %v3032
        %v3386 = vrot.slane %v3385, 4
        %v3387 = vmax.f32 %v3385, %v3386
        %v3388 = vrot.slane %v3387, 2
        %v3389 = vmax.f32 %v3387, %v3388
        %v3390 = vrot.slane %v3389, 1
        %v3391 = vmax.f32 %v3389, %v3390
        %v3392 = vmax.f32 %v2977, %v2985
        %v3393 = vmax.f32 %v3392, %v2993
        %v3394 = vmax.f32 %v3393, %v3001
        %v3395 = vmax.f32 %v3394, %v3009
        %v3396 = vmax.f32 %v3395, %v3017
        %v3397 = vmax.f32 %v3396, %v3025
        %v3398 = vmax.f32 %v3397, %v3033
        %v3399 = vrot.slane %v3398, 4
        %v3400 = vmax.f32 %v3398, %v3399
        %v3401 = vrot.slane %v3400, 2
        %v3402 = vmax.f32 %v3400, %v3401
        %v3403 = vrot.slane %v3402, 1
        %v3404 = vmax.f32 %v3402, %v3403
        %v3405 = vmax.f32 %v2978, %v2986
        %v3406 = vmax.f32 %v3405, %v2994
        %v3407 = vmax.f32 %v3406, %v3002
        %v3408 = vmax.f32 %v3407, %v3010
        %v3409 = vmax.f32 %v3408, %v3018
        %v3410 = vmax.f32 %v3409, %v3026
        %v3411 = vmax.f32 %v3410, %v3034
        %v3412 = vrot.slane %v3411, 4
        %v3413 = vmax.f32 %v3411, %v3412
        %v3414 = vrot.slane %v3413, 2
        %v3415 = vmax.f32 %v3413, %v3414
        %v3416 = vrot.slane %v3415, 1
        %v3417 = vmax.f32 %v3415, %v3416
        %v3418 = vmax.f32 %v2979, %v2987
        %v3419 = vmax.f32 %v3418, %v2995
        %v3420 = vmax.f32 %v3419, %v3003
        %v3421 = vmax.f32 %v3420, %v3011
        %v3422 = vmax.f32 %v3421, %v3019
        %v3423 = vmax.f32 %v3422, %v3027
        %v3424 = vmax.f32 %v3423, %v3035
        %v3425 = vrot.slane %v3424, 4
        %v3426 = vmax.f32 %v3424, %v3425
        %v3427 = vrot.slane %v3426, 2
        %v3428 = vmax.f32 %v3426, %v3427
        %v3429 = vrot.slane %v3428, 1
        %v3430 = vmax.f32 %v3428, %v3429
        %v3439 = vcombine.low %v3339, %v3352
        %v3440 = vcombine.low %v3365, %v3378
        %v3441 = vcombine.low %v3391, %v3404
        %v3442 = vcombine.low %v3417, %v3430
        %v3444 = vunpack.c.l.s4 1966171168
        %v3445 = vunpack.c.0.s8 %v3444
        %v3446 = vlaneseq
        %v3447 = vshrl.u32 %v3446, 7
        %v3448 = vsub.s32 %v3445, %v3447
        %v3449 = vrot.slane %v3439, %v3448
        %v3451 = vunpack.c.l.s4 1966171168
        %v3452 = vunpack.c.0.s8 %v3451
        %v3453 = vlaneseq
        %v3454 = vshrl.u32 %v3453, 7
        %v3455 = vsub.s32 %v3452, %v3454
        %v3456 = vrot.slane %v3440, %v3455
        %v3458 = vunpack.c.l.s4 1966171168
        %v3459 = vunpack.c.0.s8 %v3458
        %v3460 = vlaneseq
        %v3461 = vshrl.u32 %v3460, 7
        %v3462 = vsub.s32 %v3459, %v3461
        %v3463 = vrot.slane %v3441, %v3462
        %v3465 = vunpack.c.l.s4 1966171168
        %v3466 = vunpack.c.0.s8 %v3465
        %v3467 = vlaneseq
        %v3468 = vshrl.u32 %v3467, 7
        %v3469 = vsub.s32 %v3466, %v3468
        %v3470 = vrot.slane %v3442, %v3469
        %v3471 = vcombine.low %v3449, %v3456
        %v3472 = vcombine.low %v3463, %v3470
        %v3474 = vunpack.c.l.s4 1966171168
        %v3475 = vunpack.c.0.s8 %v3474
        %v3476 = vlaneseq
        %v3477 = vshrl.u32 %v3476, 7
        %v3478 = vsub.s32 %v3475, %v3477
        %v3479 = vrot.slane %v3471, %v3478
        %v3481 = vunpack.c.l.s4 1966171168
        %v3482 = vunpack.c.0.s8 %v3481
        %v3483 = vlaneseq
        %v3484 = vshrl.u32 %v3483, 7
        %v3485 = vsub.s32 %v3482, %v3484
        %v3486 = vrot.slane %v3472, %v3485
        %v3487 = vcombine.low %v3479, %v3486
        %s3489 = scalar_lea.vmem %s341, 8 [#allocation10]
        %3490 = vst [vmem:[%s3489] sm:$0xff] %v3487
        %v3491 = vmax.f32 %v3036, %v3044
        %v3492 = vmax.f32 %v3491, %v3052
        %v3493 = vmax.f32 %v3492, %v3060
        %v3494 = vmax.f32 %v3493, %v3068
        %v3495 = vmax.f32 %v3494, %v3076
        %v3496 = vmax.f32 %v3495, %v3084
        %v3497 = vmax.f32 %v3496, %v3092
        %v3498 = vrot.slane %v3497, 4
        %v3499 = vmax.f32 %v3497, %v3498
        %v3500 = vrot.slane %v3499, 2
        %v3501 = vmax.f32 %v3499, %v3500
        %v3502 = vrot.slane %v3501, 1
        %v3503 = vmax.f32 %v3501, %v3502
        %v3504 = vmax.f32 %v3037, %v3045
        %v3505 = vmax.f32 %v3504, %v3053
        %v3506 = vmax.f32 %v3505, %v3061
        %v3507 = vmax.f32 %v3506, %v3069
        %v3508 = vmax.f32 %v3507, %v3077
        %v3509 = vmax.f32 %v3508, %v3085
        %v3510 = vmax.f32 %v3509, %v3093
        %v3511 = vrot.slane %v3510, 4
        %v3512 = vmax.f32 %v3510, %v3511
        %v3513 = vrot.slane %v3512, 2
        %v3514 = vmax.f32 %v3512, %v3513
        %v3515 = vrot.slane %v3514, 1
        %v3516 = vmax.f32 %v3514, %v3515
        %v3517 = vmax.f32 %v3038, %v3046
        %v3518 = vmax.f32 %v3517, %v3054
        %v3519 = vmax.f32 %v3518, %v3062
        %v3520 = vmax.f32 %v3519, %v3070
        %v3521 = vmax.f32 %v3520, %v3078
        %v3522 = vmax.f32 %v3521, %v3086
        %v3523 = vmax.f32 %v3522, %v3094
        %v3524 = vrot.slane %v3523, 4
        %v3525 = vmax.f32 %v3523, %v3524
        %v3526 = vrot.slane %v3525, 2
        %v3527 = vmax.f32 %v3525, %v3526
        %v3528 = vrot.slane %v3527, 1
        %v3529 = vmax.f32 %v3527, %v3528
        %v3530 = vmax.f32 %v3039, %v3047
        %v3531 = vmax.f32 %v3530, %v3055
        %v3532 = vmax.f32 %v3531, %v3063
        %v3533 = vmax.f32 %v3532, %v3071
        %v3534 = vmax.f32 %v3533, %v3079
        %v3535 = vmax.f32 %v3534, %v3087
        %v3536 = vmax.f32 %v3535, %v3095
        %v3537 = vrot.slane %v3536, 4
        %v3538 = vmax.f32 %v3536, %v3537
        %v3539 = vrot.slane %v3538, 2
        %v3540 = vmax.f32 %v3538, %v3539
        %v3541 = vrot.slane %v3540, 1
        %v3542 = vmax.f32 %v3540, %v3541
        %v3543 = vmax.f32 %v3040, %v3048
        %v3544 = vmax.f32 %v3543, %v3056
        %v3545 = vmax.f32 %v3544, %v3064
        %v3546 = vmax.f32 %v3545, %v3072
        %v3547 = vmax.f32 %v3546, %v3080
        %v3548 = vmax.f32 %v3547, %v3088
        %v3549 = vmax.f32 %v3548, %v3096
        %v3550 = vrot.slane %v3549, 4
        %v3551 = vmax.f32 %v3549, %v3550
        %v3552 = vrot.slane %v3551, 2
        %v3553 = vmax.f32 %v3551, %v3552
        %v3554 = vrot.slane %v3553, 1
        %v3555 = vmax.f32 %v3553, %v3554
        %v3556 = vmax.f32 %v3041, %v3049
        %v3557 = vmax.f32 %v3556, %v3057
        %v3558 = vmax.f32 %v3557, %v3065
        %v3559 = vmax.f32 %v3558, %v3073
        %v3560 = vmax.f32 %v3559, %v3081
        %v3561 = vmax.f32 %v3560, %v3089
        %v3562 = vmax.f32 %v3561, %v3097
        %v3563 = vrot.slane %v3562, 4
        %v3564 = vmax.f32 %v3562, %v3563
        %v3565 = vrot.slane %v3564, 2
        %v3566 = vmax.f32 %v3564, %v3565
        %v3567 = vrot.slane %v3566, 1
        %v3568 = vmax.f32 %v3566, %v3567
        %v3569 = vmax.f32 %v3042, %v3050
        %v3570 = vmax.f32 %v3569, %v3058
        %v3571 = vmax.f32 %v3570, %v3066
        %v3572 = vmax.f32 %v3571, %v3074
        %v3573 = vmax.f32 %v3572, %v3082
        %v3574 = vmax.f32 %v3573, %v3090
        %v3575 = vmax.f32 %v3574, %v3098
        %v3576 = vrot.slane %v3575, 4
        %v3577 = vmax.f32 %v3575, %v3576
        %v3578 = vrot.slane %v3577, 2
        %v3579 = vmax.f32 %v3577, %v3578
        %v3580 = vrot.slane %v3579, 1
        %v3581 = vmax.f32 %v3579, %v3580
        %v3582 = vmax.f32 %v3043, %v3051
        %v3583 = vmax.f32 %v3582, %v3059
        %v3584 = vmax.f32 %v3583, %v3067
        %v3585 = vmax.f32 %v3584, %v3075
        %v3586 = vmax.f32 %v3585, %v3083
        %v3587 = vmax.f32 %v3586, %v3091
        %v3588 = vmax.f32 %v3587, %v3099
        %v3589 = vrot.slane %v3588, 4
        %v3590 = vmax.f32 %v3588, %v3589
        %v3591 = vrot.slane %v3590, 2
        %v3592 = vmax.f32 %v3590, %v3591
        %v3593 = vrot.slane %v3592, 1
        %v3594 = vmax.f32 %v3592, %v3593
        %v3603 = vcombine.low %v3503, %v3516
        %v3604 = vcombine.low %v3529, %v3542
        %v3605 = vcombine.low %v3555, %v3568
        %v3606 = vcombine.low %v3581, %v3594
        %v3608 = vunpack.c.l.s4 1966171168
        %v3609 = vunpack.c.0.s8 %v3608
        %v3610 = vlaneseq
        %v3611 = vshrl.u32 %v3610, 7
        %v3612 = vsub.s32 %v3609, %v3611
        %v3613 = vrot.slane %v3603, %v3612
        %v3615 = vunpack.c.l.s4 1966171168
        %v3616 = vunpack.c.0.s8 %v3615
        %v3617 = vlaneseq
        %v3618 = vshrl.u32 %v3617, 7
        %v3619 = vsub.s32 %v3616, %v3618
        %v3620 = vrot.slane %v3604, %v3619
        %v3622 = vunpack.c.l.s4 1966171168
        %v3623 = vunpack.c.0.s8 %v3622
        %v3624 = vlaneseq
        %v3625 = vshrl.u32 %v3624, 7
        %v3626 = vsub.s32 %v3623, %v3625
        %v3627 = vrot.slane %v3605, %v3626
        %v3629 = vunpack.c.l.s4 1966171168
        %v3630 = vunpack.c.0.s8 %v3629
        %v3631 = vlaneseq
        %v3632 = vshrl.u32 %v3631, 7
        %v3633 = vsub.s32 %v3630, %v3632
        %v3634 = vrot.slane %v3606, %v3633
        %v3635 = vcombine.low %v3613, %v3620
        %v3636 = vcombine.low %v3627, %v3634
        %v3638 = vunpack.c.l.s4 1966171168
        %v3639 = vunpack.c.0.s8 %v3638
        %v3640 = vlaneseq
        %v3641 = vshrl.u32 %v3640, 7
        %v3642 = vsub.s32 %v3639, %v3641
        %v3643 = vrot.slane %v3635, %v3642
        %v3645 = vunpack.c.l.s4 1966171168
        %v3646 = vunpack.c.0.s8 %v3645
        %v3647 = vlaneseq
        %v3648 = vshrl.u32 %v3647, 7
        %v3649 = vsub.s32 %v3646, %v3648
        %v3650 = vrot.slane %v3636, %v3649
        %v3651 = vcombine.low %v3643, %v3650
        %s3653 = scalar_lea.vmem %s341, 16 [#allocation10]
        %3654 = vst [vmem:[%s3653] sm:$0xff] %v3651
        %v3655 = vmax.f32 %v3100, %v3108
        %v3656 = vmax.f32 %v3655, %v3116
        %v3657 = vmax.f32 %v3656, %v3124
        %v3658 = vmax.f32 %v3657, %v3132
        %v3659 = vmax.f32 %v3658, %v3140
        %v3660 = vmax.f32 %v3659, %v3148
        %v3661 = vmax.f32 %v3660, %v3156
        %v3662 = vrot.slane %v3661, 4
        %v3663 = vmax.f32 %v3661, %v3662
        %v3664 = vrot.slane %v3663, 2
        %v3665 = vmax.f32 %v3663, %v3664
        %v3666 = vrot.slane %v3665, 1
        %v3667 = vmax.f32 %v3665, %v3666
        %v3668 = vmax.f32 %v3101, %v3109
        %v3669 = vmax.f32 %v3668, %v3117
        %v3670 = vmax.f32 %v3669, %v3125
        %v3671 = vmax.f32 %v3670, %v3133
        %v3672 = vmax.f32 %v3671, %v3141
        %v3673 = vmax.f32 %v3672, %v3149
        %v3674 = vmax.f32 %v3673, %v3157
        %v3675 = vrot.slane %v3674, 4
        %v3676 = vmax.f32 %v3674, %v3675
        %v3677 = vrot.slane %v3676, 2
        %v3678 = vmax.f32 %v3676, %v3677
        %v3679 = vrot.slane %v3678, 1
        %v3680 = vmax.f32 %v3678, %v3679
        %v3681 = vmax.f32 %v3102, %v3110
        %v3682 = vmax.f32 %v3681, %v3118
        %v3683 = vmax.f32 %v3682, %v3126
        %v3684 = vmax.f32 %v3683, %v3134
        %v3685 = vmax.f32 %v3684, %v3142
        %v3686 = vmax.f32 %v3685, %v3150
        %v3687 = vmax.f32 %v3686, %v3158
        %v3688 = vrot.slane %v3687, 4
        %v3689 = vmax.f32 %v3687, %v3688
        %v3690 = vrot.slane %v3689, 2
        %v3691 = vmax.f32 %v3689, %v3690
        %v3692 = vrot.slane %v3691, 1
        %v3693 = vmax.f32 %v3691, %v3692
        %v3694 = vmax.f32 %v3103, %v3111
        %v3695 = vmax.f32 %v3694, %v3119
        %v3696 = vmax.f32 %v3695, %v3127
        %v3697 = vmax.f32 %v3696, %v3135
        %v3698 = vmax.f32 %v3697, %v3143
        %v3699 = vmax.f32 %v3698, %v3151
        %v3700 = vmax.f32 %v3699, %v3159
        %v3701 = vrot.slane %v3700, 4
        %v3702 = vmax.f32 %v3700, %v3701
        %v3703 = vrot.slane %v3702, 2
        %v3704 = vmax.f32 %v3702, %v3703
        %v3705 = vrot.slane %v3704, 1
        %v3706 = vmax.f32 %v3704, %v3705
        %v3707 = vmax.f32 %v3104, %v3112
        %v3708 = vmax.f32 %v3707, %v3120
        %v3709 = vmax.f32 %v3708, %v3128
        %v3710 = vmax.f32 %v3709, %v3136
        %v3711 = vmax.f32 %v3710, %v3144
        %v3712 = vmax.f32 %v3711, %v3152
        %v3713 = vmax.f32 %v3712, %v3160
        %v3714 = vrot.slane %v3713, 4
        %v3715 = vmax.f32 %v3713, %v3714
        %v3716 = vrot.slane %v3715, 2
        %v3717 = vmax.f32 %v3715, %v3716
        %v3718 = vrot.slane %v3717, 1
        %v3719 = vmax.f32 %v3717, %v3718
        %v3720 = vmax.f32 %v3105, %v3113
        %v3721 = vmax.f32 %v3720, %v3121
        %v3722 = vmax.f32 %v3721, %v3129
        %v3723 = vmax.f32 %v3722, %v3137
        %v3724 = vmax.f32 %v3723, %v3145
        %v3725 = vmax.f32 %v3724, %v3153
        %v3726 = vmax.f32 %v3725, %v3161
        %v3727 = vrot.slane %v3726, 4
        %v3728 = vmax.f32 %v3726, %v3727
        %v3729 = vrot.slane %v3728, 2
        %v3730 = vmax.f32 %v3728, %v3729
        %v3731 = vrot.slane %v3730, 1
        %v3732 = vmax.f32 %v3730, %v3731
        %v3733 = vmax.f32 %v3106, %v3114
        %v3734 = vmax.f32 %v3733, %v3122
        %v3735 = vmax.f32 %v3734, %v3130
        %v3736 = vmax.f32 %v3735, %v3138
        %v3737 = vmax.f32 %v3736, %v3146
        %v3738 = vmax.f32 %v3737, %v3154
        %v3739 = vmax.f32 %v3738, %v3162
        %v3740 = vrot.slane %v3739, 4
        %v3741 = vmax.f32 %v3739, %v3740
        %v3742 = vrot.slane %v3741, 2
        %v3743 = vmax.f32 %v3741, %v3742
        %v3744 = vrot.slane %v3743, 1
        %v3745 = vmax.f32 %v3743, %v3744
        %v3746 = vmax.f32 %v3107, %v3115
        %v3747 = vmax.f32 %v3746, %v3123
        %v3748 = vmax.f32 %v3747, %v3131
        %v3749 = vmax.f32 %v3748, %v3139
        %v3750 = vmax.f32 %v3749, %v3147
        %v3751 = vmax.f32 %v3750, %v3155
        %v3752 = vmax.f32 %v3751, %v3163
        %v3753 = vrot.slane %v3752, 4
        %v3754 = vmax.f32 %v3752, %v3753
        %v3755 = vrot.slane %v3754, 2
        %v3756 = vmax.f32 %v3754, %v3755
        %v3757 = vrot.slane %v3756, 1
        %v3758 = vmax.f32 %v3756, %v3757
        %v3767 = vcombine.low %v3667, %v3680
        %v3768 = vcombine.low %v3693, %v3706
        %v3769 = vcombine.low %v3719, %v3732
        %v3770 = vcombine.low %v3745, %v3758
        %v3772 = vunpack.c.l.s4 1966171168
        %v3773 = vunpack.c.0.s8 %v3772
        %v3774 = vlaneseq
        %v3775 = vshrl.u32 %v3774, 7
        %v3776 = vsub.s32 %v3773, %v3775
        %v3777 = vrot.slane %v3767, %v3776
        %v3779 = vunpack.c.l.s4 1966171168
        %v3780 = vunpack.c.0.s8 %v3779
        %v3781 = vlaneseq
        %v3782 = vshrl.u32 %v3781, 7
        %v3783 = vsub.s32 %v3780, %v3782
        %v3784 = vrot.slane %v3768, %v3783
        %v3786 = vunpack.c.l.s4 1966171168
        %v3787 = vunpack.c.0.s8 %v3786
        %v3788 = vlaneseq
        %v3789 = vshrl.u32 %v3788, 7
        %v3790 = vsub.s32 %v3787, %v3789
        %v3791 = vrot.slane %v3769, %v3790
        %v3793 = vunpack.c.l.s4 1966171168
        %v3794 = vunpack.c.0.s8 %v3793
        %v3795 = vlaneseq
        %v3796 = vshrl.u32 %v3795, 7
        %v3797 = vsub.s32 %v3794, %v3796
        %v3798 = vrot.slane %v3770, %v3797
        %v3799 = vcombine.low %v3777, %v3784
        %v3800 = vcombine.low %v3791, %v3798
        %v3802 = vunpack.c.l.s4 1966171168
        %v3803 = vunpack.c.0.s8 %v3802
        %v3804 = vlaneseq
        %v3805 = vshrl.u32 %v3804, 7
        %v3806 = vsub.s32 %v3803, %v3805
        %v3807 = vrot.slane %v3799, %v3806
        %v3809 = vunpack.c.l.s4 1966171168
        %v3810 = vunpack.c.0.s8 %v3809
        %v3811 = vlaneseq
        %v3812 = vshrl.u32 %v3811, 7
        %v3813 = vsub.s32 %v3810, %v3812
        %v3814 = vrot.slane %v3800, %v3813
        %v3815 = vcombine.low %v3807, %v3814
        %s3817 = scalar_lea.vmem %s341, 24 [#allocation10]
        %3818 = vst [vmem:[%s3817] sm:$0xff] %v3815
        %s3819 = sand.u32 %s186, 1
        %s3820 = scalar_lea.sflag [#allocation4], %s3819
        %s3821 = sand.u32 %s186, 1
        %s3822 = smul.addr %s3821, 32
        %s3823 = scalar_lea.vmem [#allocation10], %s3822
        // Predicated region
        $region65: #{tpu_custom_call.1} parent=47 // pred_check
          %p3824 = pneg %p196
        $region66: #{tpu_custom_call.1} parent=47 // pred_check_branch
          %3826 = sbr.rel (%p3824) target = $region68
        $region67: #{tpu_custom_call.1} parent=47 // pred_region
          %s3827 = smul.u32 4, %s26
          %s3829 = ssub.s32 512, 512
          %3830 = vsyncadd %s3820, %s3829
          %s3831 = smul.addr %s3827, 8
          %s3832 = smul.addr %s3831, 16
          %s3833 = scalar_lea.hbm %s7, %s3832
          %s3834 = sshll.u32 %s3823, 4
          %s3835 = int_to_ptr.vmem [resolvable:$true] %s3834
          %3840 = dma.vmem_to_hbm [thread:$0]  %s3835, 512, %s3833, %s3820, 128, 128, 8
        $region68: #{tpu_custom_call.1} parent=47 // pred_fallthru
          _
      $region48: #{tpu_custom_call.1} parent=5 // pred_fallthru
        _
      %p3841 = scmp.le.s32.totalorder 2, %s21
      // Predicated region
      $region69: #{tpu_custom_call.1} parent=5 // pred_check
        %p3842 = pneg %p3841
      $region70: #{tpu_custom_call.1} parent=5 // pred_check_branch
        %3844 = sbr.rel (%p3842) target = $region72
      $region71: #{tpu_custom_call.1} parent=5 // pred_region
        %s3845 = ssub.s32 %s21, 2
        // Predicated region
        $region73: #{tpu_custom_call.1} parent=71 // pred_check
          %p3846 = pneg %p202
        $region74: #{tpu_custom_call.1} parent=71 // pred_check_branch
          %3848 = sbr.rel (%p3846) target = $region76
        $region75: #{tpu_custom_call.1} parent=71 // pred_region
          %s3849 = sand.u32 %s187, 1
          %s3850 = scalar_lea.sflag [#allocation4], %s3849
          %s3851 = sand.u32 %s187, 1
          %s3852 = smul.addr %s3851, 32
          %s3853 = scalar_lea.vmem [#allocation10], %s3852
          %3854 = dma.done %s3850, 512
        $region76: #{tpu_custom_call.1} parent=71 // pred_fallthru
          _
      $region72: #{tpu_custom_call.1} parent=5 // pred_fallthru
        _
    $region6: #{tpu_custom_call.1} parent=1 // loop_footer
      %s25 = sadd.s32 1, %s21
    $region7: #{tpu_custom_call.1} parent=1 // loop_footer_branch
      %20 = sbr.rel target = $region3
    $region8: #{tpu_custom_call.1} parent=1 // loop_exit
      _
    %3855 = vsyncpa [#allocation3], 1
    %s3856 = scalar_lea.sflag [#allocation3], 1
    %3857 = vsyncpa %s3856, 1
    %3858 = vsyncpa [#allocation6], 1
    %3859 = vsyncpa [#allocation9], 1
    %3860 = vsyncpa [#allocation4], 1
    %s3861 = scalar_lea.sflag [#allocation4], 1
    %3862 = vsyncpa %s3861, 1

</llo_original>
